<compile_context>
chip_gen: v7x
topology: tpu7x:2x2x1
jax: 0.10.0
libtpu: 0.0.40
codegen_flags: <defaults>
</compile_context>

<pallas_src>
import functools

import jax
import jax.numpy as jnp
from jax import lax
from jax.experimental import pallas as pl
from jax.experimental.pallas import tpu as pltpu

_EPS = 1e-8  # eps of F.cosine_similarity


# ---------------------------------------------------------------------------
# Shared compute: everything downstream of the token gather.
# ---------------------------------------------------------------------------
def _matching_head(q_vec, d_vec, a_idx, b_idx, w1a, w1b, b1, w2, b2,
                   out_ref, use_bf16):
    f32 = jnp.float32
    a_mask = (a_idx > 0).astype(f32)                          # (Bt, Q)
    b_mask = (b_idx > 0).astype(f32)                          # (Bt, D)
    inv_len_a = 1.0 / (jnp.sum(a_mask, axis=1, keepdims=True) + 1.0)
    inv_len_b = 1.0 / (jnp.sum(b_mask, axis=1, keepdims=True) + 1.0)
    a_mask_scaled = a_mask * inv_len_a                        # (Bt, Q)
    b_mask_scaled = b_mask * inv_len_b                        # (Bt, D)

    mm_dt = jnp.bfloat16 if use_bf16 else f32                 # MXU input dtype
    qm = q_vec.astype(mm_dt)
    dm = d_vec.astype(mm_dt)

    # cosine similarity: sim = <q,d> * rsqrt(max(|q|^2 |d|^2, eps^2))
    qd = jnp.einsum('bqh,bdh->bqd', qm, dm, preferred_element_type=f32)
    q_sq = jnp.sum(q_vec * q_vec, axis=2, keepdims=True)      # (Bt, Q, 1)
    d_sq = jnp.sum(d_vec * d_vec, axis=2)                     # (Bt, D)
    denom_sq = q_sq * d_sq[:, None, :]                        # (Bt, Q, D) VPU bcast
    sim = qd * lax.rsqrt(jnp.maximum(denom_sq, _EPS * _EPS))

    # per_query_token_based_doc_repr; 1/(len_b+1) folded into the b-mask.
    sim_scaled = (sim * b_mask_scaled[:, None, :]).astype(mm_dt)
    per_query = jnp.einsum('bqd,bdh->bqh', sim_scaled, dm,
                           preferred_element_type=f32)        # (Bt, Q, H)

    # Masked means over the query axis; 1/(len_a+1) folded into the a-mask.
    aw = a_mask_scaled[:, :, None]                            # (Bt, Q, 1)
    q_based_doc = jnp.sum(per_query * aw, axis=1)             # (Bt, H)
    q_avg = jnp.sum(q_vec * aw, axis=1)                       # (Bt, H)

    # to_logits: Linear(2H->H) + ReLU + Linear(H->C);
    # concat([q_avg, q_based_doc]) @ W1 == q_avg @ W1[:H] + q_based_doc @ W1[H:]
    hidden = (jnp.dot(q_avg, w1a, preferred_element_type=f32)
              + jnp.dot(q_based_doc, w1b, preferred_element_type=f32) + b1)
    hidden = jnp.maximum(hidden, 0.0)
    out_ref[...] = jnp.dot(hidden, w2, preferred_element_type=f32) + b2


# ---------------------------------------------------------------------------
# Path 1: dense one-hot MXU gather (features block streamed through VMEM).
# ---------------------------------------------------------------------------
def _ir_matching_dense_kernel(feat_ref, aidx_ref, bidx_ref,
                              w1a_ref, w1b_ref, b1_ref, w2_ref, b2_ref,
                              out_ref, *, use_bf16):
    f32 = jnp.float32
    feat = feat_ref[...]                                      # (Bt, S, H)
    a_idx = aidx_ref[...]                                     # (Bt, Q)
    b_idx = bidx_ref[...]                                     # (Bt, D)
    Bt, S, _ = feat.shape
    Q = a_idx.shape[1]
    D = b_idx.shape[1]

    # batched_index_select via one-hot matmul on the MXU (kept f32 so the
    # gathered rows are bit-exact).  Sequence axis on lanes.
    iota_qs = lax.broadcasted_iota(jnp.int32, (Bt, Q, S), 2)
    onehot_a = (iota_qs == a_idx[:, :, None]).astype(f32)     # (Bt, Q, S)
    iota_ds = lax.broadcasted_iota(jnp.int32, (Bt, D, S), 2)
    onehot_b = (iota_ds == b_idx[:, :, None]).astype(f32)     # (Bt, D, S)
    q_vec = jnp.einsum('bqs,bsh->bqh', onehot_a, feat, preferred_element_type=f32)
    d_vec = jnp.einsum('bds,bsh->bdh', onehot_b, feat, preferred_element_type=f32)

    _matching_head(q_vec, d_vec, a_idx, b_idx,
                   w1a_ref[...], w1b_ref[...], b1_ref[...], w2_ref[...],
                   b2_ref[...], out_ref, use_bf16)


# ---------------------------------------------------------------------------
# Path 2: HBM row gather (features never streamed; only Q+D rows per batch
# element are DMA'd using the scalar-prefetched index arrays).
# ---------------------------------------------------------------------------
def _ir_matching_gather_kernel(aidx_s, bidx_s,                # scalar prefetch (SMEM)
                               feat_hbm, aidx_ref, bidx_ref,
                               w1a_ref, w1b_ref, b1_ref, w2_ref, b2_ref,
                               out_ref, qbuf, dbuf, sem, *, use_bf16):
    Bt, Q, _ = qbuf.shape
    D = dbuf.shape[1]
    base = pl.program_id(0) * Bt

    # Issue one row-sized DMA per referenced token (Q+D rows per batch elem).
    # All copies share one byte-counting DMA semaphore and are identically
    # shaped (1, H).
    @pl.loop(0, Bt)
    def _(b):
        gb = base + b

        @pl.loop(0, Q)
        def _(r):
            pltpu.make_async_copy(
                feat_hbm.at[gb, pl.ds(aidx_s[gb, r], 1)],
                qbuf.at[b, pl.ds(r, 1)], sem).start()

        @pl.loop(0, D)
        def _(r):
            pltpu.make_async_copy(
                feat_hbm.at[gb, pl.ds(bidx_s[gb, r], 1)],
                dbuf.at[b, pl.ds(r, 1)], sem).start()

    # Drain the semaphore: one wait per issued copy (dummy src; the dst slice
    # only provides the per-copy size, all copies are the same shape).
    @pl.loop(0, Bt * (Q + D))
    def _(i):
        pltpu.make_async_copy(feat_hbm.at[0, pl.ds(0, 1)],
                              qbuf.at[0, pl.ds(0, 1)], sem).wait()

    _matching_head(qbuf[...], dbuf[...], aidx_ref[...], bidx_ref[...],
                   w1a_ref[...], w1b_ref[...], b1_ref[...], w2_ref[...],
                   b2_ref[...], out_ref, use_bf16)


# ---------------------------------------------------------------------------
# VMEM-aware tiling helpers.
# ---------------------------------------------------------------------------
def _vmem_limit_bytes():
    """Per-generation VMEM limit (bytes) with headroom for compiler scratch."""
    try:
        cap = int(pltpu.get_tpu_info().vmem_capacity_bytes)
    except Exception:
        cap = 64 * 1024 * 1024          # conservative default: v7x per-TC VMEM
    cap = min(cap, 128 * 1024 * 1024)   # v5e/v6e physical VMEM
    return (cap * 7) // 8


def _vmem_bytes_estimate(bt, S, H, Q, D, C, gather_rows):
    """Rough per-grid-step VMEM footprint used by the block_b picker."""
    f = 4  # f32 bytes
    weights = (2 * H * H + H * C + H + C) * f            # single-buffered consts
    out = 2 * bt * C * f                                 # double-buffered output
    idx = 2 * bt * (Q + D) * 4                           # double-buffered indices
    inter = bt * (2 * Q * H + D * H + 2 * Q * D) * f     # q/d vecs, sim, per_query
    if gather_rows:
        gather_bufs = bt * (Q + D) * H * f               # qbuf + dbuf scratch
        return weights + out + idx + inter + gather_bufs
    feats = 2 * bt * S * H * f                           # double-buffered features
    onehot = bt * (Q + D) * S * f                        # live one-hot tensors
    return weights + out + idx + inter + feats + onehot


def _pick_block_b(B, S, H, Q, D, C, gather_rows, budget):
    """Largest batch tile fitting the VMEM budget; prefers >= 2 grid steps
    (v7x has two TensorCores) and sublane-friendly (multiple-of-8) tiles."""
    divisors = [d for d in range(1, B + 1) if B % d == 0]
    fitting = [bt for bt in divisors
               if _vmem_bytes_estimate(bt, S, H, Q, D, C, gather_rows) <= budget]
    if not fitting:
        fitting = [1]                     # rely on vmem_limit_bytes / compiler
    multi = [bt for bt in fitting if B // bt >= 2]
    cands = multi if multi else fitting
    sublane = [bt for bt in cands if bt % 8 == 0]
    return max(sublane) if sublane else max(cands)


def _const_weight_spec(shape, single_buffer):
    """BlockSpec for a grid-invariant (weight / bias) operand."""
    idx = lambda *_: (0,) * len(shape)
    if single_buffer:
        try:
            # Constant index map -> double buffering is pure VMEM waste.
            return pl.BlockSpec(shape, idx, pipeline_mode=pl.Buffered(1))
        except Exception:
            pass  # older Pallas build without pipeline_mode / Buffered
    return pl.BlockSpec(shape, idx)


# ---------------------------------------------------------------------------
# Wrapper.
# ---------------------------------------------------------------------------
def ir_matching_forward(features, text_a_indices, text_b_indices, params, *,
                        block_b=None, gather_rows=None, use_bf16_matmul=False,
                        single_buffer_weights=True):
    B, S, H = features.shape
    Q = text_a_indices.shape[1]
    D = text_b_indices.shape[1]
    w1, b1, w2, b2 = params["w1"], params["b1"], params["w2"], params["b2"]
    C = w2.shape[1]

    if gather_rows is None:
        # Row-gather only pays off when most of the sequence goes unreferenced.
        gather_rows = S >= 2 * (Q + D)

    vmem_limit = _vmem_limit_bytes()
    if block_b is None:
        block_b = _pick_block_b(B, S, H, Q, D, C, gather_rows,
                                budget=(vmem_limit * 3) // 4)
    assert B % block_b == 0, (B, block_b)
    grid = (B // block_b,)

    # Split W1 so the (·, 2H) concat never materializes.
    w1a = w1[:H]          # half acting on query_vector_avg
    w1b = w1[H:]          # half acting on query_based_doc_repr
    b1_2d = b1.reshape(1, H)
    b2_2d = b2.reshape(1, C)

    weight_specs = [
        _const_weight_spec((H, H), single_buffer_weights),    # w1a
        _const_weight_spec((H, H), single_buffer_weights),    # w1b
        _const_weight_spec((1, H), single_buffer_weights),    # b1
        _const_weight_spec((H, C), single_buffer_weights),    # w2
        _const_weight_spec((1, C), single_buffer_weights),    # b2
    ]
    out_spec = pl.BlockSpec((block_b, C), lambda b, *_: (b, 0))
    out_shape = jax.ShapeDtypeStruct((B, C), jnp.float32)
    cparams = pltpu.CompilerParams(dimension_semantics=("parallel",),
                                   vmem_limit_bytes=vmem_limit)

    if gather_rows:
        kernel = functools.partial(_ir_matching_gather_kernel,
                                   use_bf16=use_bf16_matmul)
        grid_spec = pltpu.PrefetchScalarGridSpec(
            num_scalar_prefetch=2,    # a_idx, b_idx -> SMEM for DMA addressing
            grid=grid,
            in_specs=[
                pl.BlockSpec(memory_space=pl.ANY),                  # features (HBM)
                pl.BlockSpec((block_b, Q), lambda b, *_: (b, 0)),   # a_idx (VMEM)
                pl.BlockSpec((block_b, D), lambda b, *_: (b, 0)),   # b_idx (VMEM)
                *weight_specs,
            ],
            out_specs=out_spec,
            scratch_shapes=[
                pltpu.VMEM((block_b, Q, H), jnp.float32),           # gathered q rows
                pltpu.VMEM((block_b, D, H), jnp.float32),           # gathered d rows
                pltpu.SemaphoreType.DMA(()),
            ])
        return pl.pallas_call(kernel, out_shape=out_shape, grid_spec=grid_spec,
                              compiler_params=cparams)(
            text_a_indices, text_b_indices,          # scalar-prefetch operands
            features, text_a_indices, text_b_indices,
            w1a, w1b, b1_2d, w2, b2_2d)

    kernel = functools.partial(_ir_matching_dense_kernel,
                               use_bf16=use_bf16_matmul)
    grid_spec = pltpu.PrefetchScalarGridSpec(
        num_scalar_prefetch=0,
        grid=grid,
        in_specs=[
            pl.BlockSpec((block_b, S, H), lambda b, *_: (b, 0, 0)),  # features
            pl.BlockSpec((block_b, Q), lambda b, *_: (b, 0)),        # a_idx
            pl.BlockSpec((block_b, D), lambda b, *_: (b, 0)),        # b_idx
            *weight_specs,
        ],
        out_specs=out_spec)
    return pl.pallas_call(kernel, out_shape=out_shape, grid_spec=grid_spec,
                          compiler_params=cparams)(
        features, text_a_indices, text_b_indices, w1a, w1b, b1_2d, w2, b2_2d)


# ---------------------------------------------------------------------------
# Pure-JAX reference matching the PyTorch forward.
# ---------------------------------------------------------------------------
def ir_matching_reference(features, a_idx, b_idx, w1, b1, w2, b2):
    a_mask = (a_idx > 0).astype(jnp.float32)                         # (B, Q)
    b_mask = (b_idx > 0).astype(jnp.float32)                         # (B, D)
    len_a = a_mask.sum(-1)                                           # (B,)
    len_b = b_mask.sum(-1)                                           # (B,)
    qv = jnp.take_along_axis(features, a_idx[..., None], axis=1)     # (B, Q, H)
    dv = jnp.take_along_axis(features, b_idx[..., None], axis=1)     # (B, D, H)
    qn = jnp.sqrt(jnp.sum(qv * qv, axis=-1))                         # (B, Q)
    dn = jnp.sqrt(jnp.sum(dv * dv, axis=-1))                         # (B, D)
    sim = jnp.einsum('bqh,bdh->bqd', qv, dv) / jnp.maximum(
        qn[:, :, None] * dn[:, None, :], _EPS)
    per_query = jnp.einsum('bqd,bdh->bqh', sim * b_mask[:, None, :], dv)
    per_query = per_query / (len_b[:, None, None] + 1.0)
    q_based = jnp.einsum('bq,bqh->bh', a_mask, per_query) / (len_a[:, None] + 1.0)
    q_avg = jnp.einsum('bq,bqh->bh', a_mask, qv) / (len_a[:, None] + 1.0)
    feat = jnp.concatenate([q_avg, q_based], axis=-1)                # (B, 2H)
    h = jnp.maximum(feat @ w1 + b1, 0.0)
    return h @ w2 + b2


if __name__ == "__main__":
    B, S, H = 16, 64, 128   # batch, sequence length, hidden_size
    Q, D = 8, 8             # query / doc token counts
    C = 3                   # n_classes (regression=False)

    key = jax.random.PRNGKey(0)
    k_feat, k_a, k_b, k_w1, k_b1, k_w2, k_b2 = jax.random.split(key, 7)

    features = jax.random.normal(k_feat, (B, S, H), dtype=jnp.float32)
    text_a_indices = jax.random.randint(k_a, (B, Q), 0, S, dtype=jnp.int32)
    text_b_indices = jax.random.randint(k_b, (B, D), 0, S, dtype=jnp.int32)

    # nn.Linear(2H, H) and nn.Linear(H, C) parameters stored as (in, out).
    params = {
        "w1": 0.1 * jax.random.normal(k_w1, (2 * H, H), dtype=jnp.float32),
        "b1": 0.1 * jax.random.normal(k_b1, (H,), dtype=jnp.float32),
        "w2": 0.1 * jax.random.normal(k_w2, (H, C), dtype=jnp.float32),
        "b2": 0.1 * jax.random.normal(k_b2, (C,), dtype=jnp.float32),
    }

    ref = ir_matching_reference(features, text_a_indices, text_b_indices,
                                params["w1"], params["b1"],
                                params["w2"], params["b2"])

    def run(**kw):
        try:
            return jax.block_until_ready(ir_matching_forward(
                features, text_a_indices, text_b_indices, params,
                single_buffer_weights=True, **kw))
        except Exception:
            # Feature-detect fallback: if this Pallas build rejects
            # single-buffered (pl.Buffered(1)) weight specs, retry with the
            # default double-buffered specs.  A genuine kernel error will
            # re-raise from the retry.
            return jax.block_until_ready(ir_matching_forward(
                features, text_a_indices, text_b_indices, params,
                single_buffer_weights=False, **kw))

    # HBM row-gather path (default when S >> Q+D): f32-exact vs reference.
    out_gather = run(gather_rows=True)
    assert out_gather.shape == (B, C)
    assert jnp.allclose(out_gather, ref, atol=1e-4, rtol=1e-4)

    # Dense one-hot MXU-gather path (kept for small S): f32-exact.
    out_dense = run(gather_rows=False)
    assert jnp.allclose(out_dense, ref, atol=1e-4, rtol=1e-4)

    # bf16 MXU-input fast path (v6e/v7x); f32 accumulation, looser tolerance.
    out_bf16 = run(gather_rows=True, use_bf16_matmul=True)
    assert jnp.allclose(out_bf16, ref, atol=5e-2, rtol=5e-2)

    print("KERNEL_OK")
</pallas_src>

<mosaic_0001>
module attributes {stable_mosaic.version = 11 : i64} {
  func.func @_ir_matching_gather_kernel(%arg0: i32, %arg1: memref<16x8xi32, #tpu.memory_space<smem>>, %arg2: memref<16x8xi32, #tpu.memory_space<smem>>, %arg3: memref<16x64x128xf32, #tpu.memory_space<any>>, %arg4: memref<8x8xi32, #tpu.memory_space<vmem>>, %arg5: memref<8x8xi32, #tpu.memory_space<vmem>>, %arg6: memref<128x128xf32, #tpu.memory_space<vmem>>, %arg7: memref<128x128xf32, #tpu.memory_space<vmem>>, %arg8: memref<1x128xf32, #tpu.memory_space<vmem>>, %arg9: memref<128x3xf32, #tpu.memory_space<vmem>>, %arg10: memref<1x3xf32, #tpu.memory_space<vmem>>, %arg11: memref<8x3xf32, #tpu.memory_space<vmem>>, %arg12: memref<8x8x128xf32, #tpu.memory_space<vmem>>, %arg13: memref<8x8x128xf32, #tpu.memory_space<vmem>>, %arg14: memref<!tpu.dma_semaphore, #tpu.memory_space<semaphore_mem>>) attributes {dimension_semantics = [#tpu.dimension_semantics<parallel>], iteration_bounds = array<i64: 2>, scalar_prefetch = 2 : i64, scratch_operands = 3 : i64, tpu.core_type = #tpu.core_type<tc>, window_params = [{}, {transform_indices = @transform_1, window_bounds = array<i64: 8, 8>}, {transform_indices = @transform_2, window_bounds = array<i64: 8, 8>}, {pipeline_mode = #tpu.pipeline_mode<synchronous>, transform_indices = @transform_3, window_bounds = array<i64: 128, 128>}, {pipeline_mode = #tpu.pipeline_mode<synchronous>, transform_indices = @transform_4, window_bounds = array<i64: 128, 128>}, {pipeline_mode = #tpu.pipeline_mode<synchronous>, transform_indices = @transform_5, window_bounds = array<i64: 1, 128>}, {pipeline_mode = #tpu.pipeline_mode<synchronous>, transform_indices = @transform_6, window_bounds = array<i64: 128, 3>}, {pipeline_mode = #tpu.pipeline_mode<synchronous>, transform_indices = @transform_7, window_bounds = array<i64: 1, 3>}, {transform_indices = @transform_8, window_bounds = array<i64: 8, 3>}]} {
    %c8_i32 = arith.constant 8 : i32
    %0 = arith.muli %arg0, %c8_i32 : i32
    %c0_i32 = arith.constant 0 : i32
    %c8_i32_0 = arith.constant 8 : i32
    %1 = arith.addi %c0_i32, %c8_i32_0 : i32
    %c1_i32 = arith.constant 1 : i32
    scf.for %arg15 = %c0_i32 to %1 step %c1_i32  : i32 {
      %c1_i32_43 = arith.constant 1 : i32
      %72 = arith.muli %arg15, %c1_i32_43 : i32
      %c0_i32_44 = arith.constant 0 : i32
      %73 = arith.addi %c0_i32_44, %72 : i32
      %74 = arith.addi %0, %73 : i32
      %c0_i32_45 = arith.constant 0 : i32
      %c8_i32_46 = arith.constant 8 : i32
      %75 = arith.addi %c0_i32_45, %c8_i32_46 : i32
      %c1_i32_47 = arith.constant 1 : i32
      scf.for %arg16 = %c0_i32_45 to %75 step %c1_i32_47  : i32 {
        %c1_i32_53 = arith.constant 1 : i32
        %77 = arith.muli %arg16, %c1_i32_53 : i32
        %c0_i32_54 = arith.constant 0 : i32
        %78 = arith.addi %c0_i32_54, %77 : i32
        %79 = arith.index_cast %74 : i32 to index
        %80 = arith.index_cast %78 : i32 to index
        %81 = memref.load %arg1[%79, %80] : memref<16x8xi32, #tpu.memory_space<smem>>
        %c0_i32_55 = arith.constant 0 : i32
        %82 = tpu.memref_slice %arg3[%74, %81, %c0_i32_55] : memref<16x64x128xf32, #tpu.memory_space<any>> -> memref<1x1x128xf32, #tpu.memory_space<any>>
        %83 = tpu.memref_squeeze %82 : memref<1x1x128xf32, #tpu.memory_space<any>> -> memref<1x128xf32, #tpu.memory_space<any>>
        %c0_i32_56 = arith.constant 0 : i32
        %84 = tpu.memref_slice %arg12[%73, %78, %c0_i32_56] : memref<8x8x128xf32, #tpu.memory_space<vmem>> -> memref<1x1x128xf32, #tpu.memory_space<vmem>>
        %85 = tpu.memref_squeeze %84 : memref<1x1x128xf32, #tpu.memory_space<vmem>> -> memref<1x128xf32, #tpu.memory_space<vmem>>
        tpu.enqueue_dma source(%83 : memref<1x128xf32, #tpu.memory_space<any>>) target(%85 : memref<1x128xf32, #tpu.memory_space<vmem>>) target_semaphore(%arg14 : memref<!tpu.dma_semaphore, #tpu.memory_space<semaphore_mem>>)
      }
      %c8_i32_48 = arith.constant 8 : i32
      %c0_i32_49 = arith.constant 0 : i32
      %c8_i32_50 = arith.constant 8 : i32
      %76 = arith.addi %c0_i32_49, %c8_i32_50 : i32
      %c1_i32_51 = arith.constant 1 : i32
      scf.for %arg16 = %c0_i32_49 to %76 step %c1_i32_51  : i32 {
        %c1_i32_53 = arith.constant 1 : i32
        %77 = arith.muli %arg16, %c1_i32_53 : i32
        %c0_i32_54 = arith.constant 0 : i32
        %78 = arith.addi %c0_i32_54, %77 : i32
        %79 = arith.index_cast %74 : i32 to index
        %80 = arith.index_cast %78 : i32 to index
        %81 = memref.load %arg2[%79, %80] : memref<16x8xi32, #tpu.memory_space<smem>>
        %c0_i32_55 = arith.constant 0 : i32
        %82 = tpu.memref_slice %arg3[%74, %81, %c0_i32_55] : memref<16x64x128xf32, #tpu.memory_space<any>> -> memref<1x1x128xf32, #tpu.memory_space<any>>
        %83 = tpu.memref_squeeze %82 : memref<1x1x128xf32, #tpu.memory_space<any>> -> memref<1x128xf32, #tpu.memory_space<any>>
        %c0_i32_56 = arith.constant 0 : i32
        %84 = tpu.memref_slice %arg13[%73, %78, %c0_i32_56] : memref<8x8x128xf32, #tpu.memory_space<vmem>> -> memref<1x1x128xf32, #tpu.memory_space<vmem>>
        %85 = tpu.memref_squeeze %84 : memref<1x1x128xf32, #tpu.memory_space<vmem>> -> memref<1x128xf32, #tpu.memory_space<vmem>>
        tpu.enqueue_dma source(%83 : memref<1x128xf32, #tpu.memory_space<any>>) target(%85 : memref<1x128xf32, #tpu.memory_space<vmem>>) target_semaphore(%arg14 : memref<!tpu.dma_semaphore, #tpu.memory_space<semaphore_mem>>)
      }
      %c8_i32_52 = arith.constant 8 : i32
    }
    %c8_i32_1 = arith.constant 8 : i32
    %c0_i32_2 = arith.constant 0 : i32
    %c128_i32 = arith.constant 128 : i32
    %2 = arith.addi %c0_i32_2, %c128_i32 : i32
    %c1_i32_3 = arith.constant 1 : i32
    scf.for %arg15 = %c0_i32_2 to %2 step %c1_i32_3  : i32 {
      %c0_i32_43 = arith.constant 0 : i32
      %c0_i32_44 = arith.constant 0 : i32
      %c0_i32_45 = arith.constant 0 : i32
      %c0_i32_46 = arith.constant 0 : i32
      %72 = tpu.memref_slice %arg3[%c0_i32_43, %c0_i32_45, %c0_i32_46] : memref<16x64x128xf32, #tpu.memory_space<any>> -> memref<1x1x128xf32, #tpu.memory_space<any>>
      %73 = tpu.memref_squeeze %72 : memref<1x1x128xf32, #tpu.memory_space<any>> -> memref<1x128xf32, #tpu.memory_space<any>>
      %c0_i32_47 = arith.constant 0 : i32
      %c0_i32_48 = arith.constant 0 : i32
      %74 = tpu.memref_slice %arg12[%c0_i32_44, %c0_i32_47, %c0_i32_48] : memref<8x8x128xf32, #tpu.memory_space<vmem>> -> memref<1x1x128xf32, #tpu.memory_space<vmem>>
      %75 = tpu.memref_squeeze %74 : memref<1x1x128xf32, #tpu.memory_space<vmem>> -> memref<1x128xf32, #tpu.memory_space<vmem>>
      tpu.wait_dma2 semaphore(%arg14 : memref<!tpu.dma_semaphore, #tpu.memory_space<semaphore_mem>>) src(%73 : memref<1x128xf32, #tpu.memory_space<any>>) dst(%75 : memref<1x128xf32, #tpu.memory_space<vmem>>)
    }
    %c0 = arith.constant 0 : index
    %c0_4 = arith.constant 0 : index
    %c0_5 = arith.constant 0 : index
    %3 = vector.load %arg12[%c0, %c0_4, %c0_5] : memref<8x8x128xf32, #tpu.memory_space<vmem>>, vector<8x8x128xf32>
    %c0_6 = arith.constant 0 : index
    %c0_7 = arith.constant 0 : index
    %c0_8 = arith.constant 0 : index
    %4 = vector.load %arg13[%c0_6, %c0_7, %c0_8] : memref<8x8x128xf32, #tpu.memory_space<vmem>>, vector<8x8x128xf32>
    %c0_9 = arith.constant 0 : index
    %c0_10 = arith.constant 0 : index
    %5 = vector.load %arg4[%c0_9, %c0_10] : memref<8x8xi32, #tpu.memory_space<vmem>>, vector<8x8xi32>
    %c0_11 = arith.constant 0 : index
    %c0_12 = arith.constant 0 : index
    %6 = vector.load %arg5[%c0_11, %c0_12] : memref<8x8xi32, #tpu.memory_space<vmem>>, vector<8x8xi32>
    %c0_13 = arith.constant 0 : index
    %c0_14 = arith.constant 0 : index
    %7 = vector.load %arg6[%c0_13, %c0_14] : memref<128x128xf32, #tpu.memory_space<vmem>>, vector<128x128xf32>
    %c0_15 = arith.constant 0 : index
    %c0_16 = arith.constant 0 : index
    %8 = vector.load %arg7[%c0_15, %c0_16] : memref<128x128xf32, #tpu.memory_space<vmem>>, vector<128x128xf32>
    %c0_17 = arith.constant 0 : index
    %c0_18 = arith.constant 0 : index
    %9 = vector.load %arg8[%c0_17, %c0_18] : memref<1x128xf32, #tpu.memory_space<vmem>>, vector<1x128xf32>
    %c0_19 = arith.constant 0 : index
    %c0_20 = arith.constant 0 : index
    %10 = vector.load %arg9[%c0_19, %c0_20] : memref<128x3xf32, #tpu.memory_space<vmem>>, vector<128x3xf32>
    %c0_21 = arith.constant 0 : index
    %c0_22 = arith.constant 0 : index
    %11 = vector.load %arg10[%c0_21, %c0_22] : memref<1x3xf32, #tpu.memory_space<vmem>>, vector<1x3xf32>
    %c0_i32_23 = arith.constant 0 : i32
    %12 = vector.broadcast %c0_i32_23 : i32 to vector<8x8xi32>
    %13 = arith.cmpi sgt, %5, %12 : vector<8x8xi32>
    %14 = arith.extui %13 : vector<8x8xi1> to vector<8x8xi32>
    %15 = arith.sitofp %14 : vector<8x8xi32> to vector<8x8xf32>
    %c0_i32_24 = arith.constant 0 : i32
    %16 = vector.broadcast %c0_i32_24 : i32 to vector<8x8xi32>
    %17 = arith.cmpi sgt, %6, %16 : vector<8x8xi32>
    %18 = arith.extui %17 : vector<8x8xi1> to vector<8x8xi32>
    %19 = arith.sitofp %18 : vector<8x8xi32> to vector<8x8xf32>
    %cst = arith.constant dense<0.000000e+00> : vector<8xf32>
    %20 = vector.multi_reduction <add>, %15, %cst [1] : vector<8x8xf32> to vector<8xf32>
    %21 = vector.shape_cast %20 : vector<8xf32> to vector<8x1xf32>
    %cst_25 = arith.constant 1.000000e+00 : f32
    %22 = vector.broadcast %cst_25 : f32 to vector<8x1xf32>
    %23 = arith.addf %21, %22 : vector<8x1xf32>
    %cst_26 = arith.constant 1.000000e+00 : f32
    %24 = vector.broadcast %cst_26 : f32 to vector<8x1xf32>
    %25 = arith.divf %24, %23 : vector<8x1xf32>
    %cst_27 = arith.constant dense<0.000000e+00> : vector<8xf32>
    %26 = vector.multi_reduction <add>, %19, %cst_27 [1] : vector<8x8xf32> to vector<8xf32>
    %27 = vector.shape_cast %26 : vector<8xf32> to vector<8x1xf32>
    %cst_28 = arith.constant 1.000000e+00 : f32
    %28 = vector.broadcast %cst_28 : f32 to vector<8x1xf32>
    %29 = arith.addf %27, %28 : vector<8x1xf32>
    %cst_29 = arith.constant 1.000000e+00 : f32
    %30 = vector.broadcast %cst_29 : f32 to vector<8x1xf32>
    %31 = arith.divf %30, %29 : vector<8x1xf32>
    %32 = vector.broadcast %25 : vector<8x1xf32> to vector<8x8xf32>
    %33 = arith.mulf %15, %32 : vector<8x8xf32>
    %34 = vector.broadcast %31 : vector<8x1xf32> to vector<8x8xf32>
    %35 = arith.mulf %19, %34 : vector<8x8xf32>
    "tpu.trace_start"() <{level = 10 : i32, message = "bqh,bdh->bqd"}> : () -> ()
    %cst_30 = arith.constant dense<0.000000e+00> : vector<8x8x8xf32>
    %36 = tpu.matmul %3, %4, %cst_30 {dimension_numbers = #tpu.dot_dimension_numbers<[2], [2], [1], [1], [0, 0, 0, 1, 1, 1], [0], [0]>} : vector<8x8x128xf32>, vector<8x8x128xf32>, vector<8x8x8xf32> -> vector<8x8x8xf32>
    "tpu.trace_stop"() : () -> ()
    %37 = arith.mulf %3, %3 : vector<8x8x128xf32>
    %cst_31 = arith.constant dense<0.000000e+00> : vector<8x8xf32>
    %38 = vector.multi_reduction <add>, %37, %cst_31 [2] : vector<8x8x128xf32> to vector<8x8xf32>
    %39 = vector.shape_cast %38 : vector<8x8xf32> to vector<8x8x1xf32>
    %40 = arith.mulf %4, %4 : vector<8x8x128xf32>
    %cst_32 = arith.constant dense<0.000000e+00> : vector<8x8xf32>
    %41 = vector.multi_reduction <add>, %40, %cst_32 [2] : vector<8x8x128xf32> to vector<8x8xf32>
    %42 = vector.shape_cast %41 : vector<8x8xf32> to vector<8x1x8xf32>
    %43 = vector.broadcast %39 : vector<8x8x1xf32> to vector<8x8x8xf32>
    %44 = vector.broadcast %42 : vector<8x1x8xf32> to vector<8x8x8xf32>
    %45 = arith.mulf %43, %44 : vector<8x8x8xf32>
    %cst_33 = arith.constant 1.000000e-16 : f32
    %46 = vector.broadcast %cst_33 : f32 to vector<8x8x8xf32>
    %47 = arith.maximumf %45, %46 : vector<8x8x8xf32>
    %48 = math.rsqrt %47 : vector<8x8x8xf32>
    %49 = arith.mulf %36, %48 : vector<8x8x8xf32>
    %50 = vector.shape_cast %35 : vector<8x8xf32> to vector<8x1x8xf32>
    %51 = vector.broadcast %50 : vector<8x1x8xf32> to vector<8x8x8xf32>
    %52 = arith.mulf %49, %51 : vector<8x8x8xf32>
    "tpu.trace_start"() <{level = 10 : i32, message = "bqd,bdh->bqh"}> : () -> ()
    %cst_34 = arith.constant dense<0.000000e+00> : vector<8x8x128xf32>
    %53 = tpu.matmul %52, %4, %cst_34 {dimension_numbers = #tpu.dot_dimension_numbers<[2], [1], [1], [2], [0, 0, 0, 1, 1, 2], [0], [0]>} : vector<8x8x8xf32>, vector<8x8x128xf32>, vector<8x8x128xf32> -> vector<8x8x128xf32>
    "tpu.trace_stop"() : () -> ()
    %54 = vector.shape_cast %33 : vector<8x8xf32> to vector<8x8x1xf32>
    %55 = vector.broadcast %54 : vector<8x8x1xf32> to vector<8x8x128xf32>
    %56 = arith.mulf %53, %55 : vector<8x8x128xf32>
    %cst_35 = arith.constant dense<0.000000e+00> : vector<8x128xf32>
    %57 = vector.multi_reduction <add>, %56, %cst_35 [1] : vector<8x8x128xf32> to vector<8x128xf32>
    %58 = vector.broadcast %54 : vector<8x8x1xf32> to vector<8x8x128xf32>
    %59 = arith.mulf %3, %58 : vector<8x8x128xf32>
    %cst_36 = arith.constant dense<0.000000e+00> : vector<8x128xf32>
    %60 = vector.multi_reduction <add>, %59, %cst_36 [1] : vector<8x8x128xf32> to vector<8x128xf32>
    %cst_37 = arith.constant dense<0.000000e+00> : vector<8x128xf32>
    %61 = tpu.matmul %60, %7, %cst_37 {dimension_numbers = #tpu.dot_dimension_numbers<[1], [0], [0], [1], [0, 0, 1, 1], [], []>} : vector<8x128xf32>, vector<128x128xf32>, vector<8x128xf32> -> vector<8x128xf32>
    %cst_38 = arith.constant dense<0.000000e+00> : vector<8x128xf32>
    %62 = tpu.matmul %57, %8, %cst_38 {dimension_numbers = #tpu.dot_dimension_numbers<[1], [0], [0], [1], [0, 0, 1, 1], [], []>} : vector<8x128xf32>, vector<128x128xf32>, vector<8x128xf32> -> vector<8x128xf32>
    %63 = arith.addf %61, %62 : vector<8x128xf32>
    %64 = vector.broadcast %9 : vector<1x128xf32> to vector<8x128xf32>
    %65 = arith.addf %63, %64 : vector<8x128xf32>
    %cst_39 = arith.constant 0.000000e+00 : f32
    %66 = vector.broadcast %cst_39 : f32 to vector<8x128xf32>
    %67 = arith.maximumf %65, %66 : vector<8x128xf32>
    %cst_40 = arith.constant dense<0.000000e+00> : vector<8x3xf32>
    %68 = tpu.matmul %67, %10, %cst_40 {dimension_numbers = #tpu.dot_dimension_numbers<[1], [0], [0], [1], [0, 0, 1, 1], [], []>} : vector<8x128xf32>, vector<128x3xf32>, vector<8x3xf32> -> vector<8x3xf32>
    %69 = vector.broadcast %11 : vector<1x3xf32> to vector<8x3xf32>
    %70 = arith.addf %68, %69 : vector<8x3xf32>
    %c0_41 = arith.constant 0 : index
    %c0_42 = arith.constant 0 : index
    %71 = vector.load %arg11[%c0_41, %c0_42] : memref<8x3xf32, #tpu.memory_space<vmem>>, vector<8x3xf32>
    tpu.vector_store %arg11[%c0_41, %c0_42], %70 {strides = array<i32>} : memref<8x3xf32, #tpu.memory_space<vmem>>, vector<8x3xf32>,
    return
  }
  func.func @transform_1(%arg0: i32, %arg1: memref<16x8xi32, #tpu.memory_space<smem>>, %arg2: memref<16x8xi32, #tpu.memory_space<smem>>) -> (i32, i32) {
    %c0_i32 = arith.constant 0 : i32
    %c0_i32_0 = arith.constant 0 : i32
    return %arg0, %c0_i32 : i32, i32
  }
  func.func @transform_2(%arg0: i32, %arg1: memref<16x8xi32, #tpu.memory_space<smem>>, %arg2: memref<16x8xi32, #tpu.memory_space<smem>>) -> (i32, i32) {
    %c0_i32 = arith.constant 0 : i32
    %c0_i32_0 = arith.constant 0 : i32
    return %arg0, %c0_i32 : i32, i32
  }
  func.func @transform_3(%arg0: i32, %arg1: memref<16x8xi32, #tpu.memory_space<smem>>, %arg2: memref<16x8xi32, #tpu.memory_space<smem>>) -> (i32, i32) {
    %c0_i32 = arith.constant 0 : i32
    %c0_i32_0 = arith.constant 0 : i32
    %c0_i32_1 = arith.constant 0 : i32
    return %c0_i32, %c0_i32_0 : i32, i32
  }
  func.func @transform_4(%arg0: i32, %arg1: memref<16x8xi32, #tpu.memory_space<smem>>, %arg2: memref<16x8xi32, #tpu.memory_space<smem>>) -> (i32, i32) {
    %c0_i32 = arith.constant 0 : i32
    %c0_i32_0 = arith.constant 0 : i32
    %c0_i32_1 = arith.constant 0 : i32
    return %c0_i32, %c0_i32_0 : i32, i32
  }
  func.func @transform_5(%arg0: i32, %arg1: memref<16x8xi32, #tpu.memory_space<smem>>, %arg2: memref<16x8xi32, #tpu.memory_space<smem>>) -> (i32, i32) {
    %c0_i32 = arith.constant 0 : i32
    %c0_i32_0 = arith.constant 0 : i32
    %c0_i32_1 = arith.constant 0 : i32
    return %c0_i32, %c0_i32_0 : i32, i32
  }
  func.func @transform_6(%arg0: i32, %arg1: memref<16x8xi32, #tpu.memory_space<smem>>, %arg2: memref<16x8xi32, #tpu.memory_space<smem>>) -> (i32, i32) {
    %c0_i32 = arith.constant 0 : i32
    %c0_i32_0 = arith.constant 0 : i32
    %c0_i32_1 = arith.constant 0 : i32
    return %c0_i32, %c0_i32_0 : i32, i32
  }
  func.func @transform_7(%arg0: i32, %arg1: memref<16x8xi32, #tpu.memory_space<smem>>, %arg2: memref<16x8xi32, #tpu.memory_space<smem>>) -> (i32, i32) {
    %c0_i32 = arith.constant 0 : i32
    %c0_i32_0 = arith.constant 0 : i32
    %c0_i32_1 = arith.constant 0 : i32
    return %c0_i32, %c0_i32_0 : i32, i32
  }
  func.func @transform_8(%arg0: i32, %arg1: memref<16x8xi32, #tpu.memory_space<smem>>, %arg2: memref<16x8xi32, #tpu.memory_space<smem>>) -> (i32, i32) {
    %c0_i32 = arith.constant 0 : i32
    %c0_i32_0 = arith.constant 0 : i32
    return %arg0, %c0_i32 : i32, i32
  }
}

module attributes {stable_mosaic.version = 11 : i64} {
  func.func @_ir_matching_gather_kernel(%arg0: i32, %arg1: memref<16x8xi32, #tpu.memory_space<smem>>, %arg2: memref<16x8xi32, #tpu.memory_space<smem>>, %arg3: memref<16x64x128xf32, #tpu.memory_space<any>>, %arg4: memref<8x8xi32, #tpu.memory_space<vmem>>, %arg5: memref<8x8xi32, #tpu.memory_space<vmem>>, %arg6: memref<128x128xf32, #tpu.memory_space<vmem>>, %arg7: memref<128x128xf32, #tpu.memory_space<vmem>>, %arg8: memref<1x128xf32, #tpu.memory_space<vmem>>, %arg9: memref<128x3xf32, #tpu.memory_space<vmem>>, %arg10: memref<1x3xf32, #tpu.memory_space<vmem>>, %arg11: memref<8x3xf32, #tpu.memory_space<vmem>>, %arg12: memref<8x8x128xf32, #tpu.memory_space<vmem>>, %arg13: memref<8x8x128xf32, #tpu.memory_space<vmem>>, %arg14: memref<!tpu.dma_semaphore, #tpu.memory_space<semaphore_mem>>) attributes {dimension_semantics = [#tpu.dimension_semantics<parallel>], iteration_bounds = array<i64: 2>, scalar_prefetch = 2 : i64, scratch_operands = 3 : i64, tpu.core_type = #tpu.core_type<tc>, window_params = [{}, {transform_indices = @transform_1, window_bounds = array<i64: 8, 8>}, {transform_indices = @transform_2, window_bounds = array<i64: 8, 8>}, {pipeline_mode = #tpu.pipeline_mode<synchronous>, transform_indices = @transform_3, window_bounds = array<i64: 128, 128>}, {pipeline_mode = #tpu.pipeline_mode<synchronous>, transform_indices = @transform_4, window_bounds = array<i64: 128, 128>}, {pipeline_mode = #tpu.pipeline_mode<synchronous>, transform_indices = @transform_5, window_bounds = array<i64: 1, 128>}, {pipeline_mode = #tpu.pipeline_mode<synchronous>, transform_indices = @transform_6, window_bounds = array<i64: 128, 3>}, {pipeline_mode = #tpu.pipeline_mode<synchronous>, transform_indices = @transform_7, window_bounds = array<i64: 1, 3>}, {transform_indices = @transform_8, window_bounds = array<i64: 8, 3>}]} {
    %c8_i32 = arith.constant 8 : i32
    %0 = arith.muli %arg0, %c8_i32 : i32
    %c0_i32 = arith.constant 0 : i32
    %c8_i32_0 = arith.constant 8 : i32
    %1 = arith.addi %c0_i32, %c8_i32_0 : i32
    %c1_i32 = arith.constant 1 : i32
    scf.for %arg15 = %c0_i32 to %1 step %c1_i32  : i32 {
      %c1_i32_43 = arith.constant 1 : i32
      %72 = arith.muli %arg15, %c1_i32_43 : i32
      %c0_i32_44 = arith.constant 0 : i32
      %73 = arith.addi %c0_i32_44, %72 : i32
      %74 = arith.addi %0, %73 : i32
      %c0_i32_45 = arith.constant 0 : i32
      %c8_i32_46 = arith.constant 8 : i32
      %75 = arith.addi %c0_i32_45, %c8_i32_46 : i32
      %c1_i32_47 = arith.constant 1 : i32
      scf.for %arg16 = %c0_i32_45 to %75 step %c1_i32_47  : i32 {
        %c1_i32_53 = arith.constant 1 : i32
        %77 = arith.muli %arg16, %c1_i32_53 : i32
        %c0_i32_54 = arith.constant 0 : i32
        %78 = arith.addi %c0_i32_54, %77 : i32
        %79 = arith.index_cast %74 : i32 to index
        %80 = arith.index_cast %78 : i32 to index
        %81 = memref.load %arg1[%79, %80] : memref<16x8xi32, #tpu.memory_space<smem>>
        %c0_i32_55 = arith.constant 0 : i32
        %82 = tpu.memref_slice %arg3[%74, %81, %c0_i32_55] : memref<16x64x128xf32, #tpu.memory_space<any>> -> memref<1x1x128xf32, #tpu.memory_space<any>>
        %83 = tpu.memref_squeeze %82 : memref<1x1x128xf32, #tpu.memory_space<any>> -> memref<1x128xf32, #tpu.memory_space<any>>
        %c0_i32_56 = arith.constant 0 : i32
        %84 = tpu.memref_slice %arg12[%73, %78, %c0_i32_56] : memref<8x8x128xf32, #tpu.memory_space<vmem>> -> memref<1x1x128xf32, #tpu.memory_space<vmem>>
        %85 = tpu.memref_squeeze %84 : memref<1x1x128xf32, #tpu.memory_space<vmem>> -> memref<1x128xf32, #tpu.memory_space<vmem>>
        tpu.enqueue_dma source(%83 : memref<1x128xf32, #tpu.memory_space<any>>) target(%85 : memref<1x128xf32, #tpu.memory_space<vmem>>) target_semaphore(%arg14 : memref<!tpu.dma_semaphore, #tpu.memory_space<semaphore_mem>>)
      }
      %c8_i32_48 = arith.constant 8 : i32
      %c0_i32_49 = arith.constant 0 : i32
      %c8_i32_50 = arith.constant 8 : i32
      %76 = arith.addi %c0_i32_49, %c8_i32_50 : i32
      %c1_i32_51 = arith.constant 1 : i32
      scf.for %arg16 = %c0_i32_49 to %76 step %c1_i32_51  : i32 {
        %c1_i32_53 = arith.constant 1 : i32
        %77 = arith.muli %arg16, %c1_i32_53 : i32
        %c0_i32_54 = arith.constant 0 : i32
        %78 = arith.addi %c0_i32_54, %77 : i32
        %79 = arith.index_cast %74 : i32 to index
        %80 = arith.index_cast %78 : i32 to index
        %81 = memref.load %arg2[%79, %80] : memref<16x8xi32, #tpu.memory_space<smem>>
        %c0_i32_55 = arith.constant 0 : i32
        %82 = tpu.memref_slice %arg3[%74, %81, %c0_i32_55] : memref<16x64x128xf32, #tpu.memory_space<any>> -> memref<1x1x128xf32, #tpu.memory_space<any>>
        %83 = tpu.memref_squeeze %82 : memref<1x1x128xf32, #tpu.memory_space<any>> -> memref<1x128xf32, #tpu.memory_space<any>>
        %c0_i32_56 = arith.constant 0 : i32
        %84 = tpu.memref_slice %arg13[%73, %78, %c0_i32_56] : memref<8x8x128xf32, #tpu.memory_space<vmem>> -> memref<1x1x128xf32, #tpu.memory_space<vmem>>
        %85 = tpu.memref_squeeze %84 : memref<1x1x128xf32, #tpu.memory_space<vmem>> -> memref<1x128xf32, #tpu.memory_space<vmem>>
        tpu.enqueue_dma source(%83 : memref<1x128xf32, #tpu.memory_space<any>>) target(%85 : memref<1x128xf32, #tpu.memory_space<vmem>>) target_semaphore(%arg14 : memref<!tpu.dma_semaphore, #tpu.memory_space<semaphore_mem>>)
      }
      %c8_i32_52 = arith.constant 8 : i32
    }
    %c8_i32_1 = arith.constant 8 : i32
    %c0_i32_2 = arith.constant 0 : i32
    %c128_i32 = arith.constant 128 : i32
    %2 = arith.addi %c0_i32_2, %c128_i32 : i32
    %c1_i32_3 = arith.constant 1 : i32
    scf.for %arg15 = %c0_i32_2 to %2 step %c1_i32_3  : i32 {
      %c0_i32_43 = arith.constant 0 : i32
      %c0_i32_44 = arith.constant 0 : i32
      %c0_i32_45 = arith.constant 0 : i32
      %c0_i32_46 = arith.constant 0 : i32
      %72 = tpu.memref_slice %arg3[%c0_i32_43, %c0_i32_45, %c0_i32_46] : memref<16x64x128xf32, #tpu.memory_space<any>> -> memref<1x1x128xf32, #tpu.memory_space<any>>
      %73 = tpu.memref_squeeze %72 : memref<1x1x128xf32, #tpu.memory_space<any>> -> memref<1x128xf32, #tpu.memory_space<any>>
      %c0_i32_47 = arith.constant 0 : i32
      %c0_i32_48 = arith.constant 0 : i32
      %74 = tpu.memref_slice %arg12[%c0_i32_44, %c0_i32_47, %c0_i32_48] : memref<8x8x128xf32, #tpu.memory_space<vmem>> -> memref<1x1x128xf32, #tpu.memory_space<vmem>>
      %75 = tpu.memref_squeeze %74 : memref<1x1x128xf32, #tpu.memory_space<vmem>> -> memref<1x128xf32, #tpu.memory_space<vmem>>
      tpu.wait_dma2 semaphore(%arg14 : memref<!tpu.dma_semaphore, #tpu.memory_space<semaphore_mem>>) src(%73 : memref<1x128xf32, #tpu.memory_space<any>>) dst(%75 : memref<1x128xf32, #tpu.memory_space<vmem>>)
    }
    %c0 = arith.constant 0 : index
    %c0_4 = arith.constant 0 : index
    %c0_5 = arith.constant 0 : index
    %3 = vector.load %arg12[%c0, %c0_4, %c0_5] : memref<8x8x128xf32, #tpu.memory_space<vmem>>, vector<8x8x128xf32>
    %c0_6 = arith.constant 0 : index
    %c0_7 = arith.constant 0 : index
    %c0_8 = arith.constant 0 : index
    %4 = vector.load %arg13[%c0_6, %c0_7, %c0_8] : memref<8x8x128xf32, #tpu.memory_space<vmem>>, vector<8x8x128xf32>
    %c0_9 = arith.constant 0 : index
    %c0_10 = arith.constant 0 : index
    %5 = vector.load %arg4[%c0_9, %c0_10] : memref<8x8xi32, #tpu.memory_space<vmem>>, vector<8x8xi32>
    %c0_11 = arith.constant 0 : index
    %c0_12 = arith.constant 0 : index
    %6 = vector.load %arg5[%c0_11, %c0_12] : memref<8x8xi32, #tpu.memory_space<vmem>>, vector<8x8xi32>
    %c0_13 = arith.constant 0 : index
    %c0_14 = arith.constant 0 : index
    %7 = vector.load %arg6[%c0_13, %c0_14] : memref<128x128xf32, #tpu.memory_space<vmem>>, vector<128x128xf32>
    %c0_15 = arith.constant 0 : index
    %c0_16 = arith.constant 0 : index
    %8 = vector.load %arg7[%c0_15, %c0_16] : memref<128x128xf32, #tpu.memory_space<vmem>>, vector<128x128xf32>
    %c0_17 = arith.constant 0 : index
    %c0_18 = arith.constant 0 : index
    %9 = vector.load %arg8[%c0_17, %c0_18] : memref<1x128xf32, #tpu.memory_space<vmem>>, vector<1x128xf32>
    %c0_19 = arith.constant 0 : index
    %c0_20 = arith.constant 0 : index
    %10 = vector.load %arg9[%c0_19, %c0_20] : memref<128x3xf32, #tpu.memory_space<vmem>>, vector<128x3xf32>
    %c0_21 = arith.constant 0 : index
    %c0_22 = arith.constant 0 : index
    %11 = vector.load %arg10[%c0_21, %c0_22] : memref<1x3xf32, #tpu.memory_space<vmem>>, vector<1x3xf32>
    %c0_i32_23 = arith.constant 0 : i32
    %12 = vector.broadcast %c0_i32_23 : i32 to vector<8x8xi32>
    %13 = arith.cmpi sgt, %5, %12 : vector<8x8xi32>
    %14 = arith.extui %13 : vector<8x8xi1> to vector<8x8xi32>
    %15 = arith.sitofp %14 : vector<8x8xi32> to vector<8x8xf32>
    %c0_i32_24 = arith.constant 0 : i32
    %16 = vector.broadcast %c0_i32_24 : i32 to vector<8x8xi32>
    %17 = arith.cmpi sgt, %6, %16 : vector<8x8xi32>
    %18 = arith.extui %17 : vector<8x8xi1> to vector<8x8xi32>
    %19 = arith.sitofp %18 : vector<8x8xi32> to vector<8x8xf32>
    %cst = arith.constant dense<0.000000e+00> : vector<8xf32>
    %20 = vector.multi_reduction <add>, %15, %cst [1] : vector<8x8xf32> to vector<8xf32>
    %21 = vector.shape_cast %20 : vector<8xf32> to vector<8x1xf32>
    %cst_25 = arith.constant 1.000000e+00 : f32
    %22 = vector.broadcast %cst_25 : f32 to vector<8x1xf32>
    %23 = arith.addf %21, %22 : vector<8x1xf32>
    %cst_26 = arith.constant 1.000000e+00 : f32
    %24 = vector.broadcast %cst_26 : f32 to vector<8x1xf32>
    %25 = arith.divf %24, %23 : vector<8x1xf32>
    %cst_27 = arith.constant dense<0.000000e+00> : vector<8xf32>
    %26 = vector.multi_reduction <add>, %19, %cst_27 [1] : vector<8x8xf32> to vector<8xf32>
    %27 = vector.shape_cast %26 : vector<8xf32> to vector<8x1xf32>
    %cst_28 = arith.constant 1.000000e+00 : f32
    %28 = vector.broadcast %cst_28 : f32 to vector<8x1xf32>
    %29 = arith.addf %27, %28 : vector<8x1xf32>
    %cst_29 = arith.constant 1.000000e+00 : f32
    %30 = vector.broadcast %cst_29 : f32 to vector<8x1xf32>
    %31 = arith.divf %30, %29 : vector<8x1xf32>
    %32 = vector.broadcast %25 : vector<8x1xf32> to vector<8x8xf32>
    %33 = arith.mulf %15, %32 : vector<8x8xf32>
    %34 = vector.broadcast %31 : vector<8x1xf32> to vector<8x8xf32>
    %35 = arith.mulf %19, %34 : vector<8x8xf32>
    "tpu.trace_start"() <{level = 10 : i32, message = "bqh,bdh->bqd"}> : () -> ()
    %cst_30 = arith.constant dense<0.000000e+00> : vector<8x8x8xf32>
    %36 = tpu.matmul %3, %4, %cst_30 {dimension_numbers = #tpu.dot_dimension_numbers<[2], [2], [1], [1], [0, 0, 0, 1, 1, 1], [0], [0]>} : vector<8x8x128xf32>, vector<8x8x128xf32>, vector<8x8x8xf32> -> vector<8x8x8xf32>
    "tpu.trace_stop"() : () -> ()
    %37 = arith.mulf %3, %3 : vector<8x8x128xf32>
    %cst_31 = arith.constant dense<0.000000e+00> : vector<8x8xf32>
    %38 = vector.multi_reduction <add>, %37, %cst_31 [2] : vector<8x8x128xf32> to vector<8x8xf32>
    %39 = vector.shape_cast %38 : vector<8x8xf32> to vector<8x8x1xf32>
    %40 = arith.mulf %4, %4 : vector<8x8x128xf32>
    %cst_32 = arith.constant dense<0.000000e+00> : vector<8x8xf32>
    %41 = vector.multi_reduction <add>, %40, %cst_32 [2] : vector<8x8x128xf32> to vector<8x8xf32>
    %42 = vector.shape_cast %41 : vector<8x8xf32> to vector<8x1x8xf32>
    %43 = vector.broadcast %39 : vector<8x8x1xf32> to vector<8x8x8xf32>
    %44 = vector.broadcast %42 : vector<8x1x8xf32> to vector<8x8x8xf32>
    %45 = arith.mulf %43, %44 : vector<8x8x8xf32>
    %cst_33 = arith.constant 1.000000e-16 : f32
    %46 = vector.broadcast %cst_33 : f32 to vector<8x8x8xf32>
    %47 = arith.maximumf %45, %46 : vector<8x8x8xf32>
    %48 = math.rsqrt %47 : vector<8x8x8xf32>
    %49 = arith.mulf %36, %48 : vector<8x8x8xf32>
    %50 = vector.shape_cast %35 : vector<8x8xf32> to vector<8x1x8xf32>
    %51 = vector.broadcast %50 : vector<8x1x8xf32> to vector<8x8x8xf32>
    %52 = arith.mulf %49, %51 : vector<8x8x8xf32>
    "tpu.trace_start"() <{level = 10 : i32, message = "bqd,bdh->bqh"}> : () -> ()
    %cst_34 = arith.constant dense<0.000000e+00> : vector<8x8x128xf32>
    %53 = tpu.matmul %52, %4, %cst_34 {dimension_numbers = #tpu.dot_dimension_numbers<[2], [1], [1], [2], [0, 0, 0, 1, 1, 2], [0], [0]>} : vector<8x8x8xf32>, vector<8x8x128xf32>, vector<8x8x128xf32> -> vector<8x8x128xf32>
    "tpu.trace_stop"() : () -> ()
    %54 = vector.shape_cast %33 : vector<8x8xf32> to vector<8x8x1xf32>
    %55 = vector.broadcast %54 : vector<8x8x1xf32> to vector<8x8x128xf32>
    %56 = arith.mulf %53, %55 : vector<8x8x128xf32>
    %cst_35 = arith.constant dense<0.000000e+00> : vector<8x128xf32>
    %57 = vector.multi_reduction <add>, %56, %cst_35 [1] : vector<8x8x128xf32> to vector<8x128xf32>
    %58 = vector.broadcast %54 : vector<8x8x1xf32> to vector<8x8x128xf32>
    %59 = arith.mulf %3, %58 : vector<8x8x128xf32>
    %cst_36 = arith.constant dense<0.000000e+00> : vector<8x128xf32>
    %60 = vector.multi_reduction <add>, %59, %cst_36 [1] : vector<8x8x128xf32> to vector<8x128xf32>
    %cst_37 = arith.constant dense<0.000000e+00> : vector<8x128xf32>
    %61 = tpu.matmul %60, %7, %cst_37 {dimension_numbers = #tpu.dot_dimension_numbers<[1], [0], [0], [1], [0, 0, 1, 1], [], []>} : vector<8x128xf32>, vector<128x128xf32>, vector<8x128xf32> -> vector<8x128xf32>
    %cst_38 = arith.constant dense<0.000000e+00> : vector<8x128xf32>
    %62 = tpu.matmul %57, %8, %cst_38 {dimension_numbers = #tpu.dot_dimension_numbers<[1], [0], [0], [1], [0, 0, 1, 1], [], []>} : vector<8x128xf32>, vector<128x128xf32>, vector<8x128xf32> -> vector<8x128xf32>
    %63 = arith.addf %61, %62 : vector<8x128xf32>
    %64 = vector.broadcast %9 : vector<1x128xf32> to vector<8x128xf32>
    %65 = arith.addf %63, %64 : vector<8x128xf32>
    %cst_39 = arith.constant 0.000000e+00 : f32
    %66 = vector.broadcast %cst_39 : f32 to vector<8x128xf32>
    %67 = arith.maximumf %65, %66 : vector<8x128xf32>
    %cst_40 = arith.constant dense<0.000000e+00> : vector<8x3xf32>
    %68 = tpu.matmul %67, %10, %cst_40 {dimension_numbers = #tpu.dot_dimension_numbers<[1], [0], [0], [1], [0, 0, 1, 1], [], []>} : vector<8x128xf32>, vector<128x3xf32>, vector<8x3xf32> -> vector<8x3xf32>
    %69 = vector.broadcast %11 : vector<1x3xf32> to vector<8x3xf32>
    %70 = arith.addf %68, %69 : vector<8x3xf32>
    %c0_41 = arith.constant 0 : index
    %c0_42 = arith.constant 0 : index
    %71 = vector.load %arg11[%c0_41, %c0_42] : memref<8x3xf32, #tpu.memory_space<vmem>>, vector<8x3xf32>
    tpu.vector_store %arg11[%c0_41, %c0_42], %70 {strides = array<i32>} : memref<8x3xf32, #tpu.memory_space<vmem>>, vector<8x3xf32>,
    return
  }
  func.func @transform_1(%arg0: i32, %arg1: memref<16x8xi32, #tpu.memory_space<smem>>, %arg2: memref<16x8xi32, #tpu.memory_space<smem>>) -> (i32, i32) {
    %c0_i32 = arith.constant 0 : i32
    %c0_i32_0 = arith.constant 0 : i32
    return %arg0, %c0_i32 : i32, i32
  }
  func.func @transform_2(%arg0: i32, %arg1: memref<16x8xi32, #tpu.memory_space<smem>>, %arg2: memref<16x8xi32, #tpu.memory_space<smem>>) -> (i32, i32) {
    %c0_i32 = arith.constant 0 : i32
    %c0_i32_0 = arith.constant 0 : i32
    return %arg0, %c0_i32 : i32, i32
  }
  func.func @transform_3(%arg0: i32, %arg1: memref<16x8xi32, #tpu.memory_space<smem>>, %arg2: memref<16x8xi32, #tpu.memory_space<smem>>) -> (i32, i32) {
    %c0_i32 = arith.constant 0 : i32
    %c0_i32_0 = arith.constant 0 : i32
    %c0_i32_1 = arith.constant 0 : i32
    return %c0_i32, %c0_i32_0 : i32, i32
  }
  func.func @transform_4(%arg0: i32, %arg1: memref<16x8xi32, #tpu.memory_space<smem>>, %arg2: memref<16x8xi32, #tpu.memory_space<smem>>) -> (i32, i32) {
    %c0_i32 = arith.constant 0 : i32
    %c0_i32_0 = arith.constant 0 : i32
    %c0_i32_1 = arith.constant 0 : i32
    return %c0_i32, %c0_i32_0 : i32, i32
  }
  func.func @transform_5(%arg0: i32, %arg1: memref<16x8xi32, #tpu.memory_space<smem>>, %arg2: memref<16x8xi32, #tpu.memory_space<smem>>) -> (i32, i32) {
    %c0_i32 = arith.constant 0 : i32
    %c0_i32_0 = arith.constant 0 : i32
    %c0_i32_1 = arith.constant 0 : i32
    return %c0_i32, %c0_i32_0 : i32, i32
  }
  func.func @transform_6(%arg0: i32, %arg1: memref<16x8xi32, #tpu.memory_space<smem>>, %arg2: memref<16x8xi32, #tpu.memory_space<smem>>) -> (i32, i32) {
    %c0_i32 = arith.constant 0 : i32
    %c0_i32_0 = arith.constant 0 : i32
    %c0_i32_1 = arith.constant 0 : i32
    return %c0_i32, %c0_i32_0 : i32, i32
  }
  func.func @transform_7(%arg0: i32, %arg1: memref<16x8xi32, #tpu.memory_space<smem>>, %arg2: memref<16x8xi32, #tpu.memory_space<smem>>) -> (i32, i32) {
    %c0_i32 = arith.constant 0 : i32
    %c0_i32_0 = arith.constant 0 : i32
    %c0_i32_1 = arith.constant 0 : i32
    return %c0_i32, %c0_i32_0 : i32, i32
  }
  func.func @transform_8(%arg0: i32, %arg1: memref<16x8xi32, #tpu.memory_space<smem>>, %arg2: memref<16x8xi32, #tpu.memory_space<smem>>) -> (i32, i32) {
    %c0_i32 = arith.constant 0 : i32
    %c0_i32_0 = arith.constant 0 : i32
    return %arg0, %c0_i32 : i32, i32
  }
}

</mosaic_0001>

<llo_original>
// kernel: tpu_custom_call.1
$region0: #{tpu_custom_call.1}
  #allocation0 [shape = 'u32[]', space=smem, size = 0x4, offset = 0x4, fixed_abs, tag = 'smem constant byte address 0x4 - core index']
  #allocation1 [shape = 'u32[144,128]{1,0:T(1,128)}', space=vmem, size = 0x12000, scoped, tag = 'internal scratch']
  #allocation2 [shape = 'f32[8,8,128]{2,1,0:T(8,128)}', space=vmem, size = 0x8000, scoped, tag = 'scratch operand']
  #allocation3 [shape = 'f32[8,8,128]{2,1,0:T(8,128)}', space=vmem, size = 0x8000, scoped, tag = 'scratch operand']
  #allocation4 [shape = 's32[1]{0}', space=sflag, size = 0x4, scoped, tag = 'scratch operand']
  #allocation5 [shape = 's32[1]{0}', space=sflag, size = 0x4, scoped, tag = 'scoped memory for tpu_custom_call.1']
  #allocation6 [shape = 'u8[8192]{0}', space=smem, size = 0x2000, scoped, tag = 'prefetched SMEM operand 0']
  #allocation7 [shape = 'u8[8192]{0}', space=smem, size = 0x2000, scoped, tag = 'prefetched SMEM operand 1']
  #allocation10 [shape = 's32[]', space=sflag, size = 0x4, offset = 0, fixed_abs, tag = 'sflag constant byte address 0x0 - dummy sync flag']
  #allocation11 [shape = 's32[]', space=sflag, size = 0x4, offset = 0, fixed_abs, tag = 'sflag constant byte address 0x0 - dummy sync flag']
  #allocation12 [shape = 'u32[]', space=smem, size = 0x4, offset = 0x44, fixed_abs, tag = 'smem constant byte address 0x44 - assertion arg 0']
  #allocation13 [shape = 'u32[]', space=smem, size = 0x4, offset = 0x48, fixed_abs, tag = 'smem constant byte address 0x48 - assertion arg 1']
  #allocation14 [shape = 's32[]', space=sflag, size = 0x4, offset = 0, fixed_abs, tag = 'sflag constant byte address 0x0 - dummy sync flag']
  #allocation15 [shape = 's32[]', space=sflag, size = 0x4, offset = 0, fixed_abs, tag = 'sflag constant byte address 0x0 - dummy sync flag']
  %s0 = inlined_call_operand.vmem [shape: s32[16,8], index: 0, kind: input, shape index: {}]
  %s1 = inlined_call_operand.vmem [shape: s32[16,8], index: 1, kind: input, shape index: {}]
  %s2 = inlined_call_operand.hbm [shape: f32[16,64,128], index: 2, kind: input, shape index: {}]
  %s3 = inlined_call_operand.vmem [shape: s32[16,8], index: 3, kind: input, shape index: {}]
  %s4 = inlined_call_operand.vmem [shape: s32[16,8], index: 4, kind: input, shape index: {}]
  %s5 = inlined_call_operand.vmem [shape: f32[128,128], index: 5, kind: input, shape index: {}]
  %s6 = inlined_call_operand.hbm [shape: f32[128,128], index: 6, kind: input, shape index: {}]
  %s7 = inlined_call_operand.vmem [shape: f32[1,128], index: 7, kind: input, shape index: {}]
  %s8 = inlined_call_operand.vmem [shape: f32[128,3], index: 8, kind: input, shape index: {}]
  %s9 = inlined_call_operand.vmem [shape: f32[1,3], index: 9, kind: input, shape index: {}]
  %s10 = inlined_call_operand.vmem [shape: f32[16,3], index: 10, kind: output, shape index: {}]
  %s11 = sld [smem:[#allocation0]]
  $region101: #{tpu_custom_call.1} parent=0
    _
  %s13 = ssub.s32 1, %s11
  %s14 = scalar_select 0, %s13, %s11
  %s15 = sshll.u32 %s0, 4
  %s16 = int_to_ptr.vmem [resolvable:$true] %s15
  %18 = dma.vmem_to_smem %s16, 256, [#allocation6], [#allocation5]
  %s19 = sshll.u32 %s1, 4
  %s20 = int_to_ptr.vmem [resolvable:$true] %s19
  %22 = dma.vmem_to_smem %s20, 256, [#allocation7], [#allocation5]
  %23 = dma.done [#allocation5], 512
  %24 = sfence
  $region1: #{tpu_custom_call.1} parent=0
    #allocation8 [shape = 'u8[65536]{0}', space=vmem, size = 0x10000, scoped, tag = 'input window, operand 6, single buffered']
    #allocation9 [shape = 's32[2]{0}', space=sflag, size = 0x8, scoped, tag = 'scoped memory for tpu_custom_call.1']
    %25 = vsyncpa [#allocation9], 0
    loop: start=0, step=1, limit=4
    $region2: #{tpu_custom_call.1} parent=1 // loop_pre_header
      _
    $region3: #{tpu_custom_call.1} parent=1 // loop_header
      %s27 = sphi 0, %s31
      %p28 = scmp.ge.s32.totalorder %s27, 4
      %s37 = sphi 0, %s39
      %s40 = sphi 0, %s37
      %s41 = sphi 0, %s40
      %s57 = sphi 0, %s41
      %s63 = sphi 0, %s65
      %s66 = sphi 0, %s63
      %s67 = sphi 0, %s66
      %s83 = sphi 0, %s67
      %s87 = sphi 0, %s87
      %s89 = sphi 0, %s87
      %s90 = sphi 0, %s89
      %s104 = sphi 0, %s90
      %s108 = sphi 0, %s108
      %s110 = sphi 0, %s108
      %s111 = sphi 0, %s110
      %s125 = sphi 0, %s111
      %s129 = sphi 0, %s129
      %s131 = sphi 0, %s129
      %s132 = sphi 0, %s131
      %s146 = sphi 0, %s132
      %s150 = sphi 0, %s150
      %s152 = sphi 0, %s150
      %s153 = sphi 0, %s152
      %s167 = sphi 0, %s153
      %s171 = sphi 0, %s171
      %s173 = sphi 0, %s171
      %s174 = sphi 0, %s173
      %s188 = sphi 0, %s174
      %s194 = sphi 0, %s196
      %s197 = sphi 0, %s194
      %s198 = sphi 0, %s197
      %s214 = sphi 0, %s198
    $region4: #{tpu_custom_call.1} parent=1 // loop_header_branch
      %30 = sbr.rel (%p28) target = $region8
    $region5: #{tpu_custom_call.1} parent=1 // loop_body
      %s32 = ssub.s32 %s27, 1
      %s33 = ssub.s32 %s27, 2
      %s34 = sadd.s32 %s27, 1
      %s35 = ssub.s32 %s27, %s34
      %p36 = scmp.eq.s32.totalorder %s35, 0
      %s38 = sadd.s32 %s37, 1
      %s39 = scalar_select %p36, %s37, %s38
      %p42 = pneg %p36
      %p43 = scmp.eq.s32.totalorder %s27, 1
      %p44 = por %p42, %p43
      %p45 = scmp.ne.s32.totalorder %s37, %s40
      %p46 = scmp.eq.s32.totalorder %s27, 0
      %p47 = por %p45, %p46
      %p48 = scmp.ne.s32.totalorder %s37, %s40
      %p49 = scmp.eq.s32.totalorder %s32, 1
      %p50 = por %p48, %p49
      %p51 = scmp.ne.s32.totalorder %s40, %s41
      %p52 = scmp.eq.s32.totalorder %s32, 0
      %p53 = por %p51, %p52
      %p54 = scmp.ne.s32.totalorder %s40, %s41
      %p55 = scmp.eq.s32.totalorder %s33, 1
      %p56 = por %p54, %p55
      %p58 = scmp.ne.s32.totalorder %s41, %s57
      %p59 = scmp.eq.s32.totalorder %s33, 0
      %p60 = por %p58, %p59
      %s61 = ssub.s32 %s27, %s34
      %p62 = scmp.eq.s32.totalorder %s61, 0
      %s64 = sadd.s32 %s63, 1
      %s65 = scalar_select %p62, %s63, %s64
      %p68 = pneg %p62
      %p69 = scmp.eq.s32.totalorder %s27, 1
      %p70 = por %p68, %p69
      %p71 = scmp.ne.s32.totalorder %s63, %s66
      %p72 = scmp.eq.s32.totalorder %s27, 0
      %p73 = por %p71, %p72
      %p74 = scmp.ne.s32.totalorder %s63, %s66
      %p75 = scmp.eq.s32.totalorder %s32, 1
      %p76 = por %p74, %p75
      %p77 = scmp.ne.s32.totalorder %s66, %s67
      %p78 = scmp.eq.s32.totalorder %s32, 0
      %p79 = por %p77, %p78
      %p80 = scmp.ne.s32.totalorder %s66, %s67
      %p81 = scmp.eq.s32.totalorder %s33, 1
      %p82 = por %p80, %p81
      %p84 = scmp.ne.s32.totalorder %s67, %s83
      %p85 = scmp.eq.s32.totalorder %s33, 0
      %p86 = por %p84, %p85
      %s88 = sadd.s32 %s87, 1
      %p91 = scmp.eq.s32.totalorder %s27, 1
      %p92 = scmp.ne.s32.totalorder %s87, %s89
      %p93 = scmp.eq.s32.totalorder %s27, 0
      %p94 = por %p92, %p93
      %p95 = scmp.ne.s32.totalorder %s87, %s89
      %p96 = scmp.eq.s32.totalorder %s32, 1
      %p97 = por %p95, %p96
      %p98 = scmp.ne.s32.totalorder %s89, %s90
      %p99 = scmp.eq.s32.totalorder %s32, 0
      %p100 = por %p98, %p99
      %p101 = scmp.ne.s32.totalorder %s89, %s90
      %p102 = scmp.eq.s32.totalorder %s33, 1
      %p103 = por %p101, %p102
      %p105 = scmp.ne.s32.totalorder %s90, %s104
      %p106 = scmp.eq.s32.totalorder %s33, 0
      %p107 = por %p105, %p106
      %s109 = sadd.s32 %s108, 1
      %p112 = scmp.eq.s32.totalorder %s27, 1
      %p113 = scmp.ne.s32.totalorder %s108, %s110
      %p114 = scmp.eq.s32.totalorder %s27, 0
      %p115 = por %p113, %p114
      %p116 = scmp.ne.s32.totalorder %s108, %s110
      %p117 = scmp.eq.s32.totalorder %s32, 1
      %p118 = por %p116, %p117
      %p119 = scmp.ne.s32.totalorder %s110, %s111
      %p120 = scmp.eq.s32.totalorder %s32, 0
      %p121 = por %p119, %p120
      %p122 = scmp.ne.s32.totalorder %s110, %s111
      %p123 = scmp.eq.s32.totalorder %s33, 1
      %p124 = por %p122, %p123
      %p126 = scmp.ne.s32.totalorder %s111, %s125
      %p127 = scmp.eq.s32.totalorder %s33, 0
      %p128 = por %p126, %p127
      %s130 = sadd.s32 %s129, 1
      %p133 = scmp.eq.s32.totalorder %s27, 1
      %p134 = scmp.ne.s32.totalorder %s129, %s131
      %p135 = scmp.eq.s32.totalorder %s27, 0
      %p136 = por %p134, %p135
      %p137 = scmp.ne.s32.totalorder %s129, %s131
      %p138 = scmp.eq.s32.totalorder %s32, 1
      %p139 = por %p137, %p138
      %p140 = scmp.ne.s32.totalorder %s131, %s132
      %p141 = scmp.eq.s32.totalorder %s32, 0
      %p142 = por %p140, %p141
      %p143 = scmp.ne.s32.totalorder %s131, %s132
      %p144 = scmp.eq.s32.totalorder %s33, 1
      %p145 = por %p143, %p144
      %p147 = scmp.ne.s32.totalorder %s132, %s146
      %p148 = scmp.eq.s32.totalorder %s33, 0
      %p149 = por %p147, %p148
      %s151 = sadd.s32 %s150, 1
      %p154 = scmp.eq.s32.totalorder %s27, 1
      %p155 = scmp.ne.s32.totalorder %s150, %s152
      %p156 = scmp.eq.s32.totalorder %s27, 0
      %p157 = por %p155, %p156
      %p158 = scmp.ne.s32.totalorder %s150, %s152
      %p159 = scmp.eq.s32.totalorder %s32, 1
      %p160 = por %p158, %p159
      %p161 = scmp.ne.s32.totalorder %s152, %s153
      %p162 = scmp.eq.s32.totalorder %s32, 0
      %p163 = por %p161, %p162
      %p164 = scmp.ne.s32.totalorder %s152, %s153
      %p165 = scmp.eq.s32.totalorder %s33, 1
      %p166 = por %p164, %p165
      %p168 = scmp.ne.s32.totalorder %s153, %s167
      %p169 = scmp.eq.s32.totalorder %s33, 0
      %p170 = por %p168, %p169
      %s172 = sadd.s32 %s171, 1
      %p175 = scmp.eq.s32.totalorder %s27, 1
      %p176 = scmp.ne.s32.totalorder %s171, %s173
      %p177 = scmp.eq.s32.totalorder %s27, 0
      %p178 = por %p176, %p177
      %p179 = scmp.ne.s32.totalorder %s171, %s173
      %p180 = scmp.eq.s32.totalorder %s32, 1
      %p181 = por %p179, %p180
      %p182 = scmp.ne.s32.totalorder %s173, %s174
      %p183 = scmp.eq.s32.totalorder %s32, 0
      %p184 = por %p182, %p183
      %p185 = scmp.ne.s32.totalorder %s173, %s174
      %p186 = scmp.eq.s32.totalorder %s33, 1
      %p187 = por %p185, %p186
      %p189 = scmp.ne.s32.totalorder %s174, %s188
      %p190 = scmp.eq.s32.totalorder %s33, 0
      %p191 = por %p189, %p190
      %s192 = ssub.s32 %s27, %s34
      %p193 = scmp.eq.s32.totalorder %s192, 0
      %s195 = sadd.s32 %s194, 1
      %s196 = scalar_select %p193, %s194, %s195
      %p199 = pneg %p193
      %p200 = scmp.eq.s32.totalorder %s27, 1
      %p201 = por %p199, %p200
      %p202 = scmp.ne.s32.totalorder %s194, %s197
      %p203 = scmp.eq.s32.totalorder %s27, 0
      %p204 = por %p202, %p203
      %p205 = scmp.ne.s32.totalorder %s194, %s197
      %p206 = scmp.eq.s32.totalorder %s32, 1
      %p207 = por %p205, %p206
      %p208 = scmp.ne.s32.totalorder %s197, %s198
      %p209 = scmp.eq.s32.totalorder %s32, 0
      %p210 = por %p208, %p209
      %p211 = scmp.ne.s32.totalorder %s197, %s198
      %p212 = scmp.eq.s32.totalorder %s33, 1
      %p213 = por %p211, %p212
      %p215 = scmp.ne.s32.totalorder %s198, %s214
      %p216 = scmp.eq.s32.totalorder %s33, 0
      %p217 = por %p215, %p216
      %p218 = scmp.le.s32.totalorder 1, %s27
      %p219 = scmp.lt.s32.totalorder %s27, 3
      %p220 = pnand %p218, %p219
      %p221 = pneg %p220
      // Predicated region
      $region9: #{tpu_custom_call.1} parent=5 // pred_check
        _
      $region10: #{tpu_custom_call.1} parent=5 // pred_check_branch
        %223 = sbr.rel (%p220) target = $region12
      $region11: #{tpu_custom_call.1} parent=5 // pred_region
        %s224 = ssub.s32 %s27, 1
        // Predicated region
        $region13: #{tpu_custom_call.1} parent=11 // pred_check
          %p225 = pneg %p100
        $region14: #{tpu_custom_call.1} parent=11 // pred_check_branch
          %227 = sbr.rel (%p225) target = $region16
        $region15: #{tpu_custom_call.1} parent=11 // pred_region
          _
        $region16: #{tpu_custom_call.1} parent=11 // pred_fallthru
          _
        // Predicated region
        $region17: #{tpu_custom_call.1} parent=11 // pred_check
          %p228 = pneg %p121
        $region18: #{tpu_custom_call.1} parent=11 // pred_check_branch
          %230 = sbr.rel (%p228) target = $region20
        $region19: #{tpu_custom_call.1} parent=11 // pred_region
          %s232 = ssub.s32 2048, 2048
          %233 = vsyncadd [#allocation9], %s232
          %s234 = sshll.u32 [#allocation8], 4
          %s235 = int_to_ptr.vmem [resolvable:$true] %s234
          %240 = dma.hbm_to_vmem [thread:$0]  %s6, 2048, %s235, [#allocation9], 128, 128, 8
        $region20: #{tpu_custom_call.1} parent=11 // pred_fallthru
          _
        // Predicated region
        $region21: #{tpu_custom_call.1} parent=11 // pred_check
          %p241 = pneg %p142
        $region22: #{tpu_custom_call.1} parent=11 // pred_check_branch
          %243 = sbr.rel (%p241) target = $region24
        $region23: #{tpu_custom_call.1} parent=11 // pred_region
          _
        $region24: #{tpu_custom_call.1} parent=11 // pred_fallthru
          _
        // Predicated region
        $region25: #{tpu_custom_call.1} parent=11 // pred_check
          %p244 = pneg %p163
        $region26: #{tpu_custom_call.1} parent=11 // pred_check_branch
          %246 = sbr.rel (%p244) target = $region28
        $region27: #{tpu_custom_call.1} parent=11 // pred_region
          _
        $region28: #{tpu_custom_call.1} parent=11 // pred_fallthru
          _
        // Predicated region
        $region29: #{tpu_custom_call.1} parent=11 // pred_check
          %p247 = pneg %p184
        $region30: #{tpu_custom_call.1} parent=11 // pred_check_branch
          %249 = sbr.rel (%p247) target = $region32
        $region31: #{tpu_custom_call.1} parent=11 // pred_region
          _
        $region32: #{tpu_custom_call.1} parent=11 // pred_fallthru
          _
      $region12: #{tpu_custom_call.1} parent=5 // pred_fallthru
        _
      %p250 = scmp.lt.s32.totalorder %s27, 2
      // Predicated region
      $region33: #{tpu_custom_call.1} parent=5 // pred_check
        %p251 = pneg %p250
      $region34: #{tpu_custom_call.1} parent=5 // pred_check_branch
        %253 = sbr.rel (%p251) target = $region36
      $region35: #{tpu_custom_call.1} parent=5 // pred_region
        // Predicated region
        $region37: #{tpu_custom_call.1} parent=35 // pred_check
          %p254 = pneg %p47
        $region38: #{tpu_custom_call.1} parent=35 // pred_check_branch
          %256 = sbr.rel (%p254) target = $region40
        $region39: #{tpu_custom_call.1} parent=35 // pred_region
          %p257 = scmp.lt.s32.totalorder %s27, 1
          %s258 = scalar_select %p257, %s27, 1
          %s259 = smul.addr %s258, 8
          %s260 = scalar_lea.vmem %s3, %s259
        $region40: #{tpu_custom_call.1} parent=35 // pred_fallthru
          _
        // Predicated region
        $region41: #{tpu_custom_call.1} parent=35 // pred_check
          %p261 = pneg %p73
        $region42: #{tpu_custom_call.1} parent=35 // pred_check_branch
          %263 = sbr.rel (%p261) target = $region44
        $region43: #{tpu_custom_call.1} parent=35 // pred_region
          %p264 = scmp.lt.s32.totalorder %s27, 1
          %s265 = scalar_select %p264, %s27, 1
          %s266 = smul.addr %s265, 8
          %s267 = scalar_lea.vmem %s4, %s266
        $region44: #{tpu_custom_call.1} parent=35 // pred_fallthru
          _
      $region36: #{tpu_custom_call.1} parent=5 // pred_fallthru
        _
      %p268 = scmp.le.s32.totalorder 1, %s27
      %p269 = scmp.lt.s32.totalorder %s27, 3
      %p270 = pnand %p268, %p269
      %p271 = pneg %p270
      // Predicated region
      $region45: #{tpu_custom_call.1} parent=5 // pred_check
        _
      $region46: #{tpu_custom_call.1} parent=5 // pred_check_branch
        %273 = sbr.rel (%p270) target = $region48
      $region47: #{tpu_custom_call.1} parent=5 // pred_region
        %s274 = ssub.s32 %s27, 1
        // Predicated region
        $region49: #{tpu_custom_call.1} parent=47 // pred_check
          %p275 = pneg %p121
        $region50: #{tpu_custom_call.1} parent=47 // pred_check_branch
          %277 = sbr.rel (%p275) target = $region52
        $region51: #{tpu_custom_call.1} parent=47 // pred_region
          %278 = dma.done [#allocation9], 2048
        $region52: #{tpu_custom_call.1} parent=47 // pred_fallthru
          _
        %p279 = scmp.lt.s32.totalorder %s32, 1
        %s280 = scalar_select %p279, %s32, 1
        %s281 = smul.addr %s280, 8
        %s282 = scalar_lea.vmem %s3, %s281
        %p283 = pneg %p53
        %p284 = pneg %p50
        %p285 = scmp.lt.s32.totalorder %s32, 1
        %s286 = scalar_select %p285, %s32, 1
        %s287 = smul.addr %s286, 8
        %s288 = scalar_lea.vmem %s4, %s287
        %p289 = pneg %p79
        %p290 = pneg %p76
        %p291 = pneg %p100
        %p292 = pneg %p97
        %p293 = pneg %p121
        %p294 = pneg %p118
        %p295 = pneg %p142
        %p296 = pneg %p139
        %p297 = pneg %p163
        %p298 = pneg %p160
        %p299 = pneg %p184
        %p300 = pneg %p181
        %p301 = pneg %p210
        %p302 = pneg %p207
        %p303 = scmp.lt.s32.totalorder %s32, 1
        %s304 = scalar_select %p303, %s32, 1
        %s305 = smul.addr %s304, 8
        %s306 = scalar_lea.vmem %s10, %s305
        %p307 = scmp.lt.s32.totalorder %s32, 1
        %s308 = scalar_select %p307, %s32, 1
        %s309 = smul.addr %s308, 8
        %s310 = scalar_lea.vmem %s3, %s309
        %p311 = scmp.lt.s32.totalorder %s32, 1
        %s312 = scalar_select %p311, %s32, 1
        %s313 = smul.addr %s312, 8
        %s314 = scalar_lea.vmem %s4, %s313
        %p315 = scmp.lt.s32.totalorder %s32, 1
        %s316 = scalar_select %p315, %s32, 1
        %s317 = smul.addr %s316, 8
        %s318 = scalar_lea.vmem %s10, %s317
        %s319 = smul.u32 %s32, 8
        loop: start=0, step=1, limit=8
        $region53: #{tpu_custom_call.1} parent=47 // loop_pre_header
          _
        $region54: #{tpu_custom_call.1} parent=47 // loop_header
          %s321 = sphi 0, %s325
          %p322 = scmp.ge.s32.totalorder %s321, 8
        $region55: #{tpu_custom_call.1} parent=47 // loop_header_branch
          %324 = sbr.rel (%p322) target = $region59
        $region56: #{tpu_custom_call.1} parent=47 // loop_body
          %s326 = sadd.s32 %s319, %s321
          loop: start=0, step=1, limit=8
          $region60: #{tpu_custom_call.1} parent=56 // loop_pre_header
            _
          $region61: #{tpu_custom_call.1} parent=56 // loop_header
            %s328 = sphi 0, %s332
            %p329 = scmp.ge.s32.totalorder %s328, 8
          $region62: #{tpu_custom_call.1} parent=56 // loop_header_branch
            %331 = sbr.rel (%p329) target = $region66
          $region63: #{tpu_custom_call.1} parent=56 // loop_body
            %s333 = sshra.s32 %s328, 7
            %s334 = sand.u32 %s328, 127
            %s335 = sadd.s32 %s333, %s326
            %s336 = smul.u32 %s335, 128
            %s337 = sshra.s32 %s328, 7
            %s338 = sand.u32 %s328, 127
            %s339 = sadd.s32 %s336, %s338
            %s340 = sld [smem:[#allocation6 + %s339]]
            %s341 = smul.u32 %s326, 64
            %s342 = sadd.s32 %s340, %s341
            %s343 = smul.addr %s342, 16
            %s344 = scalar_lea.hbm %s2, %s343
            %s345 = smul.u32 %s321, 8
            %s346 = sadd.s32 %s328, %s345
            %s347 = scalar_lea.vmem [#allocation2], %s346
            // Predicated region
            $region67: #{tpu_custom_call.1} parent=63 // pred_check
              _
            $region68: #{tpu_custom_call.1} parent=63 // pred_check_branch
              %349 = sbr.rel target = $region70
            $region69: #{tpu_custom_call.1} parent=63 // pred_region
              %350 = sst [smem:[#allocation12]] [#allocation11]
              %351 = sst [smem:[#allocation13]] [#allocation10]
            $region70: #{tpu_custom_call.1} parent=63 // pred_fallthru
              _
            %353 = shalt.err (0)
            %s355 = sshll.u32 %s347, 4
            %s356 = int_to_ptr.vmem [resolvable:$true] %s355
            %358 = dma.hbm_to_vmem [thread:$0]  %s344, 16, %s356, [#allocation4]
          $region64: #{tpu_custom_call.1} parent=56 // loop_footer
            %s332 = sadd.s32 1, %s328
          $region65: #{tpu_custom_call.1} parent=56 // loop_footer_branch
            %327 = sbr.rel target = $region61
          $region66: #{tpu_custom_call.1} parent=56 // loop_exit
            _
          loop: start=0, step=1, limit=8
          $region71: #{tpu_custom_call.1} parent=56 // loop_pre_header
            _
          $region72: #{tpu_custom_call.1} parent=56 // loop_header
            %s360 = sphi 0, %s364
            %p361 = scmp.ge.s32.totalorder %s360, 8
          $region73: #{tpu_custom_call.1} parent=56 // loop_header_branch
            %363 = sbr.rel (%p361) target = $region77
          $region74: #{tpu_custom_call.1} parent=56 // loop_body
            %s365 = sshra.s32 %s360, 7
            %s366 = sand.u32 %s360, 127
            %s367 = sadd.s32 %s365, %s326
            %s368 = smul.u32 %s367, 128
            %s369 = sshra.s32 %s360, 7
            %s370 = sand.u32 %s360, 127
            %s371 = sadd.s32 %s368, %s370
            %s372 = sld [smem:[#allocation7 + %s371]]
            %s373 = smul.u32 %s326, 64
            %s374 = sadd.s32 %s372, %s373
            %s375 = smul.addr %s374, 16
            %s376 = scalar_lea.hbm %s2, %s375
            %s377 = smul.u32 %s321, 8
            %s378 = sadd.s32 %s360, %s377
            %s379 = scalar_lea.vmem [#allocation3], %s378
            // Predicated region
            $region78: #{tpu_custom_call.1} parent=74 // pred_check
              _
            $region79: #{tpu_custom_call.1} parent=74 // pred_check_branch
              %381 = sbr.rel target = $region81
            $region80: #{tpu_custom_call.1} parent=74 // pred_region
              %382 = sst [smem:[#allocation12]] [#allocation15]
              %383 = sst [smem:[#allocation13]] [#allocation14]
            $region81: #{tpu_custom_call.1} parent=74 // pred_fallthru
              _
            %385 = shalt.err (0)
            %s387 = sshll.u32 %s379, 4
            %s388 = int_to_ptr.vmem [resolvable:$true] %s387
            %390 = dma.hbm_to_vmem [thread:$0]  %s376, 16, %s388, [#allocation4]
          $region75: #{tpu_custom_call.1} parent=56 // loop_footer
            %s364 = sadd.s32 1, %s360
          $region76: #{tpu_custom_call.1} parent=56 // loop_footer_branch
            %359 = sbr.rel target = $region72
          $region77: #{tpu_custom_call.1} parent=56 // loop_exit
            _
        $region57: #{tpu_custom_call.1} parent=47 // loop_footer
          %s325 = sadd.s32 1, %s321
        $region58: #{tpu_custom_call.1} parent=47 // loop_footer_branch
          %320 = sbr.rel target = $region54
        $region59: #{tpu_custom_call.1} parent=47 // loop_exit
          _
        loop: start=0, step=1, limit=128
        $region82: #{tpu_custom_call.1} parent=47 // loop_pre_header
          _
        $region83: #{tpu_custom_call.1} parent=47 // loop_header
          %s392 = sphi 0, %s396
          %p393 = scmp.ge.s32.totalorder %s392, 128
        $region84: #{tpu_custom_call.1} parent=47 // loop_header_branch
          %395 = sbr.rel (%p393) target = $region88
        $region85: #{tpu_custom_call.1} parent=47 // loop_body
          %s397 = smul.u32 1, 1
          %s398 = sshll.u32 %s397, 4
          %399 = dma.done [#allocation4], %s398
        $region86: #{tpu_custom_call.1} parent=47 // loop_footer
          %s396 = sadd.s32 1, %s392
        $region87: #{tpu_custom_call.1} parent=47 // loop_footer_branch
          %391 = sbr.rel target = $region83
        $region88: #{tpu_custom_call.1} parent=47 // loop_exit
          _
        %v400 = vld [vmem:[#allocation2] sm:$0xff]
        %v401 = vld [vmem:[#allocation2 + $0x8] sm:$0xff]
        %v402 = vld [vmem:[#allocation2 + $0x10] sm:$0xff]
        %v403 = vld [vmem:[#allocation2 + $0x18] sm:$0xff]
        %v404 = vld [vmem:[#allocation2 + $0x20] sm:$0xff]
        %v405 = vld [vmem:[#allocation2 + $0x28] sm:$0xff]
        %v406 = vld [vmem:[#allocation2 + $0x30] sm:$0xff]
        %v407 = vld [vmem:[#allocation2 + $0x38] sm:$0xff]
        %v408 = vld [vmem:[#allocation3] sm:$0xff]
        %v409 = vld [vmem:[#allocation3 + $0x8] sm:$0xff]
        %v410 = vld [vmem:[#allocation3 + $0x10] sm:$0xff]
        %v411 = vld [vmem:[#allocation3 + $0x18] sm:$0xff]
        %v412 = vld [vmem:[#allocation3 + $0x20] sm:$0xff]
        %v413 = vld [vmem:[#allocation3 + $0x28] sm:$0xff]
        %v414 = vld [vmem:[#allocation3 + $0x30] sm:$0xff]
        %v415 = vld [vmem:[#allocation3 + $0x38] sm:$0xff]
        %v416 = vld [vmem:[%s310] sm:$0xff]
        %v417 = vld [vmem:[%s314] sm:$0xff]
        %v418 = vld [vmem:[%s5] sm:$0xff]
        %v419 = vld [vmem:[%s5 + $0x8] sm:$0xff]
        %v420 = vld [vmem:[%s5 + $0x10] sm:$0xff]
        %v421 = vld [vmem:[%s5 + $0x18] sm:$0xff]
        %v422 = vld [vmem:[%s5 + $0x20] sm:$0xff]
        %v423 = vld [vmem:[%s5 + $0x28] sm:$0xff]
        %v424 = vld [vmem:[%s5 + $0x30] sm:$0xff]
        %v425 = vld [vmem:[%s5 + $0x38] sm:$0xff]
        %v426 = vld [vmem:[%s5 + $0x40] sm:$0xff]
        %v427 = vld [vmem:[%s5 + $0x48] sm:$0xff]
        %v428 = vld [vmem:[%s5 + $0x50] sm:$0xff]
        %v429 = vld [vmem:[%s5 + $0x58] sm:$0xff]
        %v430 = vld [vmem:[%s5 + $0x60] sm:$0xff]
        %v431 = vld [vmem:[%s5 + $0x68] sm:$0xff]
        %v432 = vld [vmem:[%s5 + $0x70] sm:$0xff]
        %v433 = vld [vmem:[%s5 + $0x78] sm:$0xff]
        %v434 = vld [vmem:[#allocation8] sm:$0xff]
        %v435 = vld [vmem:[#allocation8 + $0x8] sm:$0xff]
        %v436 = vld [vmem:[#allocation8 + $0x10] sm:$0xff]
        %v437 = vld [vmem:[#allocation8 + $0x18] sm:$0xff]
        %v438 = vld [vmem:[#allocation8 + $0x20] sm:$0xff]
        %v439 = vld [vmem:[#allocation8 + $0x28] sm:$0xff]
        %v440 = vld [vmem:[#allocation8 + $0x30] sm:$0xff]
        %v441 = vld [vmem:[#allocation8 + $0x38] sm:$0xff]
        %v442 = vld [vmem:[#allocation8 + $0x40] sm:$0xff]
        %v443 = vld [vmem:[#allocation8 + $0x48] sm:$0xff]
        %v444 = vld [vmem:[#allocation8 + $0x50] sm:$0xff]
        %v445 = vld [vmem:[#allocation8 + $0x58] sm:$0xff]
        %v446 = vld [vmem:[#allocation8 + $0x60] sm:$0xff]
        %v447 = vld [vmem:[#allocation8 + $0x68] sm:$0xff]
        %v448 = vld [vmem:[#allocation8 + $0x70] sm:$0xff]
        %v449 = vld [vmem:[#allocation8 + $0x78] sm:$0xff]
        %v450 = vld [vmem:[%s7] sm:$0x1]
        %v451 = vld [vmem:[%s8] sm:$0xff]
        %v452 = vld [vmem:[%s8 + $0x8] sm:$0xff]
        %v453 = vld [vmem:[%s8 + $0x10] sm:$0xff]
        %v454 = vld [vmem:[%s8 + $0x18] sm:$0xff]
        %v455 = vld [vmem:[%s8 + $0x20] sm:$0xff]
        %v456 = vld [vmem:[%s8 + $0x28] sm:$0xff]
        %v457 = vld [vmem:[%s8 + $0x30] sm:$0xff]
        %v458 = vld [vmem:[%s8 + $0x38] sm:$0xff]
        %v459 = vld [vmem:[%s8 + $0x40] sm:$0xff]
        %v460 = vld [vmem:[%s8 + $0x48] sm:$0xff]
        %v461 = vld [vmem:[%s8 + $0x50] sm:$0xff]
        %v462 = vld [vmem:[%s8 + $0x58] sm:$0xff]
        %v463 = vld [vmem:[%s8 + $0x60] sm:$0xff]
        %v464 = vld [vmem:[%s8 + $0x68] sm:$0xff]
        %v465 = vld [vmem:[%s8 + $0x70] sm:$0xff]
        %v466 = vld [vmem:[%s8 + $0x78] sm:$0xff]
        %v467 = vld [vmem:[%s9] sm:$0x1]
        %vm468 = vcmp.gt.s32.totalorder %v416, 0
        %v469 = vsel %vm468, 1, 0
        %v470 = vcvt.s32.f32 %v469
        %vm471 = vcmp.gt.s32.totalorder %v417, 0
        %v472 = vsel %vm471, 1, 0
        %v473 = vcvt.s32.f32 %v472
        %vm474 = vcmask 64512
        %v475 = vsel %vm474, %v470, 0.0
        %476 = vadd.xlane.f32.xlu0 %v475
        %v477 = vpop.xlane.xlu0 %476
        %v478 = vadd.f32 %v477, 1.0
        %v479 = vrcp.pop %v478
        %v480 = vmul.f32 1.0, %v479
        %v481 = vsel %vm474, %v473, 0.0
        %482 = vadd.xlane.f32.xlu0 %v481
        %v483 = vpop.xlane.xlu0 %482
        %v484 = vadd.f32 %v483, 1.0
        %v485 = vrcp.pop %v484
        %v486 = vmul.f32 1.0, %v485
        %v487 = vmul.f32 %v470, %v480
        %v488 = vmul.f32 %v473, %v486
        %489 = vmatprep.subr.mxu0 0.0
        %490 = vmatpush1.xpose.msra.mxu0 %v408
        %491 = vmatprep.subr.mxu0 0.0
        %492 = vmatpush1.xpose.msra.mxu0 0.0
        %493 = vmatprep.subr.mxu0 0.0
        %494 = vmatpush1.xpose.msra.mxu0 0.0
        %495 = vmatprep.subr.mxu0 0.0
        %496 = vmatpush1.xpose.msra.mxu0 0.0
        %497 = vmatprep.subr.mxu0 0.0
        %498 = vmatpush1.xpose.msra.mxu0 0.0
        %499 = vmatprep.subr.mxu0 0.0
        %500 = vmatpush1.xpose.msra.mxu0 0.0
        %501 = vmatprep.subr.mxu0 0.0
        %502 = vmatpush1.xpose.msra.mxu0 0.0
        %503 = vmatprep.subr.mxu0 0.0
        %504 = vmatpush1.xpose.msra.mxu0 0.0
        %505 = vmatprep.subr.mxu0 0.0
        %506 = vmatpush1.xpose.msra.mxu0 0.0
        %507 = vmatprep.subr.mxu0 0.0
        %508 = vmatpush1.xpose.msra.mxu0 0.0
        %509 = vmatprep.subr.mxu0 0.0
        %510 = vmatpush1.xpose.msra.mxu0 0.0
        %511 = vmatprep.subr.mxu0 0.0
        %512 = vmatpush1.xpose.msra.mxu0 0.0
        %513 = vmatprep.subr.mxu0 0.0
        %514 = vmatpush1.xpose.msra.mxu0 0.0
        %515 = vmatprep.subr.mxu0 0.0
        %516 = vmatpush1.xpose.msra.mxu0 0.0
        %517 = vmatprep.subr.mxu0 0.0
        %518 = vmatpush1.xpose.msra.mxu0 0.0
        %519 = vmatprep.subr.mxu0 0.0
        %520 = vmatpush1.xpose.msra.mxu0 0.0
        %521 = vmatprep.subr.mxu0 0.0
        %522 = vmatpush1.xpose.msra.mxu0 0.0
        %523 = vmatprep.subr.mxu0 0.0
        %524 = vmatpush1.xpose.msra.mxu0 0.0
        %525 = vmatprep.subr.mxu0 0.0
        %526 = vmatpush1.xpose.msra.mxu0 0.0
        %527 = vmatprep.subr.mxu0 0.0
        %528 = vmatpush1.xpose.msra.mxu0 0.0
        %529 = vmatprep.subr.mxu0 0.0
        %530 = vmatpush1.xpose.msra.mxu0 0.0
        %531 = vmatprep.subr.mxu0 0.0
        %532 = vmatpush1.xpose.msra.mxu0 0.0
        %533 = vmatprep.subr.mxu0 0.0
        %534 = vmatpush1.xpose.msra.mxu0 0.0
        %535 = vmatprep.subr.mxu0 0.0
        %536 = vmatpush1.xpose.msra.mxu0 0.0
        %537 = vmatprep.subr.mxu0 0.0
        %538 = vmatpush1.xpose.msra.mxu0 0.0
        %539 = vmatprep.subr.mxu0 0.0
        %540 = vmatpush1.xpose.msra.mxu0 0.0
        %541 = vmatprep.subr.mxu0 0.0
        %542 = vmatpush1.xpose.msra.mxu0 0.0
        %543 = vmatprep.subr.mxu0 0.0
        %544 = vmatpush1.xpose.msra.mxu0 0.0
        %545 = vmatprep.subr.mxu0 0.0
        %546 = vmatpush1.xpose.msra.mxu0 0.0
        %547 = vmatprep.subr.mxu0 0.0
        %548 = vmatpush1.xpose.msra.mxu0 0.0
        %549 = vmatprep.subr.mxu0 0.0
        %550 = vmatpush1.xpose.msra.mxu0 0.0
        %551 = vmatprep.subr.mxu0 0.0
        %552 = vmatpush1.xpose.msra.mxu0 0.0
        %553 = vmatprep.mubr.f32.mxu0 0.0
        %554 = vmatmul.mubr.f32.gmra.mrb[0].mxu0 %v400
        %v555 = vpop.f32.mrb[0].mxu0
        %v556 = vadd.f32 0.0, %v555
        %v557 = vpop.f32.mrb[0].mxu0
        %558 = vdwg.mxu0
        %559 = vmatprep.subr.mxu0 0.0
        %560 = vmatpush1.xpose.msra.mxu0 %v409
        %561 = vmatprep.subr.mxu0 0.0
        %562 = vmatpush1.xpose.msra.mxu0 0.0
        %563 = vmatprep.subr.mxu0 0.0
        %564 = vmatpush1.xpose.msra.mxu0 0.0
        %565 = vmatprep.subr.mxu0 0.0
        %566 = vmatpush1.xpose.msra.mxu0 0.0
        %567 = vmatprep.subr.mxu0 0.0
        %568 = vmatpush1.xpose.msra.mxu0 0.0
        %569 = vmatprep.subr.mxu0 0.0
        %570 = vmatpush1.xpose.msra.mxu0 0.0
        %571 = vmatprep.subr.mxu0 0.0
        %572 = vmatpush1.xpose.msra.mxu0 0.0
        %573 = vmatprep.subr.mxu0 0.0
        %574 = vmatpush1.xpose.msra.mxu0 0.0
        %575 = vmatprep.subr.mxu0 0.0
        %576 = vmatpush1.xpose.msra.mxu0 0.0
        %577 = vmatprep.subr.mxu0 0.0
        %578 = vmatpush1.xpose.msra.mxu0 0.0
        %579 = vmatprep.subr.mxu0 0.0
        %580 = vmatpush1.xpose.msra.mxu0 0.0
        %581 = vmatprep.subr.mxu0 0.0
        %582 = vmatpush1.xpose.msra.mxu0 0.0
        %583 = vmatprep.subr.mxu0 0.0
        %584 = vmatpush1.xpose.msra.mxu0 0.0
        %585 = vmatprep.subr.mxu0 0.0
        %586 = vmatpush1.xpose.msra.mxu0 0.0
        %587 = vmatprep.subr.mxu0 0.0
        %588 = vmatpush1.xpose.msra.mxu0 0.0
        %589 = vmatprep.subr.mxu0 0.0
        %590 = vmatpush1.xpose.msra.mxu0 0.0
        %591 = vmatprep.subr.mxu0 0.0
        %592 = vmatpush1.xpose.msra.mxu0 0.0
        %593 = vmatprep.subr.mxu0 0.0
        %594 = vmatpush1.xpose.msra.mxu0 0.0
        %595 = vmatprep.subr.mxu0 0.0
        %596 = vmatpush1.xpose.msra.mxu0 0.0
        %597 = vmatprep.subr.mxu0 0.0
        %598 = vmatpush1.xpose.msra.mxu0 0.0
        %599 = vmatprep.subr.mxu0 0.0
        %600 = vmatpush1.xpose.msra.mxu0 0.0
        %601 = vmatprep.subr.mxu0 0.0
        %602 = vmatpush1.xpose.msra.mxu0 0.0
        %603 = vmatprep.subr.mxu0 0.0
        %604 = vmatpush1.xpose.msra.mxu0 0.0
        %605 = vmatprep.subr.mxu0 0.0
        %606 = vmatpush1.xpose.msra.mxu0 0.0
        %607 = vmatprep.subr.mxu0 0.0
        %608 = vmatpush1.xpose.msra.mxu0 0.0
        %609 = vmatprep.subr.mxu0 0.0
        %610 = vmatpush1.xpose.msra.mxu0 0.0
        %611 = vmatprep.subr.mxu0 0.0
        %612 = vmatpush1.xpose.msra.mxu0 0.0
        %613 = vmatprep.subr.mxu0 0.0
        %614 = vmatpush1.xpose.msra.mxu0 0.0
        %615 = vmatprep.subr.mxu0 0.0
        %616 = vmatpush1.xpose.msra.mxu0 0.0
        %617 = vmatprep.subr.mxu0 0.0
        %618 = vmatpush1.xpose.msra.mxu0 0.0
        %619 = vmatprep.subr.mxu0 0.0
        %620 = vmatpush1.xpose.msra.mxu0 0.0
        %621 = vmatprep.subr.mxu0 0.0
        %622 = vmatpush1.xpose.msra.mxu0 0.0
        %623 = vmatprep.mubr.f32.mxu0 0.0
        %624 = vmatmul.mubr.f32.gmra.mrb[0].mxu0 %v401
        %v625 = vpop.f32.mrb[0].mxu0
        %v626 = vadd.f32 0.0, %v625
        %v627 = vpop.f32.mrb[0].mxu0
        %628 = vdwg.mxu0
        %629 = vmatprep.subr.mxu0 0.0
        %630 = vmatpush1.xpose.msra.mxu0 %v410
        %631 = vmatprep.subr.mxu0 0.0
        %632 = vmatpush1.xpose.msra.mxu0 0.0
        %633 = vmatprep.subr.mxu0 0.0
        %634 = vmatpush1.xpose.msra.mxu0 0.0
        %635 = vmatprep.subr.mxu0 0.0
        %636 = vmatpush1.xpose.msra.mxu0 0.0
        %637 = vmatprep.subr.mxu0 0.0
        %638 = vmatpush1.xpose.msra.mxu0 0.0
        %639 = vmatprep.subr.mxu0 0.0
        %640 = vmatpush1.xpose.msra.mxu0 0.0
        %641 = vmatprep.subr.mxu0 0.0
        %642 = vmatpush1.xpose.msra.mxu0 0.0
        %643 = vmatprep.subr.mxu0 0.0
        %644 = vmatpush1.xpose.msra.mxu0 0.0
        %645 = vmatprep.subr.mxu0 0.0
        %646 = vmatpush1.xpose.msra.mxu0 0.0
        %647 = vmatprep.subr.mxu0 0.0
        %648 = vmatpush1.xpose.msra.mxu0 0.0
        %649 = vmatprep.subr.mxu0 0.0
        %650 = vmatpush1.xpose.msra.mxu0 0.0
        %651 = vmatprep.subr.mxu0 0.0
        %652 = vmatpush1.xpose.msra.mxu0 0.0
        %653 = vmatprep.subr.mxu0 0.0
        %654 = vmatpush1.xpose.msra.mxu0 0.0
        %655 = vmatprep.subr.mxu0 0.0
        %656 = vmatpush1.xpose.msra.mxu0 0.0
        %657 = vmatprep.subr.mxu0 0.0
        %658 = vmatpush1.xpose.msra.mxu0 0.0
        %659 = vmatprep.subr.mxu0 0.0
        %660 = vmatpush1.xpose.msra.mxu0 0.0
        %661 = vmatprep.subr.mxu0 0.0
        %662 = vmatpush1.xpose.msra.mxu0 0.0
        %663 = vmatprep.subr.mxu0 0.0
        %664 = vmatpush1.xpose.msra.mxu0 0.0
        %665 = vmatprep.subr.mxu0 0.0
        %666 = vmatpush1.xpose.msra.mxu0 0.0
        %667 = vmatprep.subr.mxu0 0.0
        %668 = vmatpush1.xpose.msra.mxu0 0.0
        %669 = vmatprep.subr.mxu0 0.0
        %670 = vmatpush1.xpose.msra.mxu0 0.0
        %671 = vmatprep.subr.mxu0 0.0
        %672 = vmatpush1.xpose.msra.mxu0 0.0
        %673 = vmatprep.subr.mxu0 0.0
        %674 = vmatpush1.xpose.msra.mxu0 0.0
        %675 = vmatprep.subr.mxu0 0.0
        %676 = vmatpush1.xpose.msra.mxu0 0.0
        %677 = vmatprep.subr.mxu0 0.0
        %678 = vmatpush1.xpose.msra.mxu0 0.0
        %679 = vmatprep.subr.mxu0 0.0
        %680 = vmatpush1.xpose.msra.mxu0 0.0
        %681 = vmatprep.subr.mxu0 0.0
        %682 = vmatpush1.xpose.msra.mxu0 0.0
        %683 = vmatprep.subr.mxu0 0.0
        %684 = vmatpush1.xpose.msra.mxu0 0.0
        %685 = vmatprep.subr.mxu0 0.0
        %686 = vmatpush1.xpose.msra.mxu0 0.0
        %687 = vmatprep.subr.mxu0 0.0
        %688 = vmatpush1.xpose.msra.mxu0 0.0
        %689 = vmatprep.subr.mxu0 0.0
        %690 = vmatpush1.xpose.msra.mxu0 0.0
        %691 = vmatprep.subr.mxu0 0.0
        %692 = vmatpush1.xpose.msra.mxu0 0.0
        %693 = vmatprep.mubr.f32.mxu0 0.0
        %694 = vmatmul.mubr.f32.gmra.mrb[0].mxu0 %v402
        %v695 = vpop.f32.mrb[0].mxu0
        %v696 = vadd.f32 0.0, %v695
        %v697 = vpop.f32.mrb[0].mxu0
        %698 = vdwg.mxu0
        %699 = vmatprep.subr.mxu0 0.0
        %700 = vmatpush1.xpose.msra.mxu0 %v411
        %701 = vmatprep.subr.mxu0 0.0
        %702 = vmatpush1.xpose.msra.mxu0 0.0
        %703 = vmatprep.subr.mxu0 0.0
        %704 = vmatpush1.xpose.msra.mxu0 0.0
        %705 = vmatprep.subr.mxu0 0.0
        %706 = vmatpush1.xpose.msra.mxu0 0.0
        %707 = vmatprep.subr.mxu0 0.0
        %708 = vmatpush1.xpose.msra.mxu0 0.0
        %709 = vmatprep.subr.mxu0 0.0
        %710 = vmatpush1.xpose.msra.mxu0 0.0
        %711 = vmatprep.subr.mxu0 0.0
        %712 = vmatpush1.xpose.msra.mxu0 0.0
        %713 = vmatprep.subr.mxu0 0.0
        %714 = vmatpush1.xpose.msra.mxu0 0.0
        %715 = vmatprep.subr.mxu0 0.0
        %716 = vmatpush1.xpose.msra.mxu0 0.0
        %717 = vmatprep.subr.mxu0 0.0
        %718 = vmatpush1.xpose.msra.mxu0 0.0
        %719 = vmatprep.subr.mxu0 0.0
        %720 = vmatpush1.xpose.msra.mxu0 0.0
        %721 = vmatprep.subr.mxu0 0.0
        %722 = vmatpush1.xpose.msra.mxu0 0.0
        %723 = vmatprep.subr.mxu0 0.0
        %724 = vmatpush1.xpose.msra.mxu0 0.0
        %725 = vmatprep.subr.mxu0 0.0
        %726 = vmatpush1.xpose.msra.mxu0 0.0
        %727 = vmatprep.subr.mxu0 0.0
        %728 = vmatpush1.xpose.msra.mxu0 0.0
        %729 = vmatprep.subr.mxu0 0.0
        %730 = vmatpush1.xpose.msra.mxu0 0.0
        %731 = vmatprep.subr.mxu0 0.0
        %732 = vmatpush1.xpose.msra.mxu0 0.0
        %733 = vmatprep.subr.mxu0 0.0
        %734 = vmatpush1.xpose.msra.mxu0 0.0
        %735 = vmatprep.subr.mxu0 0.0
        %736 = vmatpush1.xpose.msra.mxu0 0.0
        %737 = vmatprep.subr.mxu0 0.0
        %738 = vmatpush1.xpose.msra.mxu0 0.0
        %739 = vmatprep.subr.mxu0 0.0
        %740 = vmatpush1.xpose.msra.mxu0 0.0
        %741 = vmatprep.subr.mxu0 0.0
        %742 = vmatpush1.xpose.msra.mxu0 0.0
        %743 = vmatprep.subr.mxu0 0.0
        %744 = vmatpush1.xpose.msra.mxu0 0.0
        %745 = vmatprep.subr.mxu0 0.0
        %746 = vmatpush1.xpose.msra.mxu0 0.0
        %747 = vmatprep.subr.mxu0 0.0
        %748 = vmatpush1.xpose.msra.mxu0 0.0
        %749 = vmatprep.subr.mxu0 0.0
        %750 = vmatpush1.xpose.msra.mxu0 0.0
        %751 = vmatprep.subr.mxu0 0.0
        %752 = vmatpush1.xpose.msra.mxu0 0.0
        %753 = vmatprep.subr.mxu0 0.0
        %754 = vmatpush1.xpose.msra.mxu0 0.0
        %755 = vmatprep.subr.mxu0 0.0
        %756 = vmatpush1.xpose.msra.mxu0 0.0
        %757 = vmatprep.subr.mxu0 0.0
        %758 = vmatpush1.xpose.msra.mxu0 0.0
        %759 = vmatprep.subr.mxu0 0.0
        %760 = vmatpush1.xpose.msra.mxu0 0.0
        %761 = vmatprep.subr.mxu0 0.0
        %762 = vmatpush1.xpose.msra.mxu0 0.0
        %763 = vmatprep.mubr.f32.mxu0 0.0
        %764 = vmatmul.mubr.f32.gmra.mrb[0].mxu0 %v403
        %v765 = vpop.f32.mrb[0].mxu0
        %v766 = vadd.f32 0.0, %v765
        %v767 = vpop.f32.mrb[0].mxu0
        %768 = vdwg.mxu0
        %769 = vmatprep.subr.mxu0 0.0
        %770 = vmatpush1.xpose.msra.mxu0 %v412
        %771 = vmatprep.subr.mxu0 0.0
        %772 = vmatpush1.xpose.msra.mxu0 0.0
        %773 = vmatprep.subr.mxu0 0.0
        %774 = vmatpush1.xpose.msra.mxu0 0.0
        %775 = vmatprep.subr.mxu0 0.0
        %776 = vmatpush1.xpose.msra.mxu0 0.0
        %777 = vmatprep.subr.mxu0 0.0
        %778 = vmatpush1.xpose.msra.mxu0 0.0
        %779 = vmatprep.subr.mxu0 0.0
        %780 = vmatpush1.xpose.msra.mxu0 0.0
        %781 = vmatprep.subr.mxu0 0.0
        %782 = vmatpush1.xpose.msra.mxu0 0.0
        %783 = vmatprep.subr.mxu0 0.0
        %784 = vmatpush1.xpose.msra.mxu0 0.0
        %785 = vmatprep.subr.mxu0 0.0
        %786 = vmatpush1.xpose.msra.mxu0 0.0
        %787 = vmatprep.subr.mxu0 0.0
        %788 = vmatpush1.xpose.msra.mxu0 0.0
        %789 = vmatprep.subr.mxu0 0.0
        %790 = vmatpush1.xpose.msra.mxu0 0.0
        %791 = vmatprep.subr.mxu0 0.0
        %792 = vmatpush1.xpose.msra.mxu0 0.0
        %793 = vmatprep.subr.mxu0 0.0
        %794 = vmatpush1.xpose.msra.mxu0 0.0
        %795 = vmatprep.subr.mxu0 0.0
        %796 = vmatpush1.xpose.msra.mxu0 0.0
        %797 = vmatprep.subr.mxu0 0.0
        %798 = vmatpush1.xpose.msra.mxu0 0.0
        %799 = vmatprep.subr.mxu0 0.0
        %800 = vmatpush1.xpose.msra.mxu0 0.0
        %801 = vmatprep.subr.mxu0 0.0
        %802 = vmatpush1.xpose.msra.mxu0 0.0
        %803 = vmatprep.subr.mxu0 0.0
        %804 = vmatpush1.xpose.msra.mxu0 0.0
        %805 = vmatprep.subr.mxu0 0.0
        %806 = vmatpush1.xpose.msra.mxu0 0.0
        %807 = vmatprep.subr.mxu0 0.0
        %808 = vmatpush1.xpose.msra.mxu0 0.0
        %809 = vmatprep.subr.mxu0 0.0
        %810 = vmatpush1.xpose.msra.mxu0 0.0
        %811 = vmatprep.subr.mxu0 0.0
        %812 = vmatpush1.xpose.msra.mxu0 0.0
        %813 = vmatprep.subr.mxu0 0.0
        %814 = vmatpush1.xpose.msra.mxu0 0.0
        %815 = vmatprep.subr.mxu0 0.0
        %816 = vmatpush1.xpose.msra.mxu0 0.0
        %817 = vmatprep.subr.mxu0 0.0
        %818 = vmatpush1.xpose.msra.mxu0 0.0
        %819 = vmatprep.subr.mxu0 0.0
        %820 = vmatpush1.xpose.msra.mxu0 0.0
        %821 = vmatprep.subr.mxu0 0.0
        %822 = vmatpush1.xpose.msra.mxu0 0.0
        %823 = vmatprep.subr.mxu0 0.0
        %824 = vmatpush1.xpose.msra.mxu0 0.0
        %825 = vmatprep.subr.mxu0 0.0
        %826 = vmatpush1.xpose.msra.mxu0 0.0
        %827 = vmatprep.subr.mxu0 0.0
        %828 = vmatpush1.xpose.msra.mxu0 0.0
        %829 = vmatprep.subr.mxu0 0.0
        %830 = vmatpush1.xpose.msra.mxu0 0.0
        %831 = vmatprep.subr.mxu0 0.0
        %832 = vmatpush1.xpose.msra.mxu0 0.0
        %833 = vmatprep.mubr.f32.mxu0 0.0
        %834 = vmatmul.mubr.f32.gmra.mrb[0].mxu0 %v404
        %v835 = vpop.f32.mrb[0].mxu0
        %v836 = vadd.f32 0.0, %v835
        %v837 = vpop.f32.mrb[0].mxu0
        %838 = vdwg.mxu0
        %839 = vmatprep.subr.mxu0 0.0
        %840 = vmatpush1.xpose.msra.mxu0 %v413
        %841 = vmatprep.subr.mxu0 0.0
        %842 = vmatpush1.xpose.msra.mxu0 0.0
        %843 = vmatprep.subr.mxu0 0.0
        %844 = vmatpush1.xpose.msra.mxu0 0.0
        %845 = vmatprep.subr.mxu0 0.0
        %846 = vmatpush1.xpose.msra.mxu0 0.0
        %847 = vmatprep.subr.mxu0 0.0
        %848 = vmatpush1.xpose.msra.mxu0 0.0
        %849 = vmatprep.subr.mxu0 0.0
        %850 = vmatpush1.xpose.msra.mxu0 0.0
        %851 = vmatprep.subr.mxu0 0.0
        %852 = vmatpush1.xpose.msra.mxu0 0.0
        %853 = vmatprep.subr.mxu0 0.0
        %854 = vmatpush1.xpose.msra.mxu0 0.0
        %855 = vmatprep.subr.mxu0 0.0
        %856 = vmatpush1.xpose.msra.mxu0 0.0
        %857 = vmatprep.subr.mxu0 0.0
        %858 = vmatpush1.xpose.msra.mxu0 0.0
        %859 = vmatprep.subr.mxu0 0.0
        %860 = vmatpush1.xpose.msra.mxu0 0.0
        %861 = vmatprep.subr.mxu0 0.0
        %862 = vmatpush1.xpose.msra.mxu0 0.0
        %863 = vmatprep.subr.mxu0 0.0
        %864 = vmatpush1.xpose.msra.mxu0 0.0
        %865 = vmatprep.subr.mxu0 0.0
        %866 = vmatpush1.xpose.msra.mxu0 0.0
        %867 = vmatprep.subr.mxu0 0.0
        %868 = vmatpush1.xpose.msra.mxu0 0.0
        %869 = vmatprep.subr.mxu0 0.0
        %870 = vmatpush1.xpose.msra.mxu0 0.0
        %871 = vmatprep.subr.mxu0 0.0
        %872 = vmatpush1.xpose.msra.mxu0 0.0
        %873 = vmatprep.subr.mxu0 0.0
        %874 = vmatpush1.xpose.msra.mxu0 0.0
        %875 = vmatprep.subr.mxu0 0.0
        %876 = vmatpush1.xpose.msra.mxu0 0.0
        %877 = vmatprep.subr.mxu0 0.0
        %878 = vmatpush1.xpose.msra.mxu0 0.0
        %879 = vmatprep.subr.mxu0 0.0
        %880 = vmatpush1.xpose.msra.mxu0 0.0
        %881 = vmatprep.subr.mxu0 0.0
        %882 = vmatpush1.xpose.msra.mxu0 0.0
        %883 = vmatprep.subr.mxu0 0.0
        %884 = vmatpush1.xpose.msra.mxu0 0.0
        %885 = vmatprep.subr.mxu0 0.0
        %886 = vmatpush1.xpose.msra.mxu0 0.0
        %887 = vmatprep.subr.mxu0 0.0
        %888 = vmatpush1.xpose.msra.mxu0 0.0
        %889 = vmatprep.subr.mxu0 0.0
        %890 = vmatpush1.xpose.msra.mxu0 0.0
        %891 = vmatprep.subr.mxu0 0.0
        %892 = vmatpush1.xpose.msra.mxu0 0.0
        %893 = vmatprep.subr.mxu0 0.0
        %894 = vmatpush1.xpose.msra.mxu0 0.0
        %895 = vmatprep.subr.mxu0 0.0
        %896 = vmatpush1.xpose.msra.mxu0 0.0
        %897 = vmatprep.subr.mxu0 0.0
        %898 = vmatpush1.xpose.msra.mxu0 0.0
        %899 = vmatprep.subr.mxu0 0.0
        %900 = vmatpush1.xpose.msra.mxu0 0.0
        %901 = vmatprep.subr.mxu0 0.0
        %902 = vmatpush1.xpose.msra.mxu0 0.0
        %903 = vmatprep.mubr.f32.mxu0 0.0
        %904 = vmatmul.mubr.f32.gmra.mrb[0].mxu0 %v405
        %v905 = vpop.f32.mrb[0].mxu0
        %v906 = vadd.f32 0.0, %v905
        %v907 = vpop.f32.mrb[0].mxu0
        %908 = vdwg.mxu0
        %909 = vmatprep.subr.mxu0 0.0
        %910 = vmatpush1.xpose.msra.mxu0 %v414
        %911 = vmatprep.subr.mxu0 0.0
        %912 = vmatpush1.xpose.msra.mxu0 0.0
        %913 = vmatprep.subr.mxu0 0.0
        %914 = vmatpush1.xpose.msra.mxu0 0.0
        %915 = vmatprep.subr.mxu0 0.0
        %916 = vmatpush1.xpose.msra.mxu0 0.0
        %917 = vmatprep.subr.mxu0 0.0
        %918 = vmatpush1.xpose.msra.mxu0 0.0
        %919 = vmatprep.subr.mxu0 0.0
        %920 = vmatpush1.xpose.msra.mxu0 0.0
        %921 = vmatprep.subr.mxu0 0.0
        %922 = vmatpush1.xpose.msra.mxu0 0.0
        %923 = vmatprep.subr.mxu0 0.0
        %924 = vmatpush1.xpose.msra.mxu0 0.0
        %925 = vmatprep.subr.mxu0 0.0
        %926 = vmatpush1.xpose.msra.mxu0 0.0
        %927 = vmatprep.subr.mxu0 0.0
        %928 = vmatpush1.xpose.msra.mxu0 0.0
        %929 = vmatprep.subr.mxu0 0.0
        %930 = vmatpush1.xpose.msra.mxu0 0.0
        %931 = vmatprep.subr.mxu0 0.0
        %932 = vmatpush1.xpose.msra.mxu0 0.0
        %933 = vmatprep.subr.mxu0 0.0
        %934 = vmatpush1.xpose.msra.mxu0 0.0
        %935 = vmatprep.subr.mxu0 0.0
        %936 = vmatpush1.xpose.msra.mxu0 0.0
        %937 = vmatprep.subr.mxu0 0.0
        %938 = vmatpush1.xpose.msra.mxu0 0.0
        %939 = vmatprep.subr.mxu0 0.0
        %940 = vmatpush1.xpose.msra.mxu0 0.0
        %941 = vmatprep.subr.mxu0 0.0
        %942 = vmatpush1.xpose.msra.mxu0 0.0
        %943 = vmatprep.subr.mxu0 0.0
        %944 = vmatpush1.xpose.msra.mxu0 0.0
        %945 = vmatprep.subr.mxu0 0.0
        %946 = vmatpush1.xpose.msra.mxu0 0.0
        %947 = vmatprep.subr.mxu0 0.0
        %948 = vmatpush1.xpose.msra.mxu0 0.0
        %949 = vmatprep.subr.mxu0 0.0
        %950 = vmatpush1.xpose.msra.mxu0 0.0
        %951 = vmatprep.subr.mxu0 0.0
        %952 = vmatpush1.xpose.msra.mxu0 0.0
        %953 = vmatprep.subr.mxu0 0.0
        %954 = vmatpush1.xpose.msra.mxu0 0.0
        %955 = vmatprep.subr.mxu0 0.0
        %956 = vmatpush1.xpose.msra.mxu0 0.0
        %957 = vmatprep.subr.mxu0 0.0
        %958 = vmatpush1.xpose.msra.mxu0 0.0
        %959 = vmatprep.subr.mxu0 0.0
        %960 = vmatpush1.xpose.msra.mxu0 0.0
        %961 = vmatprep.subr.mxu0 0.0
        %962 = vmatpush1.xpose.msra.mxu0 0.0
        %963 = vmatprep.subr.mxu0 0.0
        %964 = vmatpush1.xpose.msra.mxu0 0.0
        %965 = vmatprep.subr.mxu0 0.0
        %966 = vmatpush1.xpose.msra.mxu0 0.0
        %967 = vmatprep.subr.mxu0 0.0
        %968 = vmatpush1.xpose.msra.mxu0 0.0
        %969 = vmatprep.subr.mxu0 0.0
        %970 = vmatpush1.xpose.msra.mxu0 0.0
        %971 = vmatprep.subr.mxu0 0.0
        %972 = vmatpush1.xpose.msra.mxu0 0.0
        %973 = vmatprep.mubr.f32.mxu0 0.0
        %974 = vmatmul.mubr.f32.gmra.mrb[0].mxu0 %v406
        %v975 = vpop.f32.mrb[0].mxu0
        %v976 = vadd.f32 0.0, %v975
        %v977 = vpop.f32.mrb[0].mxu0
        %978 = vdwg.mxu0
        %979 = vmatprep.subr.mxu0 0.0
        %980 = vmatpush1.xpose.msra.mxu0 %v415
        %981 = vmatprep.subr.mxu0 0.0
        %982 = vmatpush1.xpose.msra.mxu0 0.0
        %983 = vmatprep.subr.mxu0 0.0
        %984 = vmatpush1.xpose.msra.mxu0 0.0
        %985 = vmatprep.subr.mxu0 0.0
        %986 = vmatpush1.xpose.msra.mxu0 0.0
        %987 = vmatprep.subr.mxu0 0.0
        %988 = vmatpush1.xpose.msra.mxu0 0.0
        %989 = vmatprep.subr.mxu0 0.0
        %990 = vmatpush1.xpose.msra.mxu0 0.0
        %991 = vmatprep.subr.mxu0 0.0
        %992 = vmatpush1.xpose.msra.mxu0 0.0
        %993 = vmatprep.subr.mxu0 0.0
        %994 = vmatpush1.xpose.msra.mxu0 0.0
        %995 = vmatprep.subr.mxu0 0.0
        %996 = vmatpush1.xpose.msra.mxu0 0.0
        %997 = vmatprep.subr.mxu0 0.0
        %998 = vmatpush1.xpose.msra.mxu0 0.0
        %999 = vmatprep.subr.mxu0 0.0
        %1000 = vmatpush1.xpose.msra.mxu0 0.0
        %1001 = vmatprep.subr.mxu0 0.0
        %1002 = vmatpush1.xpose.msra.mxu0 0.0
        %1003 = vmatprep.subr.mxu0 0.0
        %1004 = vmatpush1.xpose.msra.mxu0 0.0
        %1005 = vmatprep.subr.mxu0 0.0
        %1006 = vmatpush1.xpose.msra.mxu0 0.0
        %1007 = vmatprep.subr.mxu0 0.0
        %1008 = vmatpush1.xpose.msra.mxu0 0.0
        %1009 = vmatprep.subr.mxu0 0.0
        %1010 = vmatpush1.xpose.msra.mxu0 0.0
        %1011 = vmatprep.subr.mxu0 0.0
        %1012 = vmatpush1.xpose.msra.mxu0 0.0
        %1013 = vmatprep.subr.mxu0 0.0
        %1014 = vmatpush1.xpose.msra.mxu0 0.0
        %1015 = vmatprep.subr.mxu0 0.0
        %1016 = vmatpush1.xpose.msra.mxu0 0.0
        %1017 = vmatprep.subr.mxu0 0.0
        %1018 = vmatpush1.xpose.msra.mxu0 0.0
        %1019 = vmatprep.subr.mxu0 0.0
        %1020 = vmatpush1.xpose.msra.mxu0 0.0
        %1021 = vmatprep.subr.mxu0 0.0
        %1022 = vmatpush1.xpose.msra.mxu0 0.0
        %1023 = vmatprep.subr.mxu0 0.0
        %1024 = vmatpush1.xpose.msra.mxu0 0.0
        %1025 = vmatprep.subr.mxu0 0.0
        %1026 = vmatpush1.xpose.msra.mxu0 0.0
        %1027 = vmatprep.subr.mxu0 0.0
        %1028 = vmatpush1.xpose.msra.mxu0 0.0
        %1029 = vmatprep.subr.mxu0 0.0
        %1030 = vmatpush1.xpose.msra.mxu0 0.0
        %1031 = vmatprep.subr.mxu0 0.0
        %1032 = vmatpush1.xpose.msra.mxu0 0.0
        %1033 = vmatprep.subr.mxu0 0.0
        %1034 = vmatpush1.xpose.msra.mxu0 0.0
        %1035 = vmatprep.subr.mxu0 0.0
        %1036 = vmatpush1.xpose.msra.mxu0 0.0
        %1037 = vmatprep.subr.mxu0 0.0
        %1038 = vmatpush1.xpose.msra.mxu0 0.0
        %1039 = vmatprep.subr.mxu0 0.0
        %1040 = vmatpush1.xpose.msra.mxu0 0.0
        %1041 = vmatprep.subr.mxu0 0.0
        %1042 = vmatpush1.xpose.msra.mxu0 0.0
        %1043 = vmatprep.mubr.f32.mxu0 0.0
        %1044 = vmatmul.mubr.f32.gmra.mrb[0].mxu0 %v407
        %v1045 = vpop.f32.mrb[0].mxu0
        %v1046 = vadd.f32 0.0, %v1045
        %v1047 = vpop.f32.mrb[0].mxu0
        %1048 = vdwg.mxu0
        %v1049 = vmul.f32 %v400, %v400
        %v1050 = vmul.f32 %v401, %v401
        %v1051 = vmul.f32 %v402, %v402
        %v1052 = vmul.f32 %v403, %v403
        %v1053 = vmul.f32 %v404, %v404
        %v1054 = vmul.f32 %v405, %v405
        %v1055 = vmul.f32 %v406, %v406
        %v1056 = vmul.f32 %v407, %v407
        %1057 = vadd.xlane.f32.xlu0 %v1049
        %v1058 = vpop.xlane.xlu0 %1057
        %1059 = vadd.xlane.f32.xlu0 %v1050
        %v1060 = vpop.xlane.xlu0 %1059
        %1061 = vadd.xlane.f32.xlu0 %v1051
        %v1062 = vpop.xlane.xlu0 %1061
        %1063 = vadd.xlane.f32.xlu0 %v1052
        %v1064 = vpop.xlane.xlu0 %1063
        %1065 = vadd.xlane.f32.xlu0 %v1053
        %v1066 = vpop.xlane.xlu0 %1065
        %1067 = vadd.xlane.f32.xlu0 %v1054
        %v1068 = vpop.xlane.xlu0 %1067
        %1069 = vadd.xlane.f32.xlu0 %v1055
        %v1070 = vpop.xlane.xlu0 %1069
        %1071 = vadd.xlane.f32.xlu0 %v1056
        %v1072 = vpop.xlane.xlu0 %1071
        %v1073 = vmul.f32 %v408, %v408
        %v1074 = vmul.f32 %v409, %v409
        %v1075 = vmul.f32 %v410, %v410
        %v1076 = vmul.f32 %v411, %v411
        %v1077 = vmul.f32 %v412, %v412
        %v1078 = vmul.f32 %v413, %v413
        %v1079 = vmul.f32 %v414, %v414
        %v1080 = vmul.f32 %v415, %v415
        %1081 = vadd.xlane.f32.xlu0 %v1073
        %v1082 = vpop.xlane.xlu0 %1081
        %1083 = vadd.xlane.f32.xlu0 %v1074
        %v1084 = vpop.xlane.xlu0 %1083
        %1085 = vadd.xlane.f32.xlu0 %v1075
        %v1086 = vpop.xlane.xlu0 %1085
        %1087 = vadd.xlane.f32.xlu0 %v1076
        %v1088 = vpop.xlane.xlu0 %1087
        %1089 = vadd.xlane.f32.xlu0 %v1077
        %v1090 = vpop.xlane.xlu0 %1089
        %1091 = vadd.xlane.f32.xlu0 %v1078
        %v1092 = vpop.xlane.xlu0 %1091
        %1093 = vadd.xlane.f32.xlu0 %v1079
        %v1094 = vpop.xlane.xlu0 %1093
        %1095 = vadd.xlane.f32.xlu0 %v1080
        %v1096 = vpop.xlane.xlu0 %1095
        %v1105 = vlaneseq
        %v1106 = vand.u32 %v1105, 127
        %v1107 = vlaneseq
        %v1108 = vshrl.u32 %v1107, 7
        %v1109 = vsub.s32 %v1106, %v1108
        %v1110 = vrot.slane %v1082, %v1109
        %v1111 = vlaneseq
        %v1112 = vshrl.u32 %v1111, 7
        %v1113 = vsub.s32 %v1106, %v1112
        %v1114 = vrot.slane %v1084, %v1113
        %v1115 = vlaneseq
        %v1116 = vshrl.u32 %v1115, 7
        %v1117 = vsub.s32 %v1106, %v1116
        %v1118 = vrot.slane %v1086, %v1117
        %v1119 = vlaneseq
        %v1120 = vshrl.u32 %v1119, 7
        %v1121 = vsub.s32 %v1106, %v1120
        %v1122 = vrot.slane %v1088, %v1121
        %v1123 = vlaneseq
        %v1124 = vshrl.u32 %v1123, 7
        %v1125 = vsub.s32 %v1106, %v1124
        %v1126 = vrot.slane %v1090, %v1125
        %v1127 = vlaneseq
        %v1128 = vshrl.u32 %v1127, 7
        %v1129 = vsub.s32 %v1106, %v1128
        %v1130 = vrot.slane %v1092, %v1129
        %v1131 = vlaneseq
        %v1132 = vshrl.u32 %v1131, 7
        %v1133 = vsub.s32 %v1106, %v1132
        %v1134 = vrot.slane %v1094, %v1133
        %v1135 = vlaneseq
        %v1136 = vshrl.u32 %v1135, 7
        %v1137 = vsub.s32 %v1106, %v1136
        %v1138 = vrot.slane %v1096, %v1137
        %vm1139 = vcmask 1041409
        %vm1140 = vcmask 1042434
        %v1141 = vsel %vm1140, %v1110, %v1110
        %vm1142 = vcmask 1043459
        %v1143 = vsel %vm1142, %v1110, %v1141
        %vm1144 = vcmask 1044484
        %v1145 = vsel %vm1144, %v1110, %v1143
        %vm1146 = vcmask 1045509
        %v1147 = vsel %vm1146, %v1110, %v1145
        %vm1148 = vcmask 1046534
        %v1149 = vsel %vm1148, %v1110, %v1147
        %vm1150 = vcmask 1047559
        %v1151 = vsel %vm1150, %v1110, %v1149
        %v1152 = vsel %vm1140, %v1114, %v1114
        %v1153 = vsel %vm1142, %v1114, %v1152
        %v1154 = vsel %vm1144, %v1114, %v1153
        %v1155 = vsel %vm1146, %v1114, %v1154
        %v1156 = vsel %vm1148, %v1114, %v1155
        %v1157 = vsel %vm1150, %v1114, %v1156
        %v1158 = vsel %vm1140, %v1118, %v1118
        %v1159 = vsel %vm1142, %v1118, %v1158
        %v1160 = vsel %vm1144, %v1118, %v1159
        %v1161 = vsel %vm1146, %v1118, %v1160
        %v1162 = vsel %vm1148, %v1118, %v1161
        %v1163 = vsel %vm1150, %v1118, %v1162
        %v1164 = vsel %vm1140, %v1122, %v1122
        %v1165 = vsel %vm1142, %v1122, %v1164
        %v1166 = vsel %vm1144, %v1122, %v1165
        %v1167 = vsel %vm1146, %v1122, %v1166
        %v1168 = vsel %vm1148, %v1122, %v1167
        %v1169 = vsel %vm1150, %v1122, %v1168
        %v1170 = vsel %vm1140, %v1126, %v1126
        %v1171 = vsel %vm1142, %v1126, %v1170
        %v1172 = vsel %vm1144, %v1126, %v1171
        %v1173 = vsel %vm1146, %v1126, %v1172
        %v1174 = vsel %vm1148, %v1126, %v1173
        %v1175 = vsel %vm1150, %v1126, %v1174
        %v1176 = vsel %vm1140, %v1130, %v1130
        %v1177 = vsel %vm1142, %v1130, %v1176
        %v1178 = vsel %vm1144, %v1130, %v1177
        %v1179 = vsel %vm1146, %v1130, %v1178
        %v1180 = vsel %vm1148, %v1130, %v1179
        %v1181 = vsel %vm1150, %v1130, %v1180
        %v1182 = vsel %vm1140, %v1134, %v1134
        %v1183 = vsel %vm1142, %v1134, %v1182
        %v1184 = vsel %vm1144, %v1134, %v1183
        %v1185 = vsel %vm1146, %v1134, %v1184
        %v1186 = vsel %vm1148, %v1134, %v1185
        %v1187 = vsel %vm1150, %v1134, %v1186
        %v1188 = vsel %vm1140, %v1138, %v1138
        %v1189 = vsel %vm1142, %v1138, %v1188
        %v1190 = vsel %vm1144, %v1138, %v1189
        %v1191 = vsel %vm1146, %v1138, %v1190
        %v1192 = vsel %vm1148, %v1138, %v1191
        %v1193 = vsel %vm1150, %v1138, %v1192
        %v1202 = vmul.f32 %v1058, %v1151
        %v1203 = vmul.f32 %v1060, %v1157
        %v1204 = vmul.f32 %v1062, %v1163
        %v1205 = vmul.f32 %v1064, %v1169
        %v1206 = vmul.f32 %v1066, %v1175
        %v1207 = vmul.f32 %v1068, %v1181
        %v1208 = vmul.f32 %v1070, %v1187
        %v1209 = vmul.f32 %v1072, %v1193
        %v1210 = vmax.f32 %v1202, 1e-16
        %v1211 = vmax.f32 %v1203, 1e-16
        %v1212 = vmax.f32 %v1204, 1e-16
        %v1213 = vmax.f32 %v1205, 1e-16
        %v1214 = vmax.f32 %v1206, 1e-16
        %v1215 = vmax.f32 %v1207, 1e-16
        %v1216 = vmax.f32 %v1208, 1e-16
        %v1217 = vmax.f32 %v1209, 1e-16
        %v1218 = vrsqrt.pop %v1210
        %v1219 = vrsqrt.pop %v1211
        %v1220 = vrsqrt.pop %v1212
        %v1221 = vrsqrt.pop %v1213
        %v1222 = vrsqrt.pop %v1214
        %v1223 = vrsqrt.pop %v1215
        %v1224 = vrsqrt.pop %v1216
        %v1225 = vrsqrt.pop %v1217
        %v1226 = vmul.f32 %v556, %v1218
        %v1227 = vmul.f32 %v626, %v1219
        %v1228 = vmul.f32 %v696, %v1220
        %v1229 = vmul.f32 %v766, %v1221
        %v1230 = vmul.f32 %v836, %v1222
        %v1231 = vmul.f32 %v906, %v1223
        %v1232 = vmul.f32 %v976, %v1224
        %v1233 = vmul.f32 %v1046, %v1225
        %v1235 = vcombine.high %v488, %v488
        %v1237 = vunpack.c.l.s4 1966171168
        %v1238 = vunpack.c.0.s8 %v1237
        %v1239 = vlaneseq
        %v1240 = vshrl.u32 %v1239, 7
        %v1241 = vsub.s32 %v1238, %v1240
        %v1242 = vrot.slane %v488, %v1241
        %v1244 = vunpack.c.l.s4 1966171168
        %v1245 = vunpack.c.0.s8 %v1244
        %v1246 = vlaneseq
        %v1247 = vshrl.u32 %v1246, 7
        %v1248 = vsub.s32 %v1245, %v1247
        %v1249 = vrot.slane %v1235, %v1248
        %v1250 = vcombine.high %v1242, %v1242
        %v1251 = vcombine.high %v1249, %v1249
        %v1253 = vunpack.c.l.s4 1966171168
        %v1254 = vunpack.c.0.s8 %v1253
        %v1255 = vlaneseq
        %v1256 = vshrl.u32 %v1255, 7
        %v1257 = vsub.s32 %v1254, %v1256
        %v1258 = vrot.slane %v1242, %v1257
        %v1260 = vunpack.c.l.s4 1966171168
        %v1261 = vunpack.c.0.s8 %v1260
        %v1262 = vlaneseq
        %v1263 = vshrl.u32 %v1262, 7
        %v1264 = vsub.s32 %v1261, %v1263
        %v1265 = vrot.slane %v1249, %v1264
        %v1267 = vunpack.c.l.s4 1966171168
        %v1268 = vunpack.c.0.s8 %v1267
        %v1269 = vlaneseq
        %v1270 = vshrl.u32 %v1269, 7
        %v1271 = vsub.s32 %v1268, %v1270
        %v1272 = vrot.slane %v1250, %v1271
        %v1274 = vunpack.c.l.s4 1966171168
        %v1275 = vunpack.c.0.s8 %v1274
        %v1276 = vlaneseq
        %v1277 = vshrl.u32 %v1276, 7
        %v1278 = vsub.s32 %v1275, %v1277
        %v1279 = vrot.slane %v1251, %v1278
        %v1280 = vcombine.high %v1258, %v1258
        %v1281 = vcombine.high %v1265, %v1265
        %v1282 = vcombine.high %v1272, %v1272
        %v1283 = vcombine.high %v1279, %v1279
        %v1284 = vlaneseq
        %v1285 = vshrl.u32 %v1284, 7
        %v1286 = vsub.s32 0, %v1285
        %v1287 = vrot.slane %v1258, %v1286
        %v1288 = vlaneseq
        %v1289 = vshrl.u32 %v1288, 7
        %v1290 = vsub.s32 0, %v1289
        %v1291 = vrot.slane %v1272, %v1290
        %v1292 = vlaneseq
        %v1293 = vshrl.u32 %v1292, 7
        %v1294 = vsub.s32 0, %v1293
        %v1295 = vrot.slane %v1280, %v1294
        %v1296 = vlaneseq
        %v1297 = vshrl.u32 %v1296, 7
        %v1298 = vsub.s32 0, %v1297
        %v1299 = vrot.slane %v1282, %v1298
        %v1300 = vlaneseq
        %v1301 = vshrl.u32 %v1300, 7
        %v1302 = vsub.s32 0, %v1301
        %v1303 = vrot.slane %v1265, %v1302
        %v1304 = vlaneseq
        %v1305 = vshrl.u32 %v1304, 7
        %v1306 = vsub.s32 0, %v1305
        %v1307 = vrot.slane %v1279, %v1306
        %v1308 = vlaneseq
        %v1309 = vshrl.u32 %v1308, 7
        %v1310 = vsub.s32 0, %v1309
        %v1311 = vrot.slane %v1281, %v1310
        %v1312 = vlaneseq
        %v1313 = vshrl.u32 %v1312, 7
        %v1314 = vsub.s32 0, %v1313
        %v1315 = vrot.slane %v1283, %v1314
        %v1324 = vmul.f32 %v1226, %v1287
        %v1325 = vmul.f32 %v1227, %v1291
        %v1326 = vmul.f32 %v1228, %v1295
        %v1327 = vmul.f32 %v1229, %v1299
        %v1328 = vmul.f32 %v1230, %v1303
        %v1329 = vmul.f32 %v1231, %v1307
        %v1330 = vmul.f32 %v1232, %v1311
        %v1331 = vmul.f32 %v1233, %v1315
        %v1333 = vsel %vm474, %v1324, 0
        %1335 = vmatprep.subr.mxu0 0.0
        %1336 = vmatpush1.msra.mxu0 %v408
        %1337 = vmatprep.subr.mxu0 0.0
        %1338 = vmatpush1.msra.mxu0 0.0
        %1339 = vmatprep.subr.mxu0 0.0
        %1340 = vmatpush1.msra.mxu0 0.0
        %1341 = vmatprep.subr.mxu0 0.0
        %1342 = vmatpush1.msra.mxu0 0.0
        %1343 = vmatprep.subr.mxu0 0.0
        %1344 = vmatpush1.msra.mxu0 0.0
        %1345 = vmatprep.subr.mxu0 0.0
        %1346 = vmatpush1.msra.mxu0 0.0
        %1347 = vmatprep.subr.mxu0 0.0
        %1348 = vmatpush1.msra.mxu0 0.0
        %1349 = vmatprep.subr.mxu0 0.0
        %1350 = vmatpush1.msra.mxu0 0.0
        %1351 = vmatprep.subr.mxu0 0.0
        %1352 = vmatpush1.msra.mxu0 0.0
        %1353 = vmatprep.subr.mxu0 0.0
        %1354 = vmatpush1.msra.mxu0 0.0
        %1355 = vmatprep.subr.mxu0 0.0
        %1356 = vmatpush1.msra.mxu0 0.0
        %1357 = vmatprep.subr.mxu0 0.0
        %1358 = vmatpush1.msra.mxu0 0.0
        %1359 = vmatprep.subr.mxu0 0.0
        %1360 = vmatpush1.msra.mxu0 0.0
        %1361 = vmatprep.subr.mxu0 0.0
        %1362 = vmatpush1.msra.mxu0 0.0
        %1363 = vmatprep.subr.mxu0 0.0
        %1364 = vmatpush1.msra.mxu0 0.0
        %1365 = vmatprep.subr.mxu0 0.0
        %1366 = vmatpush1.msra.mxu0 0.0
        %1367 = vmatprep.subr.mxu0 0.0
        %1368 = vmatpush1.msra.mxu0 0.0
        %1369 = vmatprep.subr.mxu0 0.0
        %1370 = vmatpush1.msra.mxu0 0.0
        %1371 = vmatprep.subr.mxu0 0.0
        %1372 = vmatpush1.msra.mxu0 0.0
        %1373 = vmatprep.subr.mxu0 0.0
        %1374 = vmatpush1.msra.mxu0 0.0
        %1375 = vmatprep.subr.mxu0 0.0
        %1376 = vmatpush1.msra.mxu0 0.0
        %1377 = vmatprep.subr.mxu0 0.0
        %1378 = vmatpush1.msra.mxu0 0.0
        %1379 = vmatprep.subr.mxu0 0.0
        %1380 = vmatpush1.msra.mxu0 0.0
        %1381 = vmatprep.subr.mxu0 0.0
        %1382 = vmatpush1.msra.mxu0 0.0
        %1383 = vmatprep.subr.mxu0 0.0
        %1384 = vmatpush1.msra.mxu0 0.0
        %1385 = vmatprep.subr.mxu0 0.0
        %1386 = vmatpush1.msra.mxu0 0.0
        %1387 = vmatprep.subr.mxu0 0.0
        %1388 = vmatpush1.msra.mxu0 0.0
        %1389 = vmatprep.subr.mxu0 0.0
        %1390 = vmatpush1.msra.mxu0 0.0
        %1391 = vmatprep.subr.mxu0 0.0
        %1392 = vmatpush1.msra.mxu0 0.0
        %1393 = vmatprep.subr.mxu0 0.0
        %1394 = vmatpush1.msra.mxu0 0.0
        %1395 = vmatprep.subr.mxu0 0.0
        %1396 = vmatpush1.msra.mxu0 0.0
        %1397 = vmatprep.subr.mxu0 0.0
        %1398 = vmatpush1.msra.mxu0 0.0
        %1399 = vmatprep.mubr.f32.mxu0 0.0
        %1400 = vmatmul.mubr.f32.gmra.mrb[0].mxu0 %v1333
        %v1401 = vpop.f32.mrb[0].mxu0
        %v1402 = vadd.f32 0.0, %v1401
        %v1403 = vpop.f32.mrb[0].mxu0
        %1404 = vdwg.mxu0
        %v1406 = vsel %vm474, %v1325, 0
        %1408 = vmatprep.subr.mxu0 0.0
        %1409 = vmatpush1.msra.mxu0 %v409
        %1410 = vmatprep.subr.mxu0 0.0
        %1411 = vmatpush1.msra.mxu0 0.0
        %1412 = vmatprep.subr.mxu0 0.0
        %1413 = vmatpush1.msra.mxu0 0.0
        %1414 = vmatprep.subr.mxu0 0.0
        %1415 = vmatpush1.msra.mxu0 0.0
        %1416 = vmatprep.subr.mxu0 0.0
        %1417 = vmatpush1.msra.mxu0 0.0
        %1418 = vmatprep.subr.mxu0 0.0
        %1419 = vmatpush1.msra.mxu0 0.0
        %1420 = vmatprep.subr.mxu0 0.0
        %1421 = vmatpush1.msra.mxu0 0.0
        %1422 = vmatprep.subr.mxu0 0.0
        %1423 = vmatpush1.msra.mxu0 0.0
        %1424 = vmatprep.subr.mxu0 0.0
        %1425 = vmatpush1.msra.mxu0 0.0
        %1426 = vmatprep.subr.mxu0 0.0
        %1427 = vmatpush1.msra.mxu0 0.0
        %1428 = vmatprep.subr.mxu0 0.0
        %1429 = vmatpush1.msra.mxu0 0.0
        %1430 = vmatprep.subr.mxu0 0.0
        %1431 = vmatpush1.msra.mxu0 0.0
        %1432 = vmatprep.subr.mxu0 0.0
        %1433 = vmatpush1.msra.mxu0 0.0
        %1434 = vmatprep.subr.mxu0 0.0
        %1435 = vmatpush1.msra.mxu0 0.0
        %1436 = vmatprep.subr.mxu0 0.0
        %1437 = vmatpush1.msra.mxu0 0.0
        %1438 = vmatprep.subr.mxu0 0.0
        %1439 = vmatpush1.msra.mxu0 0.0
        %1440 = vmatprep.subr.mxu0 0.0
        %1441 = vmatpush1.msra.mxu0 0.0
        %1442 = vmatprep.subr.mxu0 0.0
        %1443 = vmatpush1.msra.mxu0 0.0
        %1444 = vmatprep.subr.mxu0 0.0
        %1445 = vmatpush1.msra.mxu0 0.0
        %1446 = vmatprep.subr.mxu0 0.0
        %1447 = vmatpush1.msra.mxu0 0.0
        %1448 = vmatprep.subr.mxu0 0.0
        %1449 = vmatpush1.msra.mxu0 0.0
        %1450 = vmatprep.subr.mxu0 0.0
        %1451 = vmatpush1.msra.mxu0 0.0
        %1452 = vmatprep.subr.mxu0 0.0
        %1453 = vmatpush1.msra.mxu0 0.0
        %1454 = vmatprep.subr.mxu0 0.0
        %1455 = vmatpush1.msra.mxu0 0.0
        %1456 = vmatprep.subr.mxu0 0.0
        %1457 = vmatpush1.msra.mxu0 0.0
        %1458 = vmatprep.subr.mxu0 0.0
        %1459 = vmatpush1.msra.mxu0 0.0
        %1460 = vmatprep.subr.mxu0 0.0
        %1461 = vmatpush1.msra.mxu0 0.0
        %1462 = vmatprep.subr.mxu0 0.0
        %1463 = vmatpush1.msra.mxu0 0.0
        %1464 = vmatprep.subr.mxu0 0.0
        %1465 = vmatpush1.msra.mxu0 0.0
        %1466 = vmatprep.subr.mxu0 0.0
        %1467 = vmatpush1.msra.mxu0 0.0
        %1468 = vmatprep.subr.mxu0 0.0
        %1469 = vmatpush1.msra.mxu0 0.0
        %1470 = vmatprep.subr.mxu0 0.0
        %1471 = vmatpush1.msra.mxu0 0.0
        %1472 = vmatprep.mubr.f32.mxu0 0.0
        %1473 = vmatmul.mubr.f32.gmra.mrb[0].mxu0 %v1406
        %v1474 = vpop.f32.mrb[0].mxu0
        %v1475 = vadd.f32 0.0, %v1474
        %v1476 = vpop.f32.mrb[0].mxu0
        %1477 = vdwg.mxu0
        %v1479 = vsel %vm474, %v1326, 0
        %1481 = vmatprep.subr.mxu0 0.0
        %1482 = vmatpush1.msra.mxu0 %v410
        %1483 = vmatprep.subr.mxu0 0.0
        %1484 = vmatpush1.msra.mxu0 0.0
        %1485 = vmatprep.subr.mxu0 0.0
        %1486 = vmatpush1.msra.mxu0 0.0
        %1487 = vmatprep.subr.mxu0 0.0
        %1488 = vmatpush1.msra.mxu0 0.0
        %1489 = vmatprep.subr.mxu0 0.0
        %1490 = vmatpush1.msra.mxu0 0.0
        %1491 = vmatprep.subr.mxu0 0.0
        %1492 = vmatpush1.msra.mxu0 0.0
        %1493 = vmatprep.subr.mxu0 0.0
        %1494 = vmatpush1.msra.mxu0 0.0
        %1495 = vmatprep.subr.mxu0 0.0
        %1496 = vmatpush1.msra.mxu0 0.0
        %1497 = vmatprep.subr.mxu0 0.0
        %1498 = vmatpush1.msra.mxu0 0.0
        %1499 = vmatprep.subr.mxu0 0.0
        %1500 = vmatpush1.msra.mxu0 0.0
        %1501 = vmatprep.subr.mxu0 0.0
        %1502 = vmatpush1.msra.mxu0 0.0
        %1503 = vmatprep.subr.mxu0 0.0
        %1504 = vmatpush1.msra.mxu0 0.0
        %1505 = vmatprep.subr.mxu0 0.0
        %1506 = vmatpush1.msra.mxu0 0.0
        %1507 = vmatprep.subr.mxu0 0.0
        %1508 = vmatpush1.msra.mxu0 0.0
        %1509 = vmatprep.subr.mxu0 0.0
        %1510 = vmatpush1.msra.mxu0 0.0
        %1511 = vmatprep.subr.mxu0 0.0
        %1512 = vmatpush1.msra.mxu0 0.0
        %1513 = vmatprep.subr.mxu0 0.0
        %1514 = vmatpush1.msra.mxu0 0.0
        %1515 = vmatprep.subr.mxu0 0.0
        %1516 = vmatpush1.msra.mxu0 0.0
        %1517 = vmatprep.subr.mxu0 0.0
        %1518 = vmatpush1.msra.mxu0 0.0
        %1519 = vmatprep.subr.mxu0 0.0
        %1520 = vmatpush1.msra.mxu0 0.0
        %1521 = vmatprep.subr.mxu0 0.0
        %1522 = vmatpush1.msra.mxu0 0.0
        %1523 = vmatprep.subr.mxu0 0.0
        %1524 = vmatpush1.msra.mxu0 0.0
        %1525 = vmatprep.subr.mxu0 0.0
        %1526 = vmatpush1.msra.mxu0 0.0
        %1527 = vmatprep.subr.mxu0 0.0
        %1528 = vmatpush1.msra.mxu0 0.0
        %1529 = vmatprep.subr.mxu0 0.0
        %1530 = vmatpush1.msra.mxu0 0.0
        %1531 = vmatprep.subr.mxu0 0.0
        %1532 = vmatpush1.msra.mxu0 0.0
        %1533 = vmatprep.subr.mxu0 0.0
        %1534 = vmatpush1.msra.mxu0 0.0
        %1535 = vmatprep.subr.mxu0 0.0
        %1536 = vmatpush1.msra.mxu0 0.0
        %1537 = vmatprep.subr.mxu0 0.0
        %1538 = vmatpush1.msra.mxu0 0.0
        %1539 = vmatprep.subr.mxu0 0.0
        %1540 = vmatpush1.msra.mxu0 0.0
        %1541 = vmatprep.subr.mxu0 0.0
        %1542 = vmatpush1.msra.mxu0 0.0
        %1543 = vmatprep.subr.mxu0 0.0
        %1544 = vmatpush1.msra.mxu0 0.0
        %1545 = vmatprep.mubr.f32.mxu0 0.0
        %1546 = vmatmul.mubr.f32.gmra.mrb[0].mxu0 %v1479
        %v1547 = vpop.f32.mrb[0].mxu0
        %v1548 = vadd.f32 0.0, %v1547
        %v1549 = vpop.f32.mrb[0].mxu0
        %1550 = vdwg.mxu0
        %v1552 = vsel %vm474, %v1327, 0
        %1554 = vmatprep.subr.mxu0 0.0
        %1555 = vmatpush1.msra.mxu0 %v411
        %1556 = vmatprep.subr.mxu0 0.0
        %1557 = vmatpush1.msra.mxu0 0.0
        %1558 = vmatprep.subr.mxu0 0.0
        %1559 = vmatpush1.msra.mxu0 0.0
        %1560 = vmatprep.subr.mxu0 0.0
        %1561 = vmatpush1.msra.mxu0 0.0
        %1562 = vmatprep.subr.mxu0 0.0
        %1563 = vmatpush1.msra.mxu0 0.0
        %1564 = vmatprep.subr.mxu0 0.0
        %1565 = vmatpush1.msra.mxu0 0.0
        %1566 = vmatprep.subr.mxu0 0.0
        %1567 = vmatpush1.msra.mxu0 0.0
        %1568 = vmatprep.subr.mxu0 0.0
        %1569 = vmatpush1.msra.mxu0 0.0
        %1570 = vmatprep.subr.mxu0 0.0
        %1571 = vmatpush1.msra.mxu0 0.0
        %1572 = vmatprep.subr.mxu0 0.0
        %1573 = vmatpush1.msra.mxu0 0.0
        %1574 = vmatprep.subr.mxu0 0.0
        %1575 = vmatpush1.msra.mxu0 0.0
        %1576 = vmatprep.subr.mxu0 0.0
        %1577 = vmatpush1.msra.mxu0 0.0
        %1578 = vmatprep.subr.mxu0 0.0
        %1579 = vmatpush1.msra.mxu0 0.0
        %1580 = vmatprep.subr.mxu0 0.0
        %1581 = vmatpush1.msra.mxu0 0.0
        %1582 = vmatprep.subr.mxu0 0.0
        %1583 = vmatpush1.msra.mxu0 0.0
        %1584 = vmatprep.subr.mxu0 0.0
        %1585 = vmatpush1.msra.mxu0 0.0
        %1586 = vmatprep.subr.mxu0 0.0
        %1587 = vmatpush1.msra.mxu0 0.0
        %1588 = vmatprep.subr.mxu0 0.0
        %1589 = vmatpush1.msra.mxu0 0.0
        %1590 = vmatprep.subr.mxu0 0.0
        %1591 = vmatpush1.msra.mxu0 0.0
        %1592 = vmatprep.subr.mxu0 0.0
        %1593 = vmatpush1.msra.mxu0 0.0
        %1594 = vmatprep.subr.mxu0 0.0
        %1595 = vmatpush1.msra.mxu0 0.0
        %1596 = vmatprep.subr.mxu0 0.0
        %1597 = vmatpush1.msra.mxu0 0.0
        %1598 = vmatprep.subr.mxu0 0.0
        %1599 = vmatpush1.msra.mxu0 0.0
        %1600 = vmatprep.subr.mxu0 0.0
        %1601 = vmatpush1.msra.mxu0 0.0
        %1602 = vmatprep.subr.mxu0 0.0
        %1603 = vmatpush1.msra.mxu0 0.0
        %1604 = vmatprep.subr.mxu0 0.0
        %1605 = vmatpush1.msra.mxu0 0.0
        %1606 = vmatprep.subr.mxu0 0.0
        %1607 = vmatpush1.msra.mxu0 0.0
        %1608 = vmatprep.subr.mxu0 0.0
        %1609 = vmatpush1.msra.mxu0 0.0
        %1610 = vmatprep.subr.mxu0 0.0
        %1611 = vmatpush1.msra.mxu0 0.0
        %1612 = vmatprep.subr.mxu0 0.0
        %1613 = vmatpush1.msra.mxu0 0.0
        %1614 = vmatprep.subr.mxu0 0.0
        %1615 = vmatpush1.msra.mxu0 0.0
        %1616 = vmatprep.subr.mxu0 0.0
        %1617 = vmatpush1.msra.mxu0 0.0
        %1618 = vmatprep.mubr.f32.mxu0 0.0
        %1619 = vmatmul.mubr.f32.gmra.mrb[0].mxu0 %v1552
        %v1620 = vpop.f32.mrb[0].mxu0
        %v1621 = vadd.f32 0.0, %v1620
        %v1622 = vpop.f32.mrb[0].mxu0
        %1623 = vdwg.mxu0
        %v1625 = vsel %vm474, %v1328, 0
        %1627 = vmatprep.subr.mxu0 0.0
        %1628 = vmatpush1.msra.mxu0 %v412
        %1629 = vmatprep.subr.mxu0 0.0
        %1630 = vmatpush1.msra.mxu0 0.0
        %1631 = vmatprep.subr.mxu0 0.0
        %1632 = vmatpush1.msra.mxu0 0.0
        %1633 = vmatprep.subr.mxu0 0.0
        %1634 = vmatpush1.msra.mxu0 0.0
        %1635 = vmatprep.subr.mxu0 0.0
        %1636 = vmatpush1.msra.mxu0 0.0
        %1637 = vmatprep.subr.mxu0 0.0
        %1638 = vmatpush1.msra.mxu0 0.0
        %1639 = vmatprep.subr.mxu0 0.0
        %1640 = vmatpush1.msra.mxu0 0.0
        %1641 = vmatprep.subr.mxu0 0.0
        %1642 = vmatpush1.msra.mxu0 0.0
        %1643 = vmatprep.subr.mxu0 0.0
        %1644 = vmatpush1.msra.mxu0 0.0
        %1645 = vmatprep.subr.mxu0 0.0
        %1646 = vmatpush1.msra.mxu0 0.0
        %1647 = vmatprep.subr.mxu0 0.0
        %1648 = vmatpush1.msra.mxu0 0.0
        %1649 = vmatprep.subr.mxu0 0.0
        %1650 = vmatpush1.msra.mxu0 0.0
        %1651 = vmatprep.subr.mxu0 0.0
        %1652 = vmatpush1.msra.mxu0 0.0
        %1653 = vmatprep.subr.mxu0 0.0
        %1654 = vmatpush1.msra.mxu0 0.0
        %1655 = vmatprep.subr.mxu0 0.0
        %1656 = vmatpush1.msra.mxu0 0.0
        %1657 = vmatprep.subr.mxu0 0.0
        %1658 = vmatpush1.msra.mxu0 0.0
        %1659 = vmatprep.subr.mxu0 0.0
        %1660 = vmatpush1.msra.mxu0 0.0
        %1661 = vmatprep.subr.mxu0 0.0
        %1662 = vmatpush1.msra.mxu0 0.0
        %1663 = vmatprep.subr.mxu0 0.0
        %1664 = vmatpush1.msra.mxu0 0.0
        %1665 = vmatprep.subr.mxu0 0.0
        %1666 = vmatpush1.msra.mxu0 0.0
        %1667 = vmatprep.subr.mxu0 0.0
        %1668 = vmatpush1.msra.mxu0 0.0
        %1669 = vmatprep.subr.mxu0 0.0
        %1670 = vmatpush1.msra.mxu0 0.0
        %1671 = vmatprep.subr.mxu0 0.0
        %1672 = vmatpush1.msra.mxu0 0.0
        %1673 = vmatprep.subr.mxu0 0.0
        %1674 = vmatpush1.msra.mxu0 0.0
        %1675 = vmatprep.subr.mxu0 0.0
        %1676 = vmatpush1.msra.mxu0 0.0
        %1677 = vmatprep.subr.mxu0 0.0
        %1678 = vmatpush1.msra.mxu0 0.0
        %1679 = vmatprep.subr.mxu0 0.0
        %1680 = vmatpush1.msra.mxu0 0.0
        %1681 = vmatprep.subr.mxu0 0.0
        %1682 = vmatpush1.msra.mxu0 0.0
        %1683 = vmatprep.subr.mxu0 0.0
        %1684 = vmatpush1.msra.mxu0 0.0
        %1685 = vmatprep.subr.mxu0 0.0
        %1686 = vmatpush1.msra.mxu0 0.0
        %1687 = vmatprep.subr.mxu0 0.0
        %1688 = vmatpush1.msra.mxu0 0.0
        %1689 = vmatprep.subr.mxu0 0.0
        %1690 = vmatpush1.msra.mxu0 0.0
        %1691 = vmatprep.mubr.f32.mxu0 0.0
        %1692 = vmatmul.mubr.f32.gmra.mrb[0].mxu0 %v1625
        %v1693 = vpop.f32.mrb[0].mxu0
        %v1694 = vadd.f32 0.0, %v1693
        %v1695 = vpop.f32.mrb[0].mxu0
        %1696 = vdwg.mxu0
        %v1698 = vsel %vm474, %v1329, 0
        %1700 = vmatprep.subr.mxu0 0.0
        %1701 = vmatpush1.msra.mxu0 %v413
        %1702 = vmatprep.subr.mxu0 0.0
        %1703 = vmatpush1.msra.mxu0 0.0
        %1704 = vmatprep.subr.mxu0 0.0
        %1705 = vmatpush1.msra.mxu0 0.0
        %1706 = vmatprep.subr.mxu0 0.0
        %1707 = vmatpush1.msra.mxu0 0.0
        %1708 = vmatprep.subr.mxu0 0.0
        %1709 = vmatpush1.msra.mxu0 0.0
        %1710 = vmatprep.subr.mxu0 0.0
        %1711 = vmatpush1.msra.mxu0 0.0
        %1712 = vmatprep.subr.mxu0 0.0
        %1713 = vmatpush1.msra.mxu0 0.0
        %1714 = vmatprep.subr.mxu0 0.0
        %1715 = vmatpush1.msra.mxu0 0.0
        %1716 = vmatprep.subr.mxu0 0.0
        %1717 = vmatpush1.msra.mxu0 0.0
        %1718 = vmatprep.subr.mxu0 0.0
        %1719 = vmatpush1.msra.mxu0 0.0
        %1720 = vmatprep.subr.mxu0 0.0
        %1721 = vmatpush1.msra.mxu0 0.0
        %1722 = vmatprep.subr.mxu0 0.0
        %1723 = vmatpush1.msra.mxu0 0.0
        %1724 = vmatprep.subr.mxu0 0.0
        %1725 = vmatpush1.msra.mxu0 0.0
        %1726 = vmatprep.subr.mxu0 0.0
        %1727 = vmatpush1.msra.mxu0 0.0
        %1728 = vmatprep.subr.mxu0 0.0
        %1729 = vmatpush1.msra.mxu0 0.0
        %1730 = vmatprep.subr.mxu0 0.0
        %1731 = vmatpush1.msra.mxu0 0.0
        %1732 = vmatprep.subr.mxu0 0.0
        %1733 = vmatpush1.msra.mxu0 0.0
        %1734 = vmatprep.subr.mxu0 0.0
        %1735 = vmatpush1.msra.mxu0 0.0
        %1736 = vmatprep.subr.mxu0 0.0
        %1737 = vmatpush1.msra.mxu0 0.0
        %1738 = vmatprep.subr.mxu0 0.0
        %1739 = vmatpush1.msra.mxu0 0.0
        %1740 = vmatprep.subr.mxu0 0.0
        %1741 = vmatpush1.msra.mxu0 0.0
        %1742 = vmatprep.subr.mxu0 0.0
        %1743 = vmatpush1.msra.mxu0 0.0
        %1744 = vmatprep.subr.mxu0 0.0
        %1745 = vmatpush1.msra.mxu0 0.0
        %1746 = vmatprep.subr.mxu0 0.0
        %1747 = vmatpush1.msra.mxu0 0.0
        %1748 = vmatprep.subr.mxu0 0.0
        %1749 = vmatpush1.msra.mxu0 0.0
        %1750 = vmatprep.subr.mxu0 0.0
        %1751 = vmatpush1.msra.mxu0 0.0
        %1752 = vmatprep.subr.mxu0 0.0
        %1753 = vmatpush1.msra.mxu0 0.0
        %1754 = vmatprep.subr.mxu0 0.0
        %1755 = vmatpush1.msra.mxu0 0.0
        %1756 = vmatprep.subr.mxu0 0.0
        %1757 = vmatpush1.msra.mxu0 0.0
        %1758 = vmatprep.subr.mxu0 0.0
        %1759 = vmatpush1.msra.mxu0 0.0
        %1760 = vmatprep.subr.mxu0 0.0
        %1761 = vmatpush1.msra.mxu0 0.0
        %1762 = vmatprep.subr.mxu0 0.0
        %1763 = vmatpush1.msra.mxu0 0.0
        %1764 = vmatprep.mubr.f32.mxu0 0.0
        %1765 = vmatmul.mubr.f32.gmra.mrb[0].mxu0 %v1698
        %v1766 = vpop.f32.mrb[0].mxu0
        %v1767 = vadd.f32 0.0, %v1766
        %v1768 = vpop.f32.mrb[0].mxu0
        %1769 = vdwg.mxu0
        %v1771 = vsel %vm474, %v1330, 0
        %1773 = vmatprep.subr.mxu0 0.0
        %1774 = vmatpush1.msra.mxu0 %v414
        %1775 = vmatprep.subr.mxu0 0.0
        %1776 = vmatpush1.msra.mxu0 0.0
        %1777 = vmatprep.subr.mxu0 0.0
        %1778 = vmatpush1.msra.mxu0 0.0
        %1779 = vmatprep.subr.mxu0 0.0
        %1780 = vmatpush1.msra.mxu0 0.0
        %1781 = vmatprep.subr.mxu0 0.0
        %1782 = vmatpush1.msra.mxu0 0.0
        %1783 = vmatprep.subr.mxu0 0.0
        %1784 = vmatpush1.msra.mxu0 0.0
        %1785 = vmatprep.subr.mxu0 0.0
        %1786 = vmatpush1.msra.mxu0 0.0
        %1787 = vmatprep.subr.mxu0 0.0
        %1788 = vmatpush1.msra.mxu0 0.0
        %1789 = vmatprep.subr.mxu0 0.0
        %1790 = vmatpush1.msra.mxu0 0.0
        %1791 = vmatprep.subr.mxu0 0.0
        %1792 = vmatpush1.msra.mxu0 0.0
        %1793 = vmatprep.subr.mxu0 0.0
        %1794 = vmatpush1.msra.mxu0 0.0
        %1795 = vmatprep.subr.mxu0 0.0
        %1796 = vmatpush1.msra.mxu0 0.0
        %1797 = vmatprep.subr.mxu0 0.0
        %1798 = vmatpush1.msra.mxu0 0.0
        %1799 = vmatprep.subr.mxu0 0.0
        %1800 = vmatpush1.msra.mxu0 0.0
        %1801 = vmatprep.subr.mxu0 0.0
        %1802 = vmatpush1.msra.mxu0 0.0
        %1803 = vmatprep.subr.mxu0 0.0
        %1804 = vmatpush1.msra.mxu0 0.0
        %1805 = vmatprep.subr.mxu0 0.0
        %1806 = vmatpush1.msra.mxu0 0.0
        %1807 = vmatprep.subr.mxu0 0.0
        %1808 = vmatpush1.msra.mxu0 0.0
        %1809 = vmatprep.subr.mxu0 0.0
        %1810 = vmatpush1.msra.mxu0 0.0
        %1811 = vmatprep.subr.mxu0 0.0
        %1812 = vmatpush1.msra.mxu0 0.0
        %1813 = vmatprep.subr.mxu0 0.0
        %1814 = vmatpush1.msra.mxu0 0.0
        %1815 = vmatprep.subr.mxu0 0.0
        %1816 = vmatpush1.msra.mxu0 0.0
        %1817 = vmatprep.subr.mxu0 0.0
        %1818 = vmatpush1.msra.mxu0 0.0
        %1819 = vmatprep.subr.mxu0 0.0
        %1820 = vmatpush1.msra.mxu0 0.0
        %1821 = vmatprep.subr.mxu0 0.0
        %1822 = vmatpush1.msra.mxu0 0.0
        %1823 = vmatprep.subr.mxu0 0.0
        %1824 = vmatpush1.msra.mxu0 0.0
        %1825 = vmatprep.subr.mxu0 0.0
        %1826 = vmatpush1.msra.mxu0 0.0
        %1827 = vmatprep.subr.mxu0 0.0
        %1828 = vmatpush1.msra.mxu0 0.0
        %1829 = vmatprep.subr.mxu0 0.0
        %1830 = vmatpush1.msra.mxu0 0.0
        %1831 = vmatprep.subr.mxu0 0.0
        %1832 = vmatpush1.msra.mxu0 0.0
        %1833 = vmatprep.subr.mxu0 0.0
        %1834 = vmatpush1.msra.mxu0 0.0
        %1835 = vmatprep.subr.mxu0 0.0
        %1836 = vmatpush1.msra.mxu0 0.0
        %1837 = vmatprep.mubr.f32.mxu0 0.0
        %1838 = vmatmul.mubr.f32.gmra.mrb[0].mxu0 %v1771
        %v1839 = vpop.f32.mrb[0].mxu0
        %v1840 = vadd.f32 0.0, %v1839
        %v1841 = vpop.f32.mrb[0].mxu0
        %1842 = vdwg.mxu0
        %v1844 = vsel %vm474, %v1331, 0
        %1846 = vmatprep.subr.mxu0 0.0
        %1847 = vmatpush1.msra.mxu0 %v415
        %1848 = vmatprep.subr.mxu0 0.0
        %1849 = vmatpush1.msra.mxu0 0.0
        %1850 = vmatprep.subr.mxu0 0.0
        %1851 = vmatpush1.msra.mxu0 0.0
        %1852 = vmatprep.subr.mxu0 0.0
        %1853 = vmatpush1.msra.mxu0 0.0
        %1854 = vmatprep.subr.mxu0 0.0
        %1855 = vmatpush1.msra.mxu0 0.0
        %1856 = vmatprep.subr.mxu0 0.0
        %1857 = vmatpush1.msra.mxu0 0.0
        %1858 = vmatprep.subr.mxu0 0.0
        %1859 = vmatpush1.msra.mxu0 0.0
        %1860 = vmatprep.subr.mxu0 0.0
        %1861 = vmatpush1.msra.mxu0 0.0
        %1862 = vmatprep.subr.mxu0 0.0
        %1863 = vmatpush1.msra.mxu0 0.0
        %1864 = vmatprep.subr.mxu0 0.0
        %1865 = vmatpush1.msra.mxu0 0.0
        %1866 = vmatprep.subr.mxu0 0.0
        %1867 = vmatpush1.msra.mxu0 0.0
        %1868 = vmatprep.subr.mxu0 0.0
        %1869 = vmatpush1.msra.mxu0 0.0
        %1870 = vmatprep.subr.mxu0 0.0
        %1871 = vmatpush1.msra.mxu0 0.0
        %1872 = vmatprep.subr.mxu0 0.0
        %1873 = vmatpush1.msra.mxu0 0.0
        %1874 = vmatprep.subr.mxu0 0.0
        %1875 = vmatpush1.msra.mxu0 0.0
        %1876 = vmatprep.subr.mxu0 0.0
        %1877 = vmatpush1.msra.mxu0 0.0
        %1878 = vmatprep.subr.mxu0 0.0
        %1879 = vmatpush1.msra.mxu0 0.0
        %1880 = vmatprep.subr.mxu0 0.0
        %1881 = vmatpush1.msra.mxu0 0.0
        %1882 = vmatprep.subr.mxu0 0.0
        %1883 = vmatpush1.msra.mxu0 0.0
        %1884 = vmatprep.subr.mxu0 0.0
        %1885 = vmatpush1.msra.mxu0 0.0
        %1886 = vmatprep.subr.mxu0 0.0
        %1887 = vmatpush1.msra.mxu0 0.0
        %1888 = vmatprep.subr.mxu0 0.0
        %1889 = vmatpush1.msra.mxu0 0.0
        %1890 = vmatprep.subr.mxu0 0.0
        %1891 = vmatpush1.msra.mxu0 0.0
        %1892 = vmatprep.subr.mxu0 0.0
        %1893 = vmatpush1.msra.mxu0 0.0
        %1894 = vmatprep.subr.mxu0 0.0
        %1895 = vmatpush1.msra.mxu0 0.0
        %1896 = vmatprep.subr.mxu0 0.0
        %1897 = vmatpush1.msra.mxu0 0.0
        %1898 = vmatprep.subr.mxu0 0.0
        %1899 = vmatpush1.msra.mxu0 0.0
        %1900 = vmatprep.subr.mxu0 0.0
        %1901 = vmatpush1.msra.mxu0 0.0
        %1902 = vmatprep.subr.mxu0 0.0
        %1903 = vmatpush1.msra.mxu0 0.0
        %1904 = vmatprep.subr.mxu0 0.0
        %1905 = vmatpush1.msra.mxu0 0.0
        %1906 = vmatprep.subr.mxu0 0.0
        %1907 = vmatpush1.msra.mxu0 0.0
        %1908 = vmatprep.subr.mxu0 0.0
        %1909 = vmatpush1.msra.mxu0 0.0
        %1910 = vmatprep.mubr.f32.mxu0 0.0
        %1911 = vmatmul.mubr.f32.gmra.mrb[0].mxu0 %v1844
        %v1912 = vpop.f32.mrb[0].mxu0
        %v1913 = vadd.f32 0.0, %v1912
        %v1914 = vpop.f32.mrb[0].mxu0
        %1915 = vdwg.mxu0
        %v1916 = vlaneseq
        %v1917 = vshrl.u32 %v1916, 7
        %v1918 = vsub.s32 0, %v1917
        %v1919 = vrot.slane %v487, %v1918
        %1921 = vbcast.lane.b32.xlu0 %v1919, 256
        %v1922 = vpop.permute.xlu0 %1921
        %v1923 = vlaneseq
        %v1924 = vshrl.u32 %v1923, 7
        %v1925 = vsub.s32 1, %v1924
        %v1926 = vrot.slane %v487, %v1925
        %1928 = vbcast.lane.b32.xlu0 %v1926, 256
        %v1929 = vpop.permute.xlu0 %1928
        %v1930 = vlaneseq
        %v1931 = vshrl.u32 %v1930, 7
        %v1932 = vsub.s32 2, %v1931
        %v1933 = vrot.slane %v487, %v1932
        %1935 = vbcast.lane.b32.xlu0 %v1933, 256
        %v1936 = vpop.permute.xlu0 %1935
        %v1937 = vlaneseq
        %v1938 = vshrl.u32 %v1937, 7
        %v1939 = vsub.s32 3, %v1938
        %v1940 = vrot.slane %v487, %v1939
        %1942 = vbcast.lane.b32.xlu0 %v1940, 256
        %v1943 = vpop.permute.xlu0 %1942
        %v1944 = vlaneseq
        %v1945 = vshrl.u32 %v1944, 7
        %v1946 = vsub.s32 4, %v1945
        %v1947 = vrot.slane %v487, %v1946
        %1949 = vbcast.lane.b32.xlu0 %v1947, 256
        %v1950 = vpop.permute.xlu0 %1949
        %v1951 = vlaneseq
        %v1952 = vshrl.u32 %v1951, 7
        %v1953 = vsub.s32 5, %v1952
        %v1954 = vrot.slane %v487, %v1953
        %1956 = vbcast.lane.b32.xlu0 %v1954, 256
        %v1957 = vpop.permute.xlu0 %1956
        %v1958 = vlaneseq
        %v1959 = vshrl.u32 %v1958, 7
        %v1960 = vsub.s32 6, %v1959
        %v1961 = vrot.slane %v487, %v1960
        %1963 = vbcast.lane.b32.xlu0 %v1961, 256
        %v1964 = vpop.permute.xlu0 %1963
        %v1965 = vlaneseq
        %v1966 = vshrl.u32 %v1965, 7
        %v1967 = vsub.s32 7, %v1966
        %v1968 = vrot.slane %v487, %v1967
        %1970 = vbcast.lane.b32.xlu0 %v1968, 256
        %v1971 = vpop.permute.xlu0 %1970
        %v1972 = vmul.f32 %v1402, %v1922
        %v1973 = vmul.f32 %v1475, %v1929
        %v1974 = vmul.f32 %v1548, %v1936
        %v1975 = vmul.f32 %v1621, %v1943
        %v1976 = vmul.f32 %v1694, %v1950
        %v1977 = vmul.f32 %v1767, %v1957
        %v1978 = vmul.f32 %v1840, %v1964
        %v1979 = vmul.f32 %v1913, %v1971
        %v1980 = vrot.slane %v1972, 4
        %v1981 = vadd.f32 %v1972, %v1980
        %v1982 = vrot.slane %v1981, 2
        %v1983 = vadd.f32 %v1981, %v1982
        %v1984 = vrot.slane %v1983, 1
        %v1985 = vadd.f32 %v1983, %v1984
        %v1986 = vrot.slane %v1973, 4
        %v1987 = vadd.f32 %v1973, %v1986
        %v1988 = vrot.slane %v1987, 2
        %v1989 = vadd.f32 %v1987, %v1988
        %v1990 = vrot.slane %v1989, 1
        %v1991 = vadd.f32 %v1989, %v1990
        %v1992 = vrot.slane %v1974, 4
        %v1993 = vadd.f32 %v1974, %v1992
        %v1994 = vrot.slane %v1993, 2
        %v1995 = vadd.f32 %v1993, %v1994
        %v1996 = vrot.slane %v1995, 1
        %v1997 = vadd.f32 %v1995, %v1996
        %v1998 = vrot.slane %v1975, 4
        %v1999 = vadd.f32 %v1975, %v1998
        %v2000 = vrot.slane %v1999, 2
        %v2001 = vadd.f32 %v1999, %v2000
        %v2002 = vrot.slane %v2001, 1
        %v2003 = vadd.f32 %v2001, %v2002
        %v2004 = vrot.slane %v1976, 4
        %v2005 = vadd.f32 %v1976, %v2004
        %v2006 = vrot.slane %v2005, 2
        %v2007 = vadd.f32 %v2005, %v2006
        %v2008 = vrot.slane %v2007, 1
        %v2009 = vadd.f32 %v2007, %v2008
        %v2010 = vrot.slane %v1977, 4
        %v2011 = vadd.f32 %v1977, %v2010
        %v2012 = vrot.slane %v2011, 2
        %v2013 = vadd.f32 %v2011, %v2012
        %v2014 = vrot.slane %v2013, 1
        %v2015 = vadd.f32 %v2013, %v2014
        %v2016 = vrot.slane %v1978, 4
        %v2017 = vadd.f32 %v1978, %v2016
        %v2018 = vrot.slane %v2017, 2
        %v2019 = vadd.f32 %v2017, %v2018
        %v2020 = vrot.slane %v2019, 1
        %v2021 = vadd.f32 %v2019, %v2020
        %v2022 = vrot.slane %v1979, 4
        %v2023 = vadd.f32 %v1979, %v2022
        %v2024 = vrot.slane %v2023, 2
        %v2025 = vadd.f32 %v2023, %v2024
        %v2026 = vrot.slane %v2025, 1
        %v2027 = vadd.f32 %v2025, %v2026
        %v2028 = vmul.f32 %v400, %v1922
        %v2029 = vmul.f32 %v401, %v1929
        %v2030 = vmul.f32 %v402, %v1936
        %v2031 = vmul.f32 %v403, %v1943
        %v2032 = vmul.f32 %v404, %v1950
        %v2033 = vmul.f32 %v405, %v1957
        %v2034 = vmul.f32 %v406, %v1964
        %v2035 = vmul.f32 %v407, %v1971
        %v2036 = vrot.slane %v2028, 4
        %v2037 = vadd.f32 %v2028, %v2036
        %v2038 = vrot.slane %v2037, 2
        %v2039 = vadd.f32 %v2037, %v2038
        %v2040 = vrot.slane %v2039, 1
        %v2041 = vadd.f32 %v2039, %v2040
        %v2042 = vrot.slane %v2029, 4
        %v2043 = vadd.f32 %v2029, %v2042
        %v2044 = vrot.slane %v2043, 2
        %v2045 = vadd.f32 %v2043, %v2044
        %v2046 = vrot.slane %v2045, 1
        %v2047 = vadd.f32 %v2045, %v2046
        %v2048 = vrot.slane %v2030, 4
        %v2049 = vadd.f32 %v2030, %v2048
        %v2050 = vrot.slane %v2049, 2
        %v2051 = vadd.f32 %v2049, %v2050
        %v2052 = vrot.slane %v2051, 1
        %v2053 = vadd.f32 %v2051, %v2052
        %v2054 = vrot.slane %v2031, 4
        %v2055 = vadd.f32 %v2031, %v2054
        %v2056 = vrot.slane %v2055, 2
        %v2057 = vadd.f32 %v2055, %v2056
        %v2058 = vrot.slane %v2057, 1
        %v2059 = vadd.f32 %v2057, %v2058
        %v2060 = vrot.slane %v2032, 4
        %v2061 = vadd.f32 %v2032, %v2060
        %v2062 = vrot.slane %v2061, 2
        %v2063 = vadd.f32 %v2061, %v2062
        %v2064 = vrot.slane %v2063, 1
        %v2065 = vadd.f32 %v2063, %v2064
        %v2066 = vrot.slane %v2033, 4
        %v2067 = vadd.f32 %v2033, %v2066
        %v2068 = vrot.slane %v2067, 2
        %v2069 = vadd.f32 %v2067, %v2068
        %v2070 = vrot.slane %v2069, 1
        %v2071 = vadd.f32 %v2069, %v2070
        %v2072 = vrot.slane %v2034, 4
        %v2073 = vadd.f32 %v2034, %v2072
        %v2074 = vrot.slane %v2073, 2
        %v2075 = vadd.f32 %v2073, %v2074
        %v2076 = vrot.slane %v2075, 1
        %v2077 = vadd.f32 %v2075, %v2076
        %v2078 = vrot.slane %v2035, 4
        %v2079 = vadd.f32 %v2035, %v2078
        %v2080 = vrot.slane %v2079, 2
        %v2081 = vadd.f32 %v2079, %v2080
        %v2082 = vrot.slane %v2081, 1
        %v2083 = vadd.f32 %v2081, %v2082
        %v2092 = vsel %vm1139, %v1991, %v1985
        %v2093 = vsel %vm1140, %v1997, %v2092
        %v2094 = vsel %vm1142, %v2003, %v2093
        %v2095 = vsel %vm1144, %v2009, %v2094
        %v2096 = vsel %vm1146, %v2015, %v2095
        %v2097 = vsel %vm1148, %v2021, %v2096
        %v2098 = vsel %vm1150, %v2027, %v2097
        %2100 = vmatprep.subr.mxu0 0.0
        %2101 = vmatpush1.msra.mxu0 %v434
        %2102 = vmatprep.subr.mxu0 0.0
        %2103 = vmatpush1.msra.mxu0 %v435
        %2104 = vmatprep.subr.mxu0 0.0
        %2105 = vmatpush1.msra.mxu0 %v436
        %2106 = vmatprep.subr.mxu0 0.0
        %2107 = vmatpush1.msra.mxu0 %v437
        %2108 = vmatprep.subr.mxu0 0.0
        %2109 = vmatpush1.msra.mxu0 %v438
        %2110 = vmatprep.subr.mxu0 0.0
        %2111 = vmatpush1.msra.mxu0 %v439
        %2112 = vmatprep.subr.mxu0 0.0
        %2113 = vmatpush1.msra.mxu0 %v440
        %2114 = vmatprep.subr.mxu0 0.0
        %2115 = vmatpush1.msra.mxu0 %v441
        %2116 = vmatprep.subr.mxu0 0.0
        %2117 = vmatpush1.msra.mxu0 %v442
        %2118 = vmatprep.subr.mxu0 0.0
        %2119 = vmatpush1.msra.mxu0 %v443
        %2120 = vmatprep.subr.mxu0 0.0
        %2121 = vmatpush1.msra.mxu0 %v444
        %2122 = vmatprep.subr.mxu0 0.0
        %2123 = vmatpush1.msra.mxu0 %v445
        %2124 = vmatprep.subr.mxu0 0.0
        %2125 = vmatpush1.msra.mxu0 %v446
        %2126 = vmatprep.subr.mxu0 0.0
        %2127 = vmatpush1.msra.mxu0 %v447
        %2128 = vmatprep.subr.mxu0 0.0
        %2129 = vmatpush1.msra.mxu0 %v448
        %2130 = vmatprep.subr.mxu0 0.0
        %2131 = vmatpush1.msra.mxu0 %v449
        %2132 = vmatprep.subr.mxu0 0.0
        %2133 = vmatpush1.msra.mxu0 0.0
        %2134 = vmatprep.subr.mxu0 0.0
        %2135 = vmatpush1.msra.mxu0 0.0
        %2136 = vmatprep.subr.mxu0 0.0
        %2137 = vmatpush1.msra.mxu0 0.0
        %2138 = vmatprep.subr.mxu0 0.0
        %2139 = vmatpush1.msra.mxu0 0.0
        %2140 = vmatprep.subr.mxu0 0.0
        %2141 = vmatpush1.msra.mxu0 0.0
        %2142 = vmatprep.subr.mxu0 0.0
        %2143 = vmatpush1.msra.mxu0 0.0
        %2144 = vmatprep.subr.mxu0 0.0
        %2145 = vmatpush1.msra.mxu0 0.0
        %2146 = vmatprep.subr.mxu0 0.0
        %2147 = vmatpush1.msra.mxu0 0.0
        %2148 = vmatprep.subr.mxu0 0.0
        %2149 = vmatpush1.msra.mxu0 0.0
        %2150 = vmatprep.subr.mxu0 0.0
        %2151 = vmatpush1.msra.mxu0 0.0
        %2152 = vmatprep.subr.mxu0 0.0
        %2153 = vmatpush1.msra.mxu0 0.0
        %2154 = vmatprep.subr.mxu0 0.0
        %2155 = vmatpush1.msra.mxu0 0.0
        %2156 = vmatprep.subr.mxu0 0.0
        %2157 = vmatpush1.msra.mxu0 0.0
        %2158 = vmatprep.subr.mxu0 0.0
        %2159 = vmatpush1.msra.mxu0 0.0
        %2160 = vmatprep.subr.mxu0 0.0
        %2161 = vmatpush1.msra.mxu0 0.0
        %2162 = vmatprep.subr.mxu0 0.0
        %2163 = vmatpush1.msra.mxu0 0.0
        %2164 = vmatprep.mubr.f32.mxu0 0.0
        %2165 = vmatmul.mubr.f32.gmra.mrb[0].mxu0 %v2098
        %v2166 = vpop.f32.mrb[0].mxu0
        %v2167 = vadd.f32 0.0, %v2166
        %v2168 = vpop.f32.mrb[0].mxu0
        %2169 = vdwg.mxu0
        %v2178 = vsel %vm1139, %v2047, %v2041
        %v2179 = vsel %vm1140, %v2053, %v2178
        %v2180 = vsel %vm1142, %v2059, %v2179
        %v2181 = vsel %vm1144, %v2065, %v2180
        %v2182 = vsel %vm1146, %v2071, %v2181
        %v2183 = vsel %vm1148, %v2077, %v2182
        %v2184 = vsel %vm1150, %v2083, %v2183
        %2186 = vmatprep.subr.mxu0 0.0
        %2187 = vmatpush1.msra.mxu0 %v418
        %2188 = vmatprep.subr.mxu0 0.0
        %2189 = vmatpush1.msra.mxu0 %v419
        %2190 = vmatprep.subr.mxu0 0.0
        %2191 = vmatpush1.msra.mxu0 %v420
        %2192 = vmatprep.subr.mxu0 0.0
        %2193 = vmatpush1.msra.mxu0 %v421
        %2194 = vmatprep.subr.mxu0 0.0
        %2195 = vmatpush1.msra.mxu0 %v422
        %2196 = vmatprep.subr.mxu0 0.0
        %2197 = vmatpush1.msra.mxu0 %v423
        %2198 = vmatprep.subr.mxu0 0.0
        %2199 = vmatpush1.msra.mxu0 %v424
        %2200 = vmatprep.subr.mxu0 0.0
        %2201 = vmatpush1.msra.mxu0 %v425
        %2202 = vmatprep.subr.mxu0 0.0
        %2203 = vmatpush1.msra.mxu0 %v426
        %2204 = vmatprep.subr.mxu0 0.0
        %2205 = vmatpush1.msra.mxu0 %v427
        %2206 = vmatprep.subr.mxu0 0.0
        %2207 = vmatpush1.msra.mxu0 %v428
        %2208 = vmatprep.subr.mxu0 0.0
        %2209 = vmatpush1.msra.mxu0 %v429
        %2210 = vmatprep.subr.mxu0 0.0
        %2211 = vmatpush1.msra.mxu0 %v430
        %2212 = vmatprep.subr.mxu0 0.0
        %2213 = vmatpush1.msra.mxu0 %v431
        %2214 = vmatprep.subr.mxu0 0.0
        %2215 = vmatpush1.msra.mxu0 %v432
        %2216 = vmatprep.subr.mxu0 0.0
        %2217 = vmatpush1.msra.mxu0 %v433
        %2218 = vmatprep.subr.mxu0 0.0
        %2219 = vmatpush1.msra.mxu0 0.0
        %2220 = vmatprep.subr.mxu0 0.0
        %2221 = vmatpush1.msra.mxu0 0.0
        %2222 = vmatprep.subr.mxu0 0.0
        %2223 = vmatpush1.msra.mxu0 0.0
        %2224 = vmatprep.subr.mxu0 0.0
        %2225 = vmatpush1.msra.mxu0 0.0
        %2226 = vmatprep.subr.mxu0 0.0
        %2227 = vmatpush1.msra.mxu0 0.0
        %2228 = vmatprep.subr.mxu0 0.0
        %2229 = vmatpush1.msra.mxu0 0.0
        %2230 = vmatprep.subr.mxu0 0.0
        %2231 = vmatpush1.msra.mxu0 0.0
        %2232 = vmatprep.subr.mxu0 0.0
        %2233 = vmatpush1.msra.mxu0 0.0
        %2234 = vmatprep.subr.mxu0 0.0
        %2235 = vmatpush1.msra.mxu0 0.0
        %2236 = vmatprep.subr.mxu0 0.0
        %2237 = vmatpush1.msra.mxu0 0.0
        %2238 = vmatprep.subr.mxu0 0.0
        %2239 = vmatpush1.msra.mxu0 0.0
        %2240 = vmatprep.subr.mxu0 0.0
        %2241 = vmatpush1.msra.mxu0 0.0
        %2242 = vmatprep.subr.mxu0 0.0
        %2243 = vmatpush1.msra.mxu0 0.0
        %2244 = vmatprep.subr.mxu0 0.0
        %2245 = vmatpush1.msra.mxu0 0.0
        %2246 = vmatprep.subr.mxu0 0.0
        %2247 = vmatpush1.msra.mxu0 0.0
        %2248 = vmatprep.subr.mxu0 0.0
        %2249 = vmatpush1.msra.mxu0 0.0
        %2250 = vmatprep.mubr.f32.mxu0 0.0
        %2251 = vmatmul.mubr.f32.gmra.mrb[0].mxu0 %v2184
        %v2252 = vpop.f32.mrb[0].mxu0
        %v2253 = vadd.f32 %v2167, %v2252
        %v2254 = vpop.f32.mrb[0].mxu0
        %2255 = vdwg.mxu0
        %v2257 = vlaneseq
        %v2258 = vshrl.u32 %v2257, 7
        %v2259 = vsub.s32 0, %v2258
        %v2260 = vrot.slane %v450, %v2259
        %v2262 = vadd.f32 %v2253, %v2260
        %v2263 = vmax.f32 %v2262, 0.0
        %v2265 = vlaneseq
        %v2266 = vshrl.u32 %v2265, 7
        %v2267 = vsub.s32 0, %v2266
        %v2268 = vrot.slane %v467, %v2267
        %2270 = vmatprep.subr.mxu0 0.0
        %2271 = vmatpush1.msra.mxu0 %v451
        %2272 = vmatprep.subr.mxu0 0.0
        %2273 = vmatpush1.msra.mxu0 %v452
        %2274 = vmatprep.subr.mxu0 0.0
        %2275 = vmatpush1.msra.mxu0 %v453
        %2276 = vmatprep.subr.mxu0 0.0
        %2277 = vmatpush1.msra.mxu0 %v454
        %2278 = vmatprep.subr.mxu0 0.0
        %2279 = vmatpush1.msra.mxu0 %v455
        %2280 = vmatprep.subr.mxu0 0.0
        %2281 = vmatpush1.msra.mxu0 %v456
        %2282 = vmatprep.subr.mxu0 0.0
        %2283 = vmatpush1.msra.mxu0 %v457
        %2284 = vmatprep.subr.mxu0 0.0
        %2285 = vmatpush1.msra.mxu0 %v458
        %2286 = vmatprep.subr.mxu0 0.0
        %2287 = vmatpush1.msra.mxu0 %v459
        %2288 = vmatprep.subr.mxu0 0.0
        %2289 = vmatpush1.msra.mxu0 %v460
        %2290 = vmatprep.subr.mxu0 0.0
        %2291 = vmatpush1.msra.mxu0 %v461
        %2292 = vmatprep.subr.mxu0 0.0
        %2293 = vmatpush1.msra.mxu0 %v462
        %2294 = vmatprep.subr.mxu0 0.0
        %2295 = vmatpush1.msra.mxu0 %v463
        %2296 = vmatprep.subr.mxu0 0.0
        %2297 = vmatpush1.msra.mxu0 %v464
        %2298 = vmatprep.subr.mxu0 0.0
        %2299 = vmatpush1.msra.mxu0 %v465
        %2300 = vmatprep.subr.mxu0 0.0
        %2301 = vmatpush1.msra.mxu0 %v466
        %2302 = vmatprep.subr.mxu0 0.0
        %2303 = vmatpush1.msra.mxu0 0.0
        %2304 = vmatprep.subr.mxu0 0.0
        %2305 = vmatpush1.msra.mxu0 0.0
        %2306 = vmatprep.subr.mxu0 0.0
        %2307 = vmatpush1.msra.mxu0 0.0
        %2308 = vmatprep.subr.mxu0 0.0
        %2309 = vmatpush1.msra.mxu0 0.0
        %2310 = vmatprep.subr.mxu0 0.0
        %2311 = vmatpush1.msra.mxu0 0.0
        %2312 = vmatprep.subr.mxu0 0.0
        %2313 = vmatpush1.msra.mxu0 0.0
        %2314 = vmatprep.subr.mxu0 0.0
        %2315 = vmatpush1.msra.mxu0 0.0
        %2316 = vmatprep.subr.mxu0 0.0
        %2317 = vmatpush1.msra.mxu0 0.0
        %2318 = vmatprep.subr.mxu0 0.0
        %2319 = vmatpush1.msra.mxu0 0.0
        %2320 = vmatprep.subr.mxu0 0.0
        %2321 = vmatpush1.msra.mxu0 0.0
        %2322 = vmatprep.subr.mxu0 0.0
        %2323 = vmatpush1.msra.mxu0 0.0
        %2324 = vmatprep.subr.mxu0 0.0
        %2325 = vmatpush1.msra.mxu0 0.0
        %2326 = vmatprep.subr.mxu0 0.0
        %2327 = vmatpush1.msra.mxu0 0.0
        %2328 = vmatprep.subr.mxu0 0.0
        %2329 = vmatpush1.msra.mxu0 0.0
        %2330 = vmatprep.subr.mxu0 0.0
        %2331 = vmatpush1.msra.mxu0 0.0
        %2332 = vmatprep.subr.mxu0 0.0
        %2333 = vmatpush1.msra.mxu0 0.0
        %2334 = vmatprep.mubr.f32.mxu0 0.0
        %2335 = vmatmul.mubr.f32.gmra.mrb[0].mxu0 %v2263
        %v2336 = vpop.f32.mrb[0].mxu0
        %v2337 = vadd.f32 %v2268, %v2336
        %v2338 = vpop.f32.mrb[0].mxu0
        %2339 = vdwg.mxu0
        %vm2340 = vcmask 23552
        %2341 = vst.msk [vmem:[%s318] sm:$0xff] %vm2340, %v2337
        %p2342 = scmp.lt.s32.totalorder %s32, 1
        %s2343 = scalar_select %p2342, %s32, 1
        %s2344 = smul.addr %s2343, 8
        %s2345 = scalar_lea.vmem %s10, %s2344
        // Predicated region
        $region89: #{tpu_custom_call.1} parent=47 // pred_check
          %p2346 = pneg %p207
        $region90: #{tpu_custom_call.1} parent=47 // pred_check_branch
          %2348 = sbr.rel (%p2346) target = $region92
        $region91: #{tpu_custom_call.1} parent=47 // pred_region
          _
        $region92: #{tpu_custom_call.1} parent=47 // pred_fallthru
          _
      $region48: #{tpu_custom_call.1} parent=5 // pred_fallthru
        _
      %p2349 = scmp.le.s32.totalorder 2, %s27
      // Predicated region
      $region93: #{tpu_custom_call.1} parent=5 // pred_check
        %p2350 = pneg %p2349
      $region94: #{tpu_custom_call.1} parent=5 // pred_check_branch
        %2352 = sbr.rel (%p2350) target = $region96
      $region95: #{tpu_custom_call.1} parent=5 // pred_region
        %s2353 = ssub.s32 %s27, 2
        // Predicated region
        $region97: #{tpu_custom_call.1} parent=95 // pred_check
          %p2354 = pneg %p213
        $region98: #{tpu_custom_call.1} parent=95 // pred_check_branch
          %2356 = sbr.rel (%p2354) target = $region100
        $region99: #{tpu_custom_call.1} parent=95 // pred_region
          %p2357 = scmp.lt.s32.totalorder %s33, 1
          %s2358 = scalar_select %p2357, %s33, 1
          %s2359 = smul.addr %s2358, 8
          %s2360 = scalar_lea.vmem %s10, %s2359
        $region100: #{tpu_custom_call.1} parent=95 // pred_fallthru
          _
      $region96: #{tpu_custom_call.1} parent=5 // pred_fallthru
        _
    $region6: #{tpu_custom_call.1} parent=1 // loop_footer
      %s31 = sadd.s32 1, %s27
    $region7: #{tpu_custom_call.1} parent=1 // loop_footer_branch
      %26 = sbr.rel target = $region3
    $region8: #{tpu_custom_call.1} parent=1 // loop_exit
      _
    %2361 = vsyncpa [#allocation9], 1
    %s2362 = scalar_lea.sflag [#allocation9], 1
    %2363 = vsyncpa %s2362, 1
  %2364 = vsyncmov [#allocation4]
  %s2365 = vpop.sfrf %2364
  %p2366 = scmp.eq.s32.totalorder %s2365, 0
  %p2367 = pneg %p2366
  %2369 = shalt.err (%p2367)

// kernel: tpu_custom_call.1
$region0: #{tpu_custom_call.1}
  #allocation0 [shape = 'u32[]', space=smem, size = 0x4, offset = 0x4, fixed_abs, tag = 'smem constant byte address 0x4 - core index']
  #allocation1 [shape = 'u32[144,128]{1,0:T(1,128)}', space=vmem, size = 0x12000, scoped, tag = 'internal scratch']
  #allocation2 [shape = 'f32[8,8,128]{2,1,0:T(8,128)}', space=vmem, size = 0x8000, scoped, tag = 'scratch operand']
  #allocation3 [shape = 'f32[8,8,128]{2,1,0:T(8,128)}', space=vmem, size = 0x8000, scoped, tag = 'scratch operand']
  #allocation4 [shape = 's32[1]{0}', space=sflag, size = 0x4, scoped, tag = 'scratch operand']
  #allocation5 [shape = 's32[1]{0}', space=sflag, size = 0x4, scoped, tag = 'scoped memory for tpu_custom_call.1']
  #allocation6 [shape = 'u8[8192]{0}', space=smem, size = 0x2000, scoped, tag = 'prefetched SMEM operand 0']
  #allocation7 [shape = 'u8[8192]{0}', space=smem, size = 0x2000, scoped, tag = 'prefetched SMEM operand 1']
  #allocation10 [shape = 's32[]', space=sflag, size = 0x4, offset = 0, fixed_abs, tag = 'sflag constant byte address 0x0 - dummy sync flag']
  #allocation11 [shape = 's32[]', space=sflag, size = 0x4, offset = 0, fixed_abs, tag = 'sflag constant byte address 0x0 - dummy sync flag']
  #allocation12 [shape = 'u32[]', space=smem, size = 0x4, offset = 0x44, fixed_abs, tag = 'smem constant byte address 0x44 - assertion arg 0']
  #allocation13 [shape = 'u32[]', space=smem, size = 0x4, offset = 0x48, fixed_abs, tag = 'smem constant byte address 0x48 - assertion arg 1']
  #allocation14 [shape = 's32[]', space=sflag, size = 0x4, offset = 0, fixed_abs, tag = 'sflag constant byte address 0x0 - dummy sync flag']
  #allocation15 [shape = 's32[]', space=sflag, size = 0x4, offset = 0, fixed_abs, tag = 'sflag constant byte address 0x0 - dummy sync flag']
  %s0 = inlined_call_operand.vmem [shape: s32[16,8], index: 0, kind: input, shape index: {}]
  %s1 = inlined_call_operand.vmem [shape: s32[16,8], index: 1, kind: input, shape index: {}]
  %s2 = inlined_call_operand.hbm [shape: f32[16,64,128], index: 2, kind: input, shape index: {}]
  %s3 = inlined_call_operand.vmem [shape: s32[16,8], index: 3, kind: input, shape index: {}]
  %s4 = inlined_call_operand.vmem [shape: s32[16,8], index: 4, kind: input, shape index: {}]
  %s5 = inlined_call_operand.vmem [shape: f32[128,128], index: 5, kind: input, shape index: {}]
  %s6 = inlined_call_operand.hbm [shape: f32[128,128], index: 6, kind: input, shape index: {}]
  %s7 = inlined_call_operand.vmem [shape: f32[1,128], index: 7, kind: input, shape index: {}]
  %s8 = inlined_call_operand.vmem [shape: f32[128,3], index: 8, kind: input, shape index: {}]
  %s9 = inlined_call_operand.vmem [shape: f32[1,3], index: 9, kind: input, shape index: {}]
  %s10 = inlined_call_operand.vmem [shape: f32[16,3], index: 10, kind: output, shape index: {}]
  %s11 = sld [smem:[#allocation0]]
  $region101: #{tpu_custom_call.1} parent=0
    _
  %s13 = ssub.s32 1, %s11
  %s14 = scalar_select 0, %s13, %s11
  %s15 = sshll.u32 %s0, 4
  %s16 = int_to_ptr.vmem [resolvable:$true] %s15
  %18 = dma.vmem_to_smem %s16, 256, [#allocation6], [#allocation5]
  %s19 = sshll.u32 %s1, 4
  %s20 = int_to_ptr.vmem [resolvable:$true] %s19
  %22 = dma.vmem_to_smem %s20, 256, [#allocation7], [#allocation5]
  %23 = dma.done [#allocation5], 512
  %24 = sfence
  $region1: #{tpu_custom_call.1} parent=0
    #allocation8 [shape = 'u8[65536]{0}', space=vmem, size = 0x10000, scoped, tag = 'input window, operand 6, single buffered']
    #allocation9 [shape = 's32[2]{0}', space=sflag, size = 0x8, scoped, tag = 'scoped memory for tpu_custom_call.1']
    %25 = vsyncpa [#allocation9], 0
    loop: start=0, step=1, limit=4
    $region2: #{tpu_custom_call.1} parent=1 // loop_pre_header
      _
    $region3: #{tpu_custom_call.1} parent=1 // loop_header
      %s27 = sphi 0, %s31
      %p28 = scmp.ge.s32.totalorder %s27, 4
      %s37 = sphi 0, %s39
      %s40 = sphi 0, %s37
      %s41 = sphi 0, %s40
      %s57 = sphi 0, %s41
      %s63 = sphi 0, %s65
      %s66 = sphi 0, %s63
      %s67 = sphi 0, %s66
      %s83 = sphi 0, %s67
      %s87 = sphi 0, %s87
      %s89 = sphi 0, %s87
      %s90 = sphi 0, %s89
      %s104 = sphi 0, %s90
      %s108 = sphi 0, %s108
      %s110 = sphi 0, %s108
      %s111 = sphi 0, %s110
      %s125 = sphi 0, %s111
      %s129 = sphi 0, %s129
      %s131 = sphi 0, %s129
      %s132 = sphi 0, %s131
      %s146 = sphi 0, %s132
      %s150 = sphi 0, %s150
      %s152 = sphi 0, %s150
      %s153 = sphi 0, %s152
      %s167 = sphi 0, %s153
      %s171 = sphi 0, %s171
      %s173 = sphi 0, %s171
      %s174 = sphi 0, %s173
      %s188 = sphi 0, %s174
      %s194 = sphi 0, %s196
      %s197 = sphi 0, %s194
      %s198 = sphi 0, %s197
      %s214 = sphi 0, %s198
    $region4: #{tpu_custom_call.1} parent=1 // loop_header_branch
      %30 = sbr.rel (%p28) target = $region8
    $region5: #{tpu_custom_call.1} parent=1 // loop_body
      %s32 = ssub.s32 %s27, 1
      %s33 = ssub.s32 %s27, 2
      %s34 = sadd.s32 %s27, 1
      %s35 = ssub.s32 %s27, %s34
      %p36 = scmp.eq.s32.totalorder %s35, 0
      %s38 = sadd.s32 %s37, 1
      %s39 = scalar_select %p36, %s37, %s38
      %p42 = pneg %p36
      %p43 = scmp.eq.s32.totalorder %s27, 1
      %p44 = por %p42, %p43
      %p45 = scmp.ne.s32.totalorder %s37, %s40
      %p46 = scmp.eq.s32.totalorder %s27, 0
      %p47 = por %p45, %p46
      %p48 = scmp.ne.s32.totalorder %s37, %s40
      %p49 = scmp.eq.s32.totalorder %s32, 1
      %p50 = por %p48, %p49
      %p51 = scmp.ne.s32.totalorder %s40, %s41
      %p52 = scmp.eq.s32.totalorder %s32, 0
      %p53 = por %p51, %p52
      %p54 = scmp.ne.s32.totalorder %s40, %s41
      %p55 = scmp.eq.s32.totalorder %s33, 1
      %p56 = por %p54, %p55
      %p58 = scmp.ne.s32.totalorder %s41, %s57
      %p59 = scmp.eq.s32.totalorder %s33, 0
      %p60 = por %p58, %p59
      %s61 = ssub.s32 %s27, %s34
      %p62 = scmp.eq.s32.totalorder %s61, 0
      %s64 = sadd.s32 %s63, 1
      %s65 = scalar_select %p62, %s63, %s64
      %p68 = pneg %p62
      %p69 = scmp.eq.s32.totalorder %s27, 1
      %p70 = por %p68, %p69
      %p71 = scmp.ne.s32.totalorder %s63, %s66
      %p72 = scmp.eq.s32.totalorder %s27, 0
      %p73 = por %p71, %p72
      %p74 = scmp.ne.s32.totalorder %s63, %s66
      %p75 = scmp.eq.s32.totalorder %s32, 1
      %p76 = por %p74, %p75
      %p77 = scmp.ne.s32.totalorder %s66, %s67
      %p78 = scmp.eq.s32.totalorder %s32, 0
      %p79 = por %p77, %p78
      %p80 = scmp.ne.s32.totalorder %s66, %s67
      %p81 = scmp.eq.s32.totalorder %s33, 1
      %p82 = por %p80, %p81
      %p84 = scmp.ne.s32.totalorder %s67, %s83
      %p85 = scmp.eq.s32.totalorder %s33, 0
      %p86 = por %p84, %p85
      %s88 = sadd.s32 %s87, 1
      %p91 = scmp.eq.s32.totalorder %s27, 1
      %p92 = scmp.ne.s32.totalorder %s87, %s89
      %p93 = scmp.eq.s32.totalorder %s27, 0
      %p94 = por %p92, %p93
      %p95 = scmp.ne.s32.totalorder %s87, %s89
      %p96 = scmp.eq.s32.totalorder %s32, 1
      %p97 = por %p95, %p96
      %p98 = scmp.ne.s32.totalorder %s89, %s90
      %p99 = scmp.eq.s32.totalorder %s32, 0
      %p100 = por %p98, %p99
      %p101 = scmp.ne.s32.totalorder %s89, %s90
      %p102 = scmp.eq.s32.totalorder %s33, 1
      %p103 = por %p101, %p102
      %p105 = scmp.ne.s32.totalorder %s90, %s104
      %p106 = scmp.eq.s32.totalorder %s33, 0
      %p107 = por %p105, %p106
      %s109 = sadd.s32 %s108, 1
      %p112 = scmp.eq.s32.totalorder %s27, 1
      %p113 = scmp.ne.s32.totalorder %s108, %s110
      %p114 = scmp.eq.s32.totalorder %s27, 0
      %p115 = por %p113, %p114
      %p116 = scmp.ne.s32.totalorder %s108, %s110
      %p117 = scmp.eq.s32.totalorder %s32, 1
      %p118 = por %p116, %p117
      %p119 = scmp.ne.s32.totalorder %s110, %s111
      %p120 = scmp.eq.s32.totalorder %s32, 0
      %p121 = por %p119, %p120
      %p122 = scmp.ne.s32.totalorder %s110, %s111
      %p123 = scmp.eq.s32.totalorder %s33, 1
      %p124 = por %p122, %p123
      %p126 = scmp.ne.s32.totalorder %s111, %s125
      %p127 = scmp.eq.s32.totalorder %s33, 0
      %p128 = por %p126, %p127
      %s130 = sadd.s32 %s129, 1
      %p133 = scmp.eq.s32.totalorder %s27, 1
      %p134 = scmp.ne.s32.totalorder %s129, %s131
      %p135 = scmp.eq.s32.totalorder %s27, 0
      %p136 = por %p134, %p135
      %p137 = scmp.ne.s32.totalorder %s129, %s131
      %p138 = scmp.eq.s32.totalorder %s32, 1
      %p139 = por %p137, %p138
      %p140 = scmp.ne.s32.totalorder %s131, %s132
      %p141 = scmp.eq.s32.totalorder %s32, 0
      %p142 = por %p140, %p141
      %p143 = scmp.ne.s32.totalorder %s131, %s132
      %p144 = scmp.eq.s32.totalorder %s33, 1
      %p145 = por %p143, %p144
      %p147 = scmp.ne.s32.totalorder %s132, %s146
      %p148 = scmp.eq.s32.totalorder %s33, 0
      %p149 = por %p147, %p148
      %s151 = sadd.s32 %s150, 1
      %p154 = scmp.eq.s32.totalorder %s27, 1
      %p155 = scmp.ne.s32.totalorder %s150, %s152
      %p156 = scmp.eq.s32.totalorder %s27, 0
      %p157 = por %p155, %p156
      %p158 = scmp.ne.s32.totalorder %s150, %s152
      %p159 = scmp.eq.s32.totalorder %s32, 1
      %p160 = por %p158, %p159
      %p161 = scmp.ne.s32.totalorder %s152, %s153
      %p162 = scmp.eq.s32.totalorder %s32, 0
      %p163 = por %p161, %p162
      %p164 = scmp.ne.s32.totalorder %s152, %s153
      %p165 = scmp.eq.s32.totalorder %s33, 1
      %p166 = por %p164, %p165
      %p168 = scmp.ne.s32.totalorder %s153, %s167
      %p169 = scmp.eq.s32.totalorder %s33, 0
      %p170 = por %p168, %p169
      %s172 = sadd.s32 %s171, 1
      %p175 = scmp.eq.s32.totalorder %s27, 1
      %p176 = scmp.ne.s32.totalorder %s171, %s173
      %p177 = scmp.eq.s32.totalorder %s27, 0
      %p178 = por %p176, %p177
      %p179 = scmp.ne.s32.totalorder %s171, %s173
      %p180 = scmp.eq.s32.totalorder %s32, 1
      %p181 = por %p179, %p180
      %p182 = scmp.ne.s32.totalorder %s173, %s174
      %p183 = scmp.eq.s32.totalorder %s32, 0
      %p184 = por %p182, %p183
      %p185 = scmp.ne.s32.totalorder %s173, %s174
      %p186 = scmp.eq.s32.totalorder %s33, 1
      %p187 = por %p185, %p186
      %p189 = scmp.ne.s32.totalorder %s174, %s188
      %p190 = scmp.eq.s32.totalorder %s33, 0
      %p191 = por %p189, %p190
      %s192 = ssub.s32 %s27, %s34
      %p193 = scmp.eq.s32.totalorder %s192, 0
      %s195 = sadd.s32 %s194, 1
      %s196 = scalar_select %p193, %s194, %s195
      %p199 = pneg %p193
      %p200 = scmp.eq.s32.totalorder %s27, 1
      %p201 = por %p199, %p200
      %p202 = scmp.ne.s32.totalorder %s194, %s197
      %p203 = scmp.eq.s32.totalorder %s27, 0
      %p204 = por %p202, %p203
      %p205 = scmp.ne.s32.totalorder %s194, %s197
      %p206 = scmp.eq.s32.totalorder %s32, 1
      %p207 = por %p205, %p206
      %p208 = scmp.ne.s32.totalorder %s197, %s198
      %p209 = scmp.eq.s32.totalorder %s32, 0
      %p210 = por %p208, %p209
      %p211 = scmp.ne.s32.totalorder %s197, %s198
      %p212 = scmp.eq.s32.totalorder %s33, 1
      %p213 = por %p211, %p212
      %p215 = scmp.ne.s32.totalorder %s198, %s214
      %p216 = scmp.eq.s32.totalorder %s33, 0
      %p217 = por %p215, %p216
      %p218 = scmp.le.s32.totalorder 1, %s27
      %p219 = scmp.lt.s32.totalorder %s27, 3
      %p220 = pnand %p218, %p219
      %p221 = pneg %p220
      // Predicated region
      $region9: #{tpu_custom_call.1} parent=5 // pred_check
        _
      $region10: #{tpu_custom_call.1} parent=5 // pred_check_branch
        %223 = sbr.rel (%p220) target = $region12
      $region11: #{tpu_custom_call.1} parent=5 // pred_region
        %s224 = ssub.s32 %s27, 1
        // Predicated region
        $region13: #{tpu_custom_call.1} parent=11 // pred_check
          %p225 = pneg %p100
        $region14: #{tpu_custom_call.1} parent=11 // pred_check_branch
          %227 = sbr.rel (%p225) target = $region16
        $region15: #{tpu_custom_call.1} parent=11 // pred_region
          _
        $region16: #{tpu_custom_call.1} parent=11 // pred_fallthru
          _
        // Predicated region
        $region17: #{tpu_custom_call.1} parent=11 // pred_check
          %p228 = pneg %p121
        $region18: #{tpu_custom_call.1} parent=11 // pred_check_branch
          %230 = sbr.rel (%p228) target = $region20
        $region19: #{tpu_custom_call.1} parent=11 // pred_region
          %s232 = ssub.s32 2048, 2048
          %233 = vsyncadd [#allocation9], %s232
          %s234 = sshll.u32 [#allocation8], 4
          %s235 = int_to_ptr.vmem [resolvable:$true] %s234
          %240 = dma.hbm_to_vmem [thread:$0]  %s6, 2048, %s235, [#allocation9], 128, 128, 8
        $region20: #{tpu_custom_call.1} parent=11 // pred_fallthru
          _
        // Predicated region
        $region21: #{tpu_custom_call.1} parent=11 // pred_check
          %p241 = pneg %p142
        $region22: #{tpu_custom_call.1} parent=11 // pred_check_branch
          %243 = sbr.rel (%p241) target = $region24
        $region23: #{tpu_custom_call.1} parent=11 // pred_region
          _
        $region24: #{tpu_custom_call.1} parent=11 // pred_fallthru
          _
        // Predicated region
        $region25: #{tpu_custom_call.1} parent=11 // pred_check
          %p244 = pneg %p163
        $region26: #{tpu_custom_call.1} parent=11 // pred_check_branch
          %246 = sbr.rel (%p244) target = $region28
        $region27: #{tpu_custom_call.1} parent=11 // pred_region
          _
        $region28: #{tpu_custom_call.1} parent=11 // pred_fallthru
          _
        // Predicated region
        $region29: #{tpu_custom_call.1} parent=11 // pred_check
          %p247 = pneg %p184
        $region30: #{tpu_custom_call.1} parent=11 // pred_check_branch
          %249 = sbr.rel (%p247) target = $region32
        $region31: #{tpu_custom_call.1} parent=11 // pred_region
          _
        $region32: #{tpu_custom_call.1} parent=11 // pred_fallthru
          _
      $region12: #{tpu_custom_call.1} parent=5 // pred_fallthru
        _
      %p250 = scmp.lt.s32.totalorder %s27, 2
      // Predicated region
      $region33: #{tpu_custom_call.1} parent=5 // pred_check
        %p251 = pneg %p250
      $region34: #{tpu_custom_call.1} parent=5 // pred_check_branch
        %253 = sbr.rel (%p251) target = $region36
      $region35: #{tpu_custom_call.1} parent=5 // pred_region
        // Predicated region
        $region37: #{tpu_custom_call.1} parent=35 // pred_check
          %p254 = pneg %p47
        $region38: #{tpu_custom_call.1} parent=35 // pred_check_branch
          %256 = sbr.rel (%p254) target = $region40
        $region39: #{tpu_custom_call.1} parent=35 // pred_region
          %p257 = scmp.lt.s32.totalorder %s27, 1
          %s258 = scalar_select %p257, %s27, 1
          %s259 = smul.addr %s258, 8
          %s260 = scalar_lea.vmem %s3, %s259
        $region40: #{tpu_custom_call.1} parent=35 // pred_fallthru
          _
        // Predicated region
        $region41: #{tpu_custom_call.1} parent=35 // pred_check
          %p261 = pneg %p73
        $region42: #{tpu_custom_call.1} parent=35 // pred_check_branch
          %263 = sbr.rel (%p261) target = $region44
        $region43: #{tpu_custom_call.1} parent=35 // pred_region
          %p264 = scmp.lt.s32.totalorder %s27, 1
          %s265 = scalar_select %p264, %s27, 1
          %s266 = smul.addr %s265, 8
          %s267 = scalar_lea.vmem %s4, %s266
        $region44: #{tpu_custom_call.1} parent=35 // pred_fallthru
          _
      $region36: #{tpu_custom_call.1} parent=5 // pred_fallthru
        _
      %p268 = scmp.le.s32.totalorder 1, %s27
      %p269 = scmp.lt.s32.totalorder %s27, 3
      %p270 = pnand %p268, %p269
      %p271 = pneg %p270
      // Predicated region
      $region45: #{tpu_custom_call.1} parent=5 // pred_check
        _
      $region46: #{tpu_custom_call.1} parent=5 // pred_check_branch
        %273 = sbr.rel (%p270) target = $region48
      $region47: #{tpu_custom_call.1} parent=5 // pred_region
        %s274 = ssub.s32 %s27, 1
        // Predicated region
        $region49: #{tpu_custom_call.1} parent=47 // pred_check
          %p275 = pneg %p121
        $region50: #{tpu_custom_call.1} parent=47 // pred_check_branch
          %277 = sbr.rel (%p275) target = $region52
        $region51: #{tpu_custom_call.1} parent=47 // pred_region
          %278 = dma.done [#allocation9], 2048
        $region52: #{tpu_custom_call.1} parent=47 // pred_fallthru
          _
        %p279 = scmp.lt.s32.totalorder %s32, 1
        %s280 = scalar_select %p279, %s32, 1
        %s281 = smul.addr %s280, 8
        %s282 = scalar_lea.vmem %s3, %s281
        %p283 = pneg %p53
        %p284 = pneg %p50
        %p285 = scmp.lt.s32.totalorder %s32, 1
        %s286 = scalar_select %p285, %s32, 1
        %s287 = smul.addr %s286, 8
        %s288 = scalar_lea.vmem %s4, %s287
        %p289 = pneg %p79
        %p290 = pneg %p76
        %p291 = pneg %p100
        %p292 = pneg %p97
        %p293 = pneg %p121
        %p294 = pneg %p118
        %p295 = pneg %p142
        %p296 = pneg %p139
        %p297 = pneg %p163
        %p298 = pneg %p160
        %p299 = pneg %p184
        %p300 = pneg %p181
        %p301 = pneg %p210
        %p302 = pneg %p207
        %p303 = scmp.lt.s32.totalorder %s32, 1
        %s304 = scalar_select %p303, %s32, 1
        %s305 = smul.addr %s304, 8
        %s306 = scalar_lea.vmem %s10, %s305
        %p307 = scmp.lt.s32.totalorder %s32, 1
        %s308 = scalar_select %p307, %s32, 1
        %s309 = smul.addr %s308, 8
        %s310 = scalar_lea.vmem %s3, %s309
        %p311 = scmp.lt.s32.totalorder %s32, 1
        %s312 = scalar_select %p311, %s32, 1
        %s313 = smul.addr %s312, 8
        %s314 = scalar_lea.vmem %s4, %s313
        %p315 = scmp.lt.s32.totalorder %s32, 1
        %s316 = scalar_select %p315, %s32, 1
        %s317 = smul.addr %s316, 8
        %s318 = scalar_lea.vmem %s10, %s317
        %s319 = smul.u32 %s32, 8
        loop: start=0, step=1, limit=8
        $region53: #{tpu_custom_call.1} parent=47 // loop_pre_header
          _
        $region54: #{tpu_custom_call.1} parent=47 // loop_header
          %s321 = sphi 0, %s325
          %p322 = scmp.ge.s32.totalorder %s321, 8
        $region55: #{tpu_custom_call.1} parent=47 // loop_header_branch
          %324 = sbr.rel (%p322) target = $region59
        $region56: #{tpu_custom_call.1} parent=47 // loop_body
          %s326 = sadd.s32 %s319, %s321
          loop: start=0, step=1, limit=8
          $region60: #{tpu_custom_call.1} parent=56 // loop_pre_header
            _
          $region61: #{tpu_custom_call.1} parent=56 // loop_header
            %s328 = sphi 0, %s332
            %p329 = scmp.ge.s32.totalorder %s328, 8
          $region62: #{tpu_custom_call.1} parent=56 // loop_header_branch
            %331 = sbr.rel (%p329) target = $region66
          $region63: #{tpu_custom_call.1} parent=56 // loop_body
            %s333 = sshra.s32 %s328, 7
            %s334 = sand.u32 %s328, 127
            %s335 = sadd.s32 %s333, %s326
            %s336 = smul.u32 %s335, 128
            %s337 = sshra.s32 %s328, 7
            %s338 = sand.u32 %s328, 127
            %s339 = sadd.s32 %s336, %s338
            %s340 = sld [smem:[#allocation6 + %s339]]
            %s341 = smul.u32 %s326, 64
            %s342 = sadd.s32 %s340, %s341
            %s343 = smul.addr %s342, 16
            %s344 = scalar_lea.hbm %s2, %s343
            %s345 = smul.u32 %s321, 8
            %s346 = sadd.s32 %s328, %s345
            %s347 = scalar_lea.vmem [#allocation2], %s346
            // Predicated region
            $region67: #{tpu_custom_call.1} parent=63 // pred_check
              _
            $region68: #{tpu_custom_call.1} parent=63 // pred_check_branch
              %349 = sbr.rel target = $region70
            $region69: #{tpu_custom_call.1} parent=63 // pred_region
              %350 = sst [smem:[#allocation12]] [#allocation11]
              %351 = sst [smem:[#allocation13]] [#allocation10]
            $region70: #{tpu_custom_call.1} parent=63 // pred_fallthru
              _
            %353 = shalt.err (0)
            %s355 = sshll.u32 %s347, 4
            %s356 = int_to_ptr.vmem [resolvable:$true] %s355
            %358 = dma.hbm_to_vmem [thread:$0]  %s344, 16, %s356, [#allocation4]
          $region64: #{tpu_custom_call.1} parent=56 // loop_footer
            %s332 = sadd.s32 1, %s328
          $region65: #{tpu_custom_call.1} parent=56 // loop_footer_branch
            %327 = sbr.rel target = $region61
          $region66: #{tpu_custom_call.1} parent=56 // loop_exit
            _
          loop: start=0, step=1, limit=8
          $region71: #{tpu_custom_call.1} parent=56 // loop_pre_header
            _
          $region72: #{tpu_custom_call.1} parent=56 // loop_header
            %s360 = sphi 0, %s364
            %p361 = scmp.ge.s32.totalorder %s360, 8
          $region73: #{tpu_custom_call.1} parent=56 // loop_header_branch
            %363 = sbr.rel (%p361) target = $region77
          $region74: #{tpu_custom_call.1} parent=56 // loop_body
            %s365 = sshra.s32 %s360, 7
            %s366 = sand.u32 %s360, 127
            %s367 = sadd.s32 %s365, %s326
            %s368 = smul.u32 %s367, 128
            %s369 = sshra.s32 %s360, 7
            %s370 = sand.u32 %s360, 127
            %s371 = sadd.s32 %s368, %s370
            %s372 = sld [smem:[#allocation7 + %s371]]
            %s373 = smul.u32 %s326, 64
            %s374 = sadd.s32 %s372, %s373
            %s375 = smul.addr %s374, 16
            %s376 = scalar_lea.hbm %s2, %s375
            %s377 = smul.u32 %s321, 8
            %s378 = sadd.s32 %s360, %s377
            %s379 = scalar_lea.vmem [#allocation3], %s378
            // Predicated region
            $region78: #{tpu_custom_call.1} parent=74 // pred_check
              _
            $region79: #{tpu_custom_call.1} parent=74 // pred_check_branch
              %381 = sbr.rel target = $region81
            $region80: #{tpu_custom_call.1} parent=74 // pred_region
              %382 = sst [smem:[#allocation12]] [#allocation15]
              %383 = sst [smem:[#allocation13]] [#allocation14]
            $region81: #{tpu_custom_call.1} parent=74 // pred_fallthru
              _
            %385 = shalt.err (0)
            %s387 = sshll.u32 %s379, 4
            %s388 = int_to_ptr.vmem [resolvable:$true] %s387
            %390 = dma.hbm_to_vmem [thread:$0]  %s376, 16, %s388, [#allocation4]
          $region75: #{tpu_custom_call.1} parent=56 // loop_footer
            %s364 = sadd.s32 1, %s360
          $region76: #{tpu_custom_call.1} parent=56 // loop_footer_branch
            %359 = sbr.rel target = $region72
          $region77: #{tpu_custom_call.1} parent=56 // loop_exit
            _
        $region57: #{tpu_custom_call.1} parent=47 // loop_footer
          %s325 = sadd.s32 1, %s321
        $region58: #{tpu_custom_call.1} parent=47 // loop_footer_branch
          %320 = sbr.rel target = $region54
        $region59: #{tpu_custom_call.1} parent=47 // loop_exit
          _
        loop: start=0, step=1, limit=128
        $region82: #{tpu_custom_call.1} parent=47 // loop_pre_header
          _
        $region83: #{tpu_custom_call.1} parent=47 // loop_header
          %s392 = sphi 0, %s396
          %p393 = scmp.ge.s32.totalorder %s392, 128
        $region84: #{tpu_custom_call.1} parent=47 // loop_header_branch
          %395 = sbr.rel (%p393) target = $region88
        $region85: #{tpu_custom_call.1} parent=47 // loop_body
          %s397 = smul.u32 1, 1
          %s398 = sshll.u32 %s397, 4
          %399 = dma.done [#allocation4], %s398
        $region86: #{tpu_custom_call.1} parent=47 // loop_footer
          %s396 = sadd.s32 1, %s392
        $region87: #{tpu_custom_call.1} parent=47 // loop_footer_branch
          %391 = sbr.rel target = $region83
        $region88: #{tpu_custom_call.1} parent=47 // loop_exit
          _
        %v400 = vld [vmem:[#allocation2] sm:$0xff]
        %v401 = vld [vmem:[#allocation2 + $0x8] sm:$0xff]
        %v402 = vld [vmem:[#allocation2 + $0x10] sm:$0xff]
        %v403 = vld [vmem:[#allocation2 + $0x18] sm:$0xff]
        %v404 = vld [vmem:[#allocation2 + $0x20] sm:$0xff]
        %v405 = vld [vmem:[#allocation2 + $0x28] sm:$0xff]
        %v406 = vld [vmem:[#allocation2 + $0x30] sm:$0xff]
        %v407 = vld [vmem:[#allocation2 + $0x38] sm:$0xff]
        %v408 = vld [vmem:[#allocation3] sm:$0xff]
        %v409 = vld [vmem:[#allocation3 + $0x8] sm:$0xff]
        %v410 = vld [vmem:[#allocation3 + $0x10] sm:$0xff]
        %v411 = vld [vmem:[#allocation3 + $0x18] sm:$0xff]
        %v412 = vld [vmem:[#allocation3 + $0x20] sm:$0xff]
        %v413 = vld [vmem:[#allocation3 + $0x28] sm:$0xff]
        %v414 = vld [vmem:[#allocation3 + $0x30] sm:$0xff]
        %v415 = vld [vmem:[#allocation3 + $0x38] sm:$0xff]
        %v416 = vld [vmem:[%s310] sm:$0xff]
        %v417 = vld [vmem:[%s314] sm:$0xff]
        %v418 = vld [vmem:[%s5] sm:$0xff]
        %v419 = vld [vmem:[%s5 + $0x8] sm:$0xff]
        %v420 = vld [vmem:[%s5 + $0x10] sm:$0xff]
        %v421 = vld [vmem:[%s5 + $0x18] sm:$0xff]
        %v422 = vld [vmem:[%s5 + $0x20] sm:$0xff]
        %v423 = vld [vmem:[%s5 + $0x28] sm:$0xff]
        %v424 = vld [vmem:[%s5 + $0x30] sm:$0xff]
        %v425 = vld [vmem:[%s5 + $0x38] sm:$0xff]
        %v426 = vld [vmem:[%s5 + $0x40] sm:$0xff]
        %v427 = vld [vmem:[%s5 + $0x48] sm:$0xff]
        %v428 = vld [vmem:[%s5 + $0x50] sm:$0xff]
        %v429 = vld [vmem:[%s5 + $0x58] sm:$0xff]
        %v430 = vld [vmem:[%s5 + $0x60] sm:$0xff]
        %v431 = vld [vmem:[%s5 + $0x68] sm:$0xff]
        %v432 = vld [vmem:[%s5 + $0x70] sm:$0xff]
        %v433 = vld [vmem:[%s5 + $0x78] sm:$0xff]
        %v434 = vld [vmem:[#allocation8] sm:$0xff]
        %v435 = vld [vmem:[#allocation8 + $0x8] sm:$0xff]
        %v436 = vld [vmem:[#allocation8 + $0x10] sm:$0xff]
        %v437 = vld [vmem:[#allocation8 + $0x18] sm:$0xff]
        %v438 = vld [vmem:[#allocation8 + $0x20] sm:$0xff]
        %v439 = vld [vmem:[#allocation8 + $0x28] sm:$0xff]
        %v440 = vld [vmem:[#allocation8 + $0x30] sm:$0xff]
        %v441 = vld [vmem:[#allocation8 + $0x38] sm:$0xff]
        %v442 = vld [vmem:[#allocation8 + $0x40] sm:$0xff]
        %v443 = vld [vmem:[#allocation8 + $0x48] sm:$0xff]
        %v444 = vld [vmem:[#allocation8 + $0x50] sm:$0xff]
        %v445 = vld [vmem:[#allocation8 + $0x58] sm:$0xff]
        %v446 = vld [vmem:[#allocation8 + $0x60] sm:$0xff]
        %v447 = vld [vmem:[#allocation8 + $0x68] sm:$0xff]
        %v448 = vld [vmem:[#allocation8 + $0x70] sm:$0xff]
        %v449 = vld [vmem:[#allocation8 + $0x78] sm:$0xff]
        %v450 = vld [vmem:[%s7] sm:$0x1]
        %v451 = vld [vmem:[%s8] sm:$0xff]
        %v452 = vld [vmem:[%s8 + $0x8] sm:$0xff]
        %v453 = vld [vmem:[%s8 + $0x10] sm:$0xff]
        %v454 = vld [vmem:[%s8 + $0x18] sm:$0xff]
        %v455 = vld [vmem:[%s8 + $0x20] sm:$0xff]
        %v456 = vld [vmem:[%s8 + $0x28] sm:$0xff]
        %v457 = vld [vmem:[%s8 + $0x30] sm:$0xff]
        %v458 = vld [vmem:[%s8 + $0x38] sm:$0xff]
        %v459 = vld [vmem:[%s8 + $0x40] sm:$0xff]
        %v460 = vld [vmem:[%s8 + $0x48] sm:$0xff]
        %v461 = vld [vmem:[%s8 + $0x50] sm:$0xff]
        %v462 = vld [vmem:[%s8 + $0x58] sm:$0xff]
        %v463 = vld [vmem:[%s8 + $0x60] sm:$0xff]
        %v464 = vld [vmem:[%s8 + $0x68] sm:$0xff]
        %v465 = vld [vmem:[%s8 + $0x70] sm:$0xff]
        %v466 = vld [vmem:[%s8 + $0x78] sm:$0xff]
        %v467 = vld [vmem:[%s9] sm:$0x1]
        %vm468 = vcmp.gt.s32.totalorder %v416, 0
        %v469 = vsel %vm468, 1, 0
        %v470 = vcvt.s32.f32 %v469
        %vm471 = vcmp.gt.s32.totalorder %v417, 0
        %v472 = vsel %vm471, 1, 0
        %v473 = vcvt.s32.f32 %v472
        %vm474 = vcmask 64512
        %v475 = vsel %vm474, %v470, 0.0
        %476 = vadd.xlane.f32.xlu0 %v475
        %v477 = vpop.xlane.xlu0 %476
        %v478 = vadd.f32 %v477, 1.0
        %v479 = vrcp.pop %v478
        %v480 = vmul.f32 1.0, %v479
        %v481 = vsel %vm474, %v473, 0.0
        %482 = vadd.xlane.f32.xlu0 %v481
        %v483 = vpop.xlane.xlu0 %482
        %v484 = vadd.f32 %v483, 1.0
        %v485 = vrcp.pop %v484
        %v486 = vmul.f32 1.0, %v485
        %v487 = vmul.f32 %v470, %v480
        %v488 = vmul.f32 %v473, %v486
        %489 = vmatprep.subr.mxu0 0.0
        %490 = vmatpush1.xpose.msra.mxu0 %v408
        %491 = vmatprep.subr.mxu0 0.0
        %492 = vmatpush1.xpose.msra.mxu0 0.0
        %493 = vmatprep.subr.mxu0 0.0
        %494 = vmatpush1.xpose.msra.mxu0 0.0
        %495 = vmatprep.subr.mxu0 0.0
        %496 = vmatpush1.xpose.msra.mxu0 0.0
        %497 = vmatprep.subr.mxu0 0.0
        %498 = vmatpush1.xpose.msra.mxu0 0.0
        %499 = vmatprep.subr.mxu0 0.0
        %500 = vmatpush1.xpose.msra.mxu0 0.0
        %501 = vmatprep.subr.mxu0 0.0
        %502 = vmatpush1.xpose.msra.mxu0 0.0
        %503 = vmatprep.subr.mxu0 0.0
        %504 = vmatpush1.xpose.msra.mxu0 0.0
        %505 = vmatprep.subr.mxu0 0.0
        %506 = vmatpush1.xpose.msra.mxu0 0.0
        %507 = vmatprep.subr.mxu0 0.0
        %508 = vmatpush1.xpose.msra.mxu0 0.0
        %509 = vmatprep.subr.mxu0 0.0
        %510 = vmatpush1.xpose.msra.mxu0 0.0
        %511 = vmatprep.subr.mxu0 0.0
        %512 = vmatpush1.xpose.msra.mxu0 0.0
        %513 = vmatprep.subr.mxu0 0.0
        %514 = vmatpush1.xpose.msra.mxu0 0.0
        %515 = vmatprep.subr.mxu0 0.0
        %516 = vmatpush1.xpose.msra.mxu0 0.0
        %517 = vmatprep.subr.mxu0 0.0
        %518 = vmatpush1.xpose.msra.mxu0 0.0
        %519 = vmatprep.subr.mxu0 0.0
        %520 = vmatpush1.xpose.msra.mxu0 0.0
        %521 = vmatprep.subr.mxu0 0.0
        %522 = vmatpush1.xpose.msra.mxu0 0.0
        %523 = vmatprep.subr.mxu0 0.0
        %524 = vmatpush1.xpose.msra.mxu0 0.0
        %525 = vmatprep.subr.mxu0 0.0
        %526 = vmatpush1.xpose.msra.mxu0 0.0
        %527 = vmatprep.subr.mxu0 0.0
        %528 = vmatpush1.xpose.msra.mxu0 0.0
        %529 = vmatprep.subr.mxu0 0.0
        %530 = vmatpush1.xpose.msra.mxu0 0.0
        %531 = vmatprep.subr.mxu0 0.0
        %532 = vmatpush1.xpose.msra.mxu0 0.0
        %533 = vmatprep.subr.mxu0 0.0
        %534 = vmatpush1.xpose.msra.mxu0 0.0
        %535 = vmatprep.subr.mxu0 0.0
        %536 = vmatpush1.xpose.msra.mxu0 0.0
        %537 = vmatprep.subr.mxu0 0.0
        %538 = vmatpush1.xpose.msra.mxu0 0.0
        %539 = vmatprep.subr.mxu0 0.0
        %540 = vmatpush1.xpose.msra.mxu0 0.0
        %541 = vmatprep.subr.mxu0 0.0
        %542 = vmatpush1.xpose.msra.mxu0 0.0
        %543 = vmatprep.subr.mxu0 0.0
        %544 = vmatpush1.xpose.msra.mxu0 0.0
        %545 = vmatprep.subr.mxu0 0.0
        %546 = vmatpush1.xpose.msra.mxu0 0.0
        %547 = vmatprep.subr.mxu0 0.0
        %548 = vmatpush1.xpose.msra.mxu0 0.0
        %549 = vmatprep.subr.mxu0 0.0
        %550 = vmatpush1.xpose.msra.mxu0 0.0
        %551 = vmatprep.subr.mxu0 0.0
        %552 = vmatpush1.xpose.msra.mxu0 0.0
        %553 = vmatprep.mubr.f32.mxu0 0.0
        %554 = vmatmul.mubr.f32.gmra.mrb[0].mxu0 %v400
        %v555 = vpop.f32.mrb[0].mxu0
        %v556 = vadd.f32 0.0, %v555
        %v557 = vpop.f32.mrb[0].mxu0
        %558 = vdwg.mxu0
        %559 = vmatprep.subr.mxu0 0.0
        %560 = vmatpush1.xpose.msra.mxu0 %v409
        %561 = vmatprep.subr.mxu0 0.0
        %562 = vmatpush1.xpose.msra.mxu0 0.0
        %563 = vmatprep.subr.mxu0 0.0
        %564 = vmatpush1.xpose.msra.mxu0 0.0
        %565 = vmatprep.subr.mxu0 0.0
        %566 = vmatpush1.xpose.msra.mxu0 0.0
        %567 = vmatprep.subr.mxu0 0.0
        %568 = vmatpush1.xpose.msra.mxu0 0.0
        %569 = vmatprep.subr.mxu0 0.0
        %570 = vmatpush1.xpose.msra.mxu0 0.0
        %571 = vmatprep.subr.mxu0 0.0
        %572 = vmatpush1.xpose.msra.mxu0 0.0
        %573 = vmatprep.subr.mxu0 0.0
        %574 = vmatpush1.xpose.msra.mxu0 0.0
        %575 = vmatprep.subr.mxu0 0.0
        %576 = vmatpush1.xpose.msra.mxu0 0.0
        %577 = vmatprep.subr.mxu0 0.0
        %578 = vmatpush1.xpose.msra.mxu0 0.0
        %579 = vmatprep.subr.mxu0 0.0
        %580 = vmatpush1.xpose.msra.mxu0 0.0
        %581 = vmatprep.subr.mxu0 0.0
        %582 = vmatpush1.xpose.msra.mxu0 0.0
        %583 = vmatprep.subr.mxu0 0.0
        %584 = vmatpush1.xpose.msra.mxu0 0.0
        %585 = vmatprep.subr.mxu0 0.0
        %586 = vmatpush1.xpose.msra.mxu0 0.0
        %587 = vmatprep.subr.mxu0 0.0
        %588 = vmatpush1.xpose.msra.mxu0 0.0
        %589 = vmatprep.subr.mxu0 0.0
        %590 = vmatpush1.xpose.msra.mxu0 0.0
        %591 = vmatprep.subr.mxu0 0.0
        %592 = vmatpush1.xpose.msra.mxu0 0.0
        %593 = vmatprep.subr.mxu0 0.0
        %594 = vmatpush1.xpose.msra.mxu0 0.0
        %595 = vmatprep.subr.mxu0 0.0
        %596 = vmatpush1.xpose.msra.mxu0 0.0
        %597 = vmatprep.subr.mxu0 0.0
        %598 = vmatpush1.xpose.msra.mxu0 0.0
        %599 = vmatprep.subr.mxu0 0.0
        %600 = vmatpush1.xpose.msra.mxu0 0.0
        %601 = vmatprep.subr.mxu0 0.0
        %602 = vmatpush1.xpose.msra.mxu0 0.0
        %603 = vmatprep.subr.mxu0 0.0
        %604 = vmatpush1.xpose.msra.mxu0 0.0
        %605 = vmatprep.subr.mxu0 0.0
        %606 = vmatpush1.xpose.msra.mxu0 0.0
        %607 = vmatprep.subr.mxu0 0.0
        %608 = vmatpush1.xpose.msra.mxu0 0.0
        %609 = vmatprep.subr.mxu0 0.0
        %610 = vmatpush1.xpose.msra.mxu0 0.0
        %611 = vmatprep.subr.mxu0 0.0
        %612 = vmatpush1.xpose.msra.mxu0 0.0
        %613 = vmatprep.subr.mxu0 0.0
        %614 = vmatpush1.xpose.msra.mxu0 0.0
        %615 = vmatprep.subr.mxu0 0.0
        %616 = vmatpush1.xpose.msra.mxu0 0.0
        %617 = vmatprep.subr.mxu0 0.0
        %618 = vmatpush1.xpose.msra.mxu0 0.0
        %619 = vmatprep.subr.mxu0 0.0
        %620 = vmatpush1.xpose.msra.mxu0 0.0
        %621 = vmatprep.subr.mxu0 0.0
        %622 = vmatpush1.xpose.msra.mxu0 0.0
        %623 = vmatprep.mubr.f32.mxu0 0.0
        %624 = vmatmul.mubr.f32.gmra.mrb[0].mxu0 %v401
        %v625 = vpop.f32.mrb[0].mxu0
        %v626 = vadd.f32 0.0, %v625
        %v627 = vpop.f32.mrb[0].mxu0
        %628 = vdwg.mxu0
        %629 = vmatprep.subr.mxu0 0.0
        %630 = vmatpush1.xpose.msra.mxu0 %v410
        %631 = vmatprep.subr.mxu0 0.0
        %632 = vmatpush1.xpose.msra.mxu0 0.0
        %633 = vmatprep.subr.mxu0 0.0
        %634 = vmatpush1.xpose.msra.mxu0 0.0
        %635 = vmatprep.subr.mxu0 0.0
        %636 = vmatpush1.xpose.msra.mxu0 0.0
        %637 = vmatprep.subr.mxu0 0.0
        %638 = vmatpush1.xpose.msra.mxu0 0.0
        %639 = vmatprep.subr.mxu0 0.0
        %640 = vmatpush1.xpose.msra.mxu0 0.0
        %641 = vmatprep.subr.mxu0 0.0
        %642 = vmatpush1.xpose.msra.mxu0 0.0
        %643 = vmatprep.subr.mxu0 0.0
        %644 = vmatpush1.xpose.msra.mxu0 0.0
        %645 = vmatprep.subr.mxu0 0.0
        %646 = vmatpush1.xpose.msra.mxu0 0.0
        %647 = vmatprep.subr.mxu0 0.0
        %648 = vmatpush1.xpose.msra.mxu0 0.0
        %649 = vmatprep.subr.mxu0 0.0
        %650 = vmatpush1.xpose.msra.mxu0 0.0
        %651 = vmatprep.subr.mxu0 0.0
        %652 = vmatpush1.xpose.msra.mxu0 0.0
        %653 = vmatprep.subr.mxu0 0.0
        %654 = vmatpush1.xpose.msra.mxu0 0.0
        %655 = vmatprep.subr.mxu0 0.0
        %656 = vmatpush1.xpose.msra.mxu0 0.0
        %657 = vmatprep.subr.mxu0 0.0
        %658 = vmatpush1.xpose.msra.mxu0 0.0
        %659 = vmatprep.subr.mxu0 0.0
        %660 = vmatpush1.xpose.msra.mxu0 0.0
        %661 = vmatprep.subr.mxu0 0.0
        %662 = vmatpush1.xpose.msra.mxu0 0.0
        %663 = vmatprep.subr.mxu0 0.0
        %664 = vmatpush1.xpose.msra.mxu0 0.0
        %665 = vmatprep.subr.mxu0 0.0
        %666 = vmatpush1.xpose.msra.mxu0 0.0
        %667 = vmatprep.subr.mxu0 0.0
        %668 = vmatpush1.xpose.msra.mxu0 0.0
        %669 = vmatprep.subr.mxu0 0.0
        %670 = vmatpush1.xpose.msra.mxu0 0.0
        %671 = vmatprep.subr.mxu0 0.0
        %672 = vmatpush1.xpose.msra.mxu0 0.0
        %673 = vmatprep.subr.mxu0 0.0
        %674 = vmatpush1.xpose.msra.mxu0 0.0
        %675 = vmatprep.subr.mxu0 0.0
        %676 = vmatpush1.xpose.msra.mxu0 0.0
        %677 = vmatprep.subr.mxu0 0.0
        %678 = vmatpush1.xpose.msra.mxu0 0.0
        %679 = vmatprep.subr.mxu0 0.0
        %680 = vmatpush1.xpose.msra.mxu0 0.0
        %681 = vmatprep.subr.mxu0 0.0
        %682 = vmatpush1.xpose.msra.mxu0 0.0
        %683 = vmatprep.subr.mxu0 0.0
        %684 = vmatpush1.xpose.msra.mxu0 0.0
        %685 = vmatprep.subr.mxu0 0.0
        %686 = vmatpush1.xpose.msra.mxu0 0.0
        %687 = vmatprep.subr.mxu0 0.0
        %688 = vmatpush1.xpose.msra.mxu0 0.0
        %689 = vmatprep.subr.mxu0 0.0
        %690 = vmatpush1.xpose.msra.mxu0 0.0
        %691 = vmatprep.subr.mxu0 0.0
        %692 = vmatpush1.xpose.msra.mxu0 0.0
        %693 = vmatprep.mubr.f32.mxu0 0.0
        %694 = vmatmul.mubr.f32.gmra.mrb[0].mxu0 %v402
        %v695 = vpop.f32.mrb[0].mxu0
        %v696 = vadd.f32 0.0, %v695
        %v697 = vpop.f32.mrb[0].mxu0
        %698 = vdwg.mxu0
        %699 = vmatprep.subr.mxu0 0.0
        %700 = vmatpush1.xpose.msra.mxu0 %v411
        %701 = vmatprep.subr.mxu0 0.0
        %702 = vmatpush1.xpose.msra.mxu0 0.0
        %703 = vmatprep.subr.mxu0 0.0
        %704 = vmatpush1.xpose.msra.mxu0 0.0
        %705 = vmatprep.subr.mxu0 0.0
        %706 = vmatpush1.xpose.msra.mxu0 0.0
        %707 = vmatprep.subr.mxu0 0.0
        %708 = vmatpush1.xpose.msra.mxu0 0.0
        %709 = vmatprep.subr.mxu0 0.0
        %710 = vmatpush1.xpose.msra.mxu0 0.0
        %711 = vmatprep.subr.mxu0 0.0
        %712 = vmatpush1.xpose.msra.mxu0 0.0
        %713 = vmatprep.subr.mxu0 0.0
        %714 = vmatpush1.xpose.msra.mxu0 0.0
        %715 = vmatprep.subr.mxu0 0.0
        %716 = vmatpush1.xpose.msra.mxu0 0.0
        %717 = vmatprep.subr.mxu0 0.0
        %718 = vmatpush1.xpose.msra.mxu0 0.0
        %719 = vmatprep.subr.mxu0 0.0
        %720 = vmatpush1.xpose.msra.mxu0 0.0
        %721 = vmatprep.subr.mxu0 0.0
        %722 = vmatpush1.xpose.msra.mxu0 0.0
        %723 = vmatprep.subr.mxu0 0.0
        %724 = vmatpush1.xpose.msra.mxu0 0.0
        %725 = vmatprep.subr.mxu0 0.0
        %726 = vmatpush1.xpose.msra.mxu0 0.0
        %727 = vmatprep.subr.mxu0 0.0
        %728 = vmatpush1.xpose.msra.mxu0 0.0
        %729 = vmatprep.subr.mxu0 0.0
        %730 = vmatpush1.xpose.msra.mxu0 0.0
        %731 = vmatprep.subr.mxu0 0.0
        %732 = vmatpush1.xpose.msra.mxu0 0.0
        %733 = vmatprep.subr.mxu0 0.0
        %734 = vmatpush1.xpose.msra.mxu0 0.0
        %735 = vmatprep.subr.mxu0 0.0
        %736 = vmatpush1.xpose.msra.mxu0 0.0
        %737 = vmatprep.subr.mxu0 0.0
        %738 = vmatpush1.xpose.msra.mxu0 0.0
        %739 = vmatprep.subr.mxu0 0.0
        %740 = vmatpush1.xpose.msra.mxu0 0.0
        %741 = vmatprep.subr.mxu0 0.0
        %742 = vmatpush1.xpose.msra.mxu0 0.0
        %743 = vmatprep.subr.mxu0 0.0
        %744 = vmatpush1.xpose.msra.mxu0 0.0
        %745 = vmatprep.subr.mxu0 0.0
        %746 = vmatpush1.xpose.msra.mxu0 0.0
        %747 = vmatprep.subr.mxu0 0.0
        %748 = vmatpush1.xpose.msra.mxu0 0.0
        %749 = vmatprep.subr.mxu0 0.0
        %750 = vmatpush1.xpose.msra.mxu0 0.0
        %751 = vmatprep.subr.mxu0 0.0
        %752 = vmatpush1.xpose.msra.mxu0 0.0
        %753 = vmatprep.subr.mxu0 0.0
        %754 = vmatpush1.xpose.msra.mxu0 0.0
        %755 = vmatprep.subr.mxu0 0.0
        %756 = vmatpush1.xpose.msra.mxu0 0.0
        %757 = vmatprep.subr.mxu0 0.0
        %758 = vmatpush1.xpose.msra.mxu0 0.0
        %759 = vmatprep.subr.mxu0 0.0
        %760 = vmatpush1.xpose.msra.mxu0 0.0
        %761 = vmatprep.subr.mxu0 0.0
        %762 = vmatpush1.xpose.msra.mxu0 0.0
        %763 = vmatprep.mubr.f32.mxu0 0.0
        %764 = vmatmul.mubr.f32.gmra.mrb[0].mxu0 %v403
        %v765 = vpop.f32.mrb[0].mxu0
        %v766 = vadd.f32 0.0, %v765
        %v767 = vpop.f32.mrb[0].mxu0
        %768 = vdwg.mxu0
        %769 = vmatprep.subr.mxu0 0.0
        %770 = vmatpush1.xpose.msra.mxu0 %v412
        %771 = vmatprep.subr.mxu0 0.0
        %772 = vmatpush1.xpose.msra.mxu0 0.0
        %773 = vmatprep.subr.mxu0 0.0
        %774 = vmatpush1.xpose.msra.mxu0 0.0
        %775 = vmatprep.subr.mxu0 0.0
        %776 = vmatpush1.xpose.msra.mxu0 0.0
        %777 = vmatprep.subr.mxu0 0.0
        %778 = vmatpush1.xpose.msra.mxu0 0.0
        %779 = vmatprep.subr.mxu0 0.0
        %780 = vmatpush1.xpose.msra.mxu0 0.0
        %781 = vmatprep.subr.mxu0 0.0
        %782 = vmatpush1.xpose.msra.mxu0 0.0
        %783 = vmatprep.subr.mxu0 0.0
        %784 = vmatpush1.xpose.msra.mxu0 0.0
        %785 = vmatprep.subr.mxu0 0.0
        %786 = vmatpush1.xpose.msra.mxu0 0.0
        %787 = vmatprep.subr.mxu0 0.0
        %788 = vmatpush1.xpose.msra.mxu0 0.0
        %789 = vmatprep.subr.mxu0 0.0
        %790 = vmatpush1.xpose.msra.mxu0 0.0
        %791 = vmatprep.subr.mxu0 0.0
        %792 = vmatpush1.xpose.msra.mxu0 0.0
        %793 = vmatprep.subr.mxu0 0.0
        %794 = vmatpush1.xpose.msra.mxu0 0.0
        %795 = vmatprep.subr.mxu0 0.0
        %796 = vmatpush1.xpose.msra.mxu0 0.0
        %797 = vmatprep.subr.mxu0 0.0
        %798 = vmatpush1.xpose.msra.mxu0 0.0
        %799 = vmatprep.subr.mxu0 0.0
        %800 = vmatpush1.xpose.msra.mxu0 0.0
        %801 = vmatprep.subr.mxu0 0.0
        %802 = vmatpush1.xpose.msra.mxu0 0.0
        %803 = vmatprep.subr.mxu0 0.0
        %804 = vmatpush1.xpose.msra.mxu0 0.0
        %805 = vmatprep.subr.mxu0 0.0
        %806 = vmatpush1.xpose.msra.mxu0 0.0
        %807 = vmatprep.subr.mxu0 0.0
        %808 = vmatpush1.xpose.msra.mxu0 0.0
        %809 = vmatprep.subr.mxu0 0.0
        %810 = vmatpush1.xpose.msra.mxu0 0.0
        %811 = vmatprep.subr.mxu0 0.0
        %812 = vmatpush1.xpose.msra.mxu0 0.0
        %813 = vmatprep.subr.mxu0 0.0
        %814 = vmatpush1.xpose.msra.mxu0 0.0
        %815 = vmatprep.subr.mxu0 0.0
        %816 = vmatpush1.xpose.msra.mxu0 0.0
        %817 = vmatprep.subr.mxu0 0.0
        %818 = vmatpush1.xpose.msra.mxu0 0.0
        %819 = vmatprep.subr.mxu0 0.0
        %820 = vmatpush1.xpose.msra.mxu0 0.0
        %821 = vmatprep.subr.mxu0 0.0
        %822 = vmatpush1.xpose.msra.mxu0 0.0
        %823 = vmatprep.subr.mxu0 0.0
        %824 = vmatpush1.xpose.msra.mxu0 0.0
        %825 = vmatprep.subr.mxu0 0.0
        %826 = vmatpush1.xpose.msra.mxu0 0.0
        %827 = vmatprep.subr.mxu0 0.0
        %828 = vmatpush1.xpose.msra.mxu0 0.0
        %829 = vmatprep.subr.mxu0 0.0
        %830 = vmatpush1.xpose.msra.mxu0 0.0
        %831 = vmatprep.subr.mxu0 0.0
        %832 = vmatpush1.xpose.msra.mxu0 0.0
        %833 = vmatprep.mubr.f32.mxu0 0.0
        %834 = vmatmul.mubr.f32.gmra.mrb[0].mxu0 %v404
        %v835 = vpop.f32.mrb[0].mxu0
        %v836 = vadd.f32 0.0, %v835
        %v837 = vpop.f32.mrb[0].mxu0
        %838 = vdwg.mxu0
        %839 = vmatprep.subr.mxu0 0.0
        %840 = vmatpush1.xpose.msra.mxu0 %v413
        %841 = vmatprep.subr.mxu0 0.0
        %842 = vmatpush1.xpose.msra.mxu0 0.0
        %843 = vmatprep.subr.mxu0 0.0
        %844 = vmatpush1.xpose.msra.mxu0 0.0
        %845 = vmatprep.subr.mxu0 0.0
        %846 = vmatpush1.xpose.msra.mxu0 0.0
        %847 = vmatprep.subr.mxu0 0.0
        %848 = vmatpush1.xpose.msra.mxu0 0.0
        %849 = vmatprep.subr.mxu0 0.0
        %850 = vmatpush1.xpose.msra.mxu0 0.0
        %851 = vmatprep.subr.mxu0 0.0
        %852 = vmatpush1.xpose.msra.mxu0 0.0
        %853 = vmatprep.subr.mxu0 0.0
        %854 = vmatpush1.xpose.msra.mxu0 0.0
        %855 = vmatprep.subr.mxu0 0.0
        %856 = vmatpush1.xpose.msra.mxu0 0.0
        %857 = vmatprep.subr.mxu0 0.0
        %858 = vmatpush1.xpose.msra.mxu0 0.0
        %859 = vmatprep.subr.mxu0 0.0
        %860 = vmatpush1.xpose.msra.mxu0 0.0
        %861 = vmatprep.subr.mxu0 0.0
        %862 = vmatpush1.xpose.msra.mxu0 0.0
        %863 = vmatprep.subr.mxu0 0.0
        %864 = vmatpush1.xpose.msra.mxu0 0.0
        %865 = vmatprep.subr.mxu0 0.0
        %866 = vmatpush1.xpose.msra.mxu0 0.0
        %867 = vmatprep.subr.mxu0 0.0
        %868 = vmatpush1.xpose.msra.mxu0 0.0
        %869 = vmatprep.subr.mxu0 0.0
        %870 = vmatpush1.xpose.msra.mxu0 0.0
        %871 = vmatprep.subr.mxu0 0.0
        %872 = vmatpush1.xpose.msra.mxu0 0.0
        %873 = vmatprep.subr.mxu0 0.0
        %874 = vmatpush1.xpose.msra.mxu0 0.0
        %875 = vmatprep.subr.mxu0 0.0
        %876 = vmatpush1.xpose.msra.mxu0 0.0
        %877 = vmatprep.subr.mxu0 0.0
        %878 = vmatpush1.xpose.msra.mxu0 0.0
        %879 = vmatprep.subr.mxu0 0.0
        %880 = vmatpush1.xpose.msra.mxu0 0.0
        %881 = vmatprep.subr.mxu0 0.0
        %882 = vmatpush1.xpose.msra.mxu0 0.0
        %883 = vmatprep.subr.mxu0 0.0
        %884 = vmatpush1.xpose.msra.mxu0 0.0
        %885 = vmatprep.subr.mxu0 0.0
        %886 = vmatpush1.xpose.msra.mxu0 0.0
        %887 = vmatprep.subr.mxu0 0.0
        %888 = vmatpush1.xpose.msra.mxu0 0.0
        %889 = vmatprep.subr.mxu0 0.0
        %890 = vmatpush1.xpose.msra.mxu0 0.0
        %891 = vmatprep.subr.mxu0 0.0
        %892 = vmatpush1.xpose.msra.mxu0 0.0
        %893 = vmatprep.subr.mxu0 0.0
        %894 = vmatpush1.xpose.msra.mxu0 0.0
        %895 = vmatprep.subr.mxu0 0.0
        %896 = vmatpush1.xpose.msra.mxu0 0.0
        %897 = vmatprep.subr.mxu0 0.0
        %898 = vmatpush1.xpose.msra.mxu0 0.0
        %899 = vmatprep.subr.mxu0 0.0
        %900 = vmatpush1.xpose.msra.mxu0 0.0
        %901 = vmatprep.subr.mxu0 0.0
        %902 = vmatpush1.xpose.msra.mxu0 0.0
        %903 = vmatprep.mubr.f32.mxu0 0.0
        %904 = vmatmul.mubr.f32.gmra.mrb[0].mxu0 %v405
        %v905 = vpop.f32.mrb[0].mxu0
        %v906 = vadd.f32 0.0, %v905
        %v907 = vpop.f32.mrb[0].mxu0
        %908 = vdwg.mxu0
        %909 = vmatprep.subr.mxu0 0.0
        %910 = vmatpush1.xpose.msra.mxu0 %v414
        %911 = vmatprep.subr.mxu0 0.0
        %912 = vmatpush1.xpose.msra.mxu0 0.0
        %913 = vmatprep.subr.mxu0 0.0
        %914 = vmatpush1.xpose.msra.mxu0 0.0
        %915 = vmatprep.subr.mxu0 0.0
        %916 = vmatpush1.xpose.msra.mxu0 0.0
        %917 = vmatprep.subr.mxu0 0.0
        %918 = vmatpush1.xpose.msra.mxu0 0.0
        %919 = vmatprep.subr.mxu0 0.0
        %920 = vmatpush1.xpose.msra.mxu0 0.0
        %921 = vmatprep.subr.mxu0 0.0
        %922 = vmatpush1.xpose.msra.mxu0 0.0
        %923 = vmatprep.subr.mxu0 0.0
        %924 = vmatpush1.xpose.msra.mxu0 0.0
        %925 = vmatprep.subr.mxu0 0.0
        %926 = vmatpush1.xpose.msra.mxu0 0.0
        %927 = vmatprep.subr.mxu0 0.0
        %928 = vmatpush1.xpose.msra.mxu0 0.0
        %929 = vmatprep.subr.mxu0 0.0
        %930 = vmatpush1.xpose.msra.mxu0 0.0
        %931 = vmatprep.subr.mxu0 0.0
        %932 = vmatpush1.xpose.msra.mxu0 0.0
        %933 = vmatprep.subr.mxu0 0.0
        %934 = vmatpush1.xpose.msra.mxu0 0.0
        %935 = vmatprep.subr.mxu0 0.0
        %936 = vmatpush1.xpose.msra.mxu0 0.0
        %937 = vmatprep.subr.mxu0 0.0
        %938 = vmatpush1.xpose.msra.mxu0 0.0
        %939 = vmatprep.subr.mxu0 0.0
        %940 = vmatpush1.xpose.msra.mxu0 0.0
        %941 = vmatprep.subr.mxu0 0.0
        %942 = vmatpush1.xpose.msra.mxu0 0.0
        %943 = vmatprep.subr.mxu0 0.0
        %944 = vmatpush1.xpose.msra.mxu0 0.0
        %945 = vmatprep.subr.mxu0 0.0
        %946 = vmatpush1.xpose.msra.mxu0 0.0
        %947 = vmatprep.subr.mxu0 0.0
        %948 = vmatpush1.xpose.msra.mxu0 0.0
        %949 = vmatprep.subr.mxu0 0.0
        %950 = vmatpush1.xpose.msra.mxu0 0.0
        %951 = vmatprep.subr.mxu0 0.0
        %952 = vmatpush1.xpose.msra.mxu0 0.0
        %953 = vmatprep.subr.mxu0 0.0
        %954 = vmatpush1.xpose.msra.mxu0 0.0
        %955 = vmatprep.subr.mxu0 0.0
        %956 = vmatpush1.xpose.msra.mxu0 0.0
        %957 = vmatprep.subr.mxu0 0.0
        %958 = vmatpush1.xpose.msra.mxu0 0.0
        %959 = vmatprep.subr.mxu0 0.0
        %960 = vmatpush1.xpose.msra.mxu0 0.0
        %961 = vmatprep.subr.mxu0 0.0
        %962 = vmatpush1.xpose.msra.mxu0 0.0
        %963 = vmatprep.subr.mxu0 0.0
        %964 = vmatpush1.xpose.msra.mxu0 0.0
        %965 = vmatprep.subr.mxu0 0.0
        %966 = vmatpush1.xpose.msra.mxu0 0.0
        %967 = vmatprep.subr.mxu0 0.0
        %968 = vmatpush1.xpose.msra.mxu0 0.0
        %969 = vmatprep.subr.mxu0 0.0
        %970 = vmatpush1.xpose.msra.mxu0 0.0
        %971 = vmatprep.subr.mxu0 0.0
        %972 = vmatpush1.xpose.msra.mxu0 0.0
        %973 = vmatprep.mubr.f32.mxu0 0.0
        %974 = vmatmul.mubr.f32.gmra.mrb[0].mxu0 %v406
        %v975 = vpop.f32.mrb[0].mxu0
        %v976 = vadd.f32 0.0, %v975
        %v977 = vpop.f32.mrb[0].mxu0
        %978 = vdwg.mxu0
        %979 = vmatprep.subr.mxu0 0.0
        %980 = vmatpush1.xpose.msra.mxu0 %v415
        %981 = vmatprep.subr.mxu0 0.0
        %982 = vmatpush1.xpose.msra.mxu0 0.0
        %983 = vmatprep.subr.mxu0 0.0
        %984 = vmatpush1.xpose.msra.mxu0 0.0
        %985 = vmatprep.subr.mxu0 0.0
        %986 = vmatpush1.xpose.msra.mxu0 0.0
        %987 = vmatprep.subr.mxu0 0.0
        %988 = vmatpush1.xpose.msra.mxu0 0.0
        %989 = vmatprep.subr.mxu0 0.0
        %990 = vmatpush1.xpose.msra.mxu0 0.0
        %991 = vmatprep.subr.mxu0 0.0
        %992 = vmatpush1.xpose.msra.mxu0 0.0
        %993 = vmatprep.subr.mxu0 0.0
        %994 = vmatpush1.xpose.msra.mxu0 0.0
        %995 = vmatprep.subr.mxu0 0.0
        %996 = vmatpush1.xpose.msra.mxu0 0.0
        %997 = vmatprep.subr.mxu0 0.0
        %998 = vmatpush1.xpose.msra.mxu0 0.0
        %999 = vmatprep.subr.mxu0 0.0
        %1000 = vmatpush1.xpose.msra.mxu0 0.0
        %1001 = vmatprep.subr.mxu0 0.0
        %1002 = vmatpush1.xpose.msra.mxu0 0.0
        %1003 = vmatprep.subr.mxu0 0.0
        %1004 = vmatpush1.xpose.msra.mxu0 0.0
        %1005 = vmatprep.subr.mxu0 0.0
        %1006 = vmatpush1.xpose.msra.mxu0 0.0
        %1007 = vmatprep.subr.mxu0 0.0
        %1008 = vmatpush1.xpose.msra.mxu0 0.0
        %1009 = vmatprep.subr.mxu0 0.0
        %1010 = vmatpush1.xpose.msra.mxu0 0.0
        %1011 = vmatprep.subr.mxu0 0.0
        %1012 = vmatpush1.xpose.msra.mxu0 0.0
        %1013 = vmatprep.subr.mxu0 0.0
        %1014 = vmatpush1.xpose.msra.mxu0 0.0
        %1015 = vmatprep.subr.mxu0 0.0
        %1016 = vmatpush1.xpose.msra.mxu0 0.0
        %1017 = vmatprep.subr.mxu0 0.0
        %1018 = vmatpush1.xpose.msra.mxu0 0.0
        %1019 = vmatprep.subr.mxu0 0.0
        %1020 = vmatpush1.xpose.msra.mxu0 0.0
        %1021 = vmatprep.subr.mxu0 0.0
        %1022 = vmatpush1.xpose.msra.mxu0 0.0
        %1023 = vmatprep.subr.mxu0 0.0
        %1024 = vmatpush1.xpose.msra.mxu0 0.0
        %1025 = vmatprep.subr.mxu0 0.0
        %1026 = vmatpush1.xpose.msra.mxu0 0.0
        %1027 = vmatprep.subr.mxu0 0.0
        %1028 = vmatpush1.xpose.msra.mxu0 0.0
        %1029 = vmatprep.subr.mxu0 0.0
        %1030 = vmatpush1.xpose.msra.mxu0 0.0
        %1031 = vmatprep.subr.mxu0 0.0
        %1032 = vmatpush1.xpose.msra.mxu0 0.0
        %1033 = vmatprep.subr.mxu0 0.0
        %1034 = vmatpush1.xpose.msra.mxu0 0.0
        %1035 = vmatprep.subr.mxu0 0.0
        %1036 = vmatpush1.xpose.msra.mxu0 0.0
        %1037 = vmatprep.subr.mxu0 0.0
        %1038 = vmatpush1.xpose.msra.mxu0 0.0
        %1039 = vmatprep.subr.mxu0 0.0
        %1040 = vmatpush1.xpose.msra.mxu0 0.0
        %1041 = vmatprep.subr.mxu0 0.0
        %1042 = vmatpush1.xpose.msra.mxu0 0.0
        %1043 = vmatprep.mubr.f32.mxu0 0.0
        %1044 = vmatmul.mubr.f32.gmra.mrb[0].mxu0 %v407
        %v1045 = vpop.f32.mrb[0].mxu0
        %v1046 = vadd.f32 0.0, %v1045
        %v1047 = vpop.f32.mrb[0].mxu0
        %1048 = vdwg.mxu0
        %v1049 = vmul.f32 %v400, %v400
        %v1050 = vmul.f32 %v401, %v401
        %v1051 = vmul.f32 %v402, %v402
        %v1052 = vmul.f32 %v403, %v403
        %v1053 = vmul.f32 %v404, %v404
        %v1054 = vmul.f32 %v405, %v405
        %v1055 = vmul.f32 %v406, %v406
        %v1056 = vmul.f32 %v407, %v407
        %1057 = vadd.xlane.f32.xlu0 %v1049
        %v1058 = vpop.xlane.xlu0 %1057
        %1059 = vadd.xlane.f32.xlu0 %v1050
        %v1060 = vpop.xlane.xlu0 %1059
        %1061 = vadd.xlane.f32.xlu0 %v1051
        %v1062 = vpop.xlane.xlu0 %1061
        %1063 = vadd.xlane.f32.xlu0 %v1052
        %v1064 = vpop.xlane.xlu0 %1063
        %1065 = vadd.xlane.f32.xlu0 %v1053
        %v1066 = vpop.xlane.xlu0 %1065
        %1067 = vadd.xlane.f32.xlu0 %v1054
        %v1068 = vpop.xlane.xlu0 %1067
        %1069 = vadd.xlane.f32.xlu0 %v1055
        %v1070 = vpop.xlane.xlu0 %1069
        %1071 = vadd.xlane.f32.xlu0 %v1056
        %v1072 = vpop.xlane.xlu0 %1071
        %v1073 = vmul.f32 %v408, %v408
        %v1074 = vmul.f32 %v409, %v409
        %v1075 = vmul.f32 %v410, %v410
        %v1076 = vmul.f32 %v411, %v411
        %v1077 = vmul.f32 %v412, %v412
        %v1078 = vmul.f32 %v413, %v413
        %v1079 = vmul.f32 %v414, %v414
        %v1080 = vmul.f32 %v415, %v415
        %1081 = vadd.xlane.f32.xlu0 %v1073
        %v1082 = vpop.xlane.xlu0 %1081
        %1083 = vadd.xlane.f32.xlu0 %v1074
        %v1084 = vpop.xlane.xlu0 %1083
        %1085 = vadd.xlane.f32.xlu0 %v1075
        %v1086 = vpop.xlane.xlu0 %1085
        %1087 = vadd.xlane.f32.xlu0 %v1076
        %v1088 = vpop.xlane.xlu0 %1087
        %1089 = vadd.xlane.f32.xlu0 %v1077
        %v1090 = vpop.xlane.xlu0 %1089
        %1091 = vadd.xlane.f32.xlu0 %v1078
        %v1092 = vpop.xlane.xlu0 %1091
        %1093 = vadd.xlane.f32.xlu0 %v1079
        %v1094 = vpop.xlane.xlu0 %1093
        %1095 = vadd.xlane.f32.xlu0 %v1080
        %v1096 = vpop.xlane.xlu0 %1095
        %v1105 = vlaneseq
        %v1106 = vand.u32 %v1105, 127
        %v1107 = vlaneseq
        %v1108 = vshrl.u32 %v1107, 7
        %v1109 = vsub.s32 %v1106, %v1108
        %v1110 = vrot.slane %v1082, %v1109
        %v1111 = vlaneseq
        %v1112 = vshrl.u32 %v1111, 7
        %v1113 = vsub.s32 %v1106, %v1112
        %v1114 = vrot.slane %v1084, %v1113
        %v1115 = vlaneseq
        %v1116 = vshrl.u32 %v1115, 7
        %v1117 = vsub.s32 %v1106, %v1116
        %v1118 = vrot.slane %v1086, %v1117
        %v1119 = vlaneseq
        %v1120 = vshrl.u32 %v1119, 7
        %v1121 = vsub.s32 %v1106, %v1120
        %v1122 = vrot.slane %v1088, %v1121
        %v1123 = vlaneseq
        %v1124 = vshrl.u32 %v1123, 7
        %v1125 = vsub.s32 %v1106, %v1124
        %v1126 = vrot.slane %v1090, %v1125
        %v1127 = vlaneseq
        %v1128 = vshrl.u32 %v1127, 7
        %v1129 = vsub.s32 %v1106, %v1128
        %v1130 = vrot.slane %v1092, %v1129
        %v1131 = vlaneseq
        %v1132 = vshrl.u32 %v1131, 7
        %v1133 = vsub.s32 %v1106, %v1132
        %v1134 = vrot.slane %v1094, %v1133
        %v1135 = vlaneseq
        %v1136 = vshrl.u32 %v1135, 7
        %v1137 = vsub.s32 %v1106, %v1136
        %v1138 = vrot.slane %v1096, %v1137
        %vm1139 = vcmask 1041409
        %vm1140 = vcmask 1042434
        %v1141 = vsel %vm1140, %v1110, %v1110
        %vm1142 = vcmask 1043459
        %v1143 = vsel %vm1142, %v1110, %v1141
        %vm1144 = vcmask 1044484
        %v1145 = vsel %vm1144, %v1110, %v1143
        %vm1146 = vcmask 1045509
        %v1147 = vsel %vm1146, %v1110, %v1145
        %vm1148 = vcmask 1046534
        %v1149 = vsel %vm1148, %v1110, %v1147
        %vm1150 = vcmask 1047559
        %v1151 = vsel %vm1150, %v1110, %v1149
        %v1152 = vsel %vm1140, %v1114, %v1114
        %v1153 = vsel %vm1142, %v1114, %v1152
        %v1154 = vsel %vm1144, %v1114, %v1153
        %v1155 = vsel %vm1146, %v1114, %v1154
        %v1156 = vsel %vm1148, %v1114, %v1155
        %v1157 = vsel %vm1150, %v1114, %v1156
        %v1158 = vsel %vm1140, %v1118, %v1118
        %v1159 = vsel %vm1142, %v1118, %v1158
        %v1160 = vsel %vm1144, %v1118, %v1159
        %v1161 = vsel %vm1146, %v1118, %v1160
        %v1162 = vsel %vm1148, %v1118, %v1161
        %v1163 = vsel %vm1150, %v1118, %v1162
        %v1164 = vsel %vm1140, %v1122, %v1122
        %v1165 = vsel %vm1142, %v1122, %v1164
        %v1166 = vsel %vm1144, %v1122, %v1165
        %v1167 = vsel %vm1146, %v1122, %v1166
        %v1168 = vsel %vm1148, %v1122, %v1167
        %v1169 = vsel %vm1150, %v1122, %v1168
        %v1170 = vsel %vm1140, %v1126, %v1126
        %v1171 = vsel %vm1142, %v1126, %v1170
        %v1172 = vsel %vm1144, %v1126, %v1171
        %v1173 = vsel %vm1146, %v1126, %v1172
        %v1174 = vsel %vm1148, %v1126, %v1173
        %v1175 = vsel %vm1150, %v1126, %v1174
        %v1176 = vsel %vm1140, %v1130, %v1130
        %v1177 = vsel %vm1142, %v1130, %v1176
        %v1178 = vsel %vm1144, %v1130, %v1177
        %v1179 = vsel %vm1146, %v1130, %v1178
        %v1180 = vsel %vm1148, %v1130, %v1179
        %v1181 = vsel %vm1150, %v1130, %v1180
        %v1182 = vsel %vm1140, %v1134, %v1134
        %v1183 = vsel %vm1142, %v1134, %v1182
        %v1184 = vsel %vm1144, %v1134, %v1183
        %v1185 = vsel %vm1146, %v1134, %v1184
        %v1186 = vsel %vm1148, %v1134, %v1185
        %v1187 = vsel %vm1150, %v1134, %v1186
        %v1188 = vsel %vm1140, %v1138, %v1138
        %v1189 = vsel %vm1142, %v1138, %v1188
        %v1190 = vsel %vm1144, %v1138, %v1189
        %v1191 = vsel %vm1146, %v1138, %v1190
        %v1192 = vsel %vm1148, %v1138, %v1191
        %v1193 = vsel %vm1150, %v1138, %v1192
        %v1202 = vmul.f32 %v1058, %v1151
        %v1203 = vmul.f32 %v1060, %v1157
        %v1204 = vmul.f32 %v1062, %v1163
        %v1205 = vmul.f32 %v1064, %v1169
        %v1206 = vmul.f32 %v1066, %v1175
        %v1207 = vmul.f32 %v1068, %v1181
        %v1208 = vmul.f32 %v1070, %v1187
        %v1209 = vmul.f32 %v1072, %v1193
        %v1210 = vmax.f32 %v1202, 1e-16
        %v1211 = vmax.f32 %v1203, 1e-16
        %v1212 = vmax.f32 %v1204, 1e-16
        %v1213 = vmax.f32 %v1205, 1e-16
        %v1214 = vmax.f32 %v1206, 1e-16
        %v1215 = vmax.f32 %v1207, 1e-16
        %v1216 = vmax.f32 %v1208, 1e-16
        %v1217 = vmax.f32 %v1209, 1e-16
        %v1218 = vrsqrt.pop %v1210
        %v1219 = vrsqrt.pop %v1211
        %v1220 = vrsqrt.pop %v1212
        %v1221 = vrsqrt.pop %v1213
        %v1222 = vrsqrt.pop %v1214
        %v1223 = vrsqrt.pop %v1215
        %v1224 = vrsqrt.pop %v1216
        %v1225 = vrsqrt.pop %v1217
        %v1226 = vmul.f32 %v556, %v1218
        %v1227 = vmul.f32 %v626, %v1219
        %v1228 = vmul.f32 %v696, %v1220
        %v1229 = vmul.f32 %v766, %v1221
        %v1230 = vmul.f32 %v836, %v1222
        %v1231 = vmul.f32 %v906, %v1223
        %v1232 = vmul.f32 %v976, %v1224
        %v1233 = vmul.f32 %v1046, %v1225
        %v1235 = vcombine.high %v488, %v488
        %v1237 = vunpack.c.l.s4 1966171168
        %v1238 = vunpack.c.0.s8 %v1237
        %v1239 = vlaneseq
        %v1240 = vshrl.u32 %v1239, 7
        %v1241 = vsub.s32 %v1238, %v1240
        %v1242 = vrot.slane %v488, %v1241
        %v1244 = vunpack.c.l.s4 1966171168
        %v1245 = vunpack.c.0.s8 %v1244
        %v1246 = vlaneseq
        %v1247 = vshrl.u32 %v1246, 7
        %v1248 = vsub.s32 %v1245, %v1247
        %v1249 = vrot.slane %v1235, %v1248
        %v1250 = vcombine.high %v1242, %v1242
        %v1251 = vcombine.high %v1249, %v1249
        %v1253 = vunpack.c.l.s4 1966171168
        %v1254 = vunpack.c.0.s8 %v1253
        %v1255 = vlaneseq
        %v1256 = vshrl.u32 %v1255, 7
        %v1257 = vsub.s32 %v1254, %v1256
        %v1258 = vrot.slane %v1242, %v1257
        %v1260 = vunpack.c.l.s4 1966171168
        %v1261 = vunpack.c.0.s8 %v1260
        %v1262 = vlaneseq
        %v1263 = vshrl.u32 %v1262, 7
        %v1264 = vsub.s32 %v1261, %v1263
        %v1265 = vrot.slane %v1249, %v1264
        %v1267 = vunpack.c.l.s4 1966171168
        %v1268 = vunpack.c.0.s8 %v1267
        %v1269 = vlaneseq
        %v1270 = vshrl.u32 %v1269, 7
        %v1271 = vsub.s32 %v1268, %v1270
        %v1272 = vrot.slane %v1250, %v1271
        %v1274 = vunpack.c.l.s4 1966171168
        %v1275 = vunpack.c.0.s8 %v1274
        %v1276 = vlaneseq
        %v1277 = vshrl.u32 %v1276, 7
        %v1278 = vsub.s32 %v1275, %v1277
        %v1279 = vrot.slane %v1251, %v1278
        %v1280 = vcombine.high %v1258, %v1258
        %v1281 = vcombine.high %v1265, %v1265
        %v1282 = vcombine.high %v1272, %v1272
        %v1283 = vcombine.high %v1279, %v1279
        %v1284 = vlaneseq
        %v1285 = vshrl.u32 %v1284, 7
        %v1286 = vsub.s32 0, %v1285
        %v1287 = vrot.slane %v1258, %v1286
        %v1288 = vlaneseq
        %v1289 = vshrl.u32 %v1288, 7
        %v1290 = vsub.s32 0, %v1289
        %v1291 = vrot.slane %v1272, %v1290
        %v1292 = vlaneseq
        %v1293 = vshrl.u32 %v1292, 7
        %v1294 = vsub.s32 0, %v1293
        %v1295 = vrot.slane %v1280, %v1294
        %v1296 = vlaneseq
        %v1297 = vshrl.u32 %v1296, 7
        %v1298 = vsub.s32 0, %v1297
        %v1299 = vrot.slane %v1282, %v1298
        %v1300 = vlaneseq
        %v1301 = vshrl.u32 %v1300, 7
        %v1302 = vsub.s32 0, %v1301
        %v1303 = vrot.slane %v1265, %v1302
        %v1304 = vlaneseq
        %v1305 = vshrl.u32 %v1304, 7
        %v1306 = vsub.s32 0, %v1305
        %v1307 = vrot.slane %v1279, %v1306
        %v1308 = vlaneseq
        %v1309 = vshrl.u32 %v1308, 7
        %v1310 = vsub.s32 0, %v1309
        %v1311 = vrot.slane %v1281, %v1310
        %v1312 = vlaneseq
        %v1313 = vshrl.u32 %v1312, 7
        %v1314 = vsub.s32 0, %v1313
        %v1315 = vrot.slane %v1283, %v1314
        %v1324 = vmul.f32 %v1226, %v1287
        %v1325 = vmul.f32 %v1227, %v1291
        %v1326 = vmul.f32 %v1228, %v1295
        %v1327 = vmul.f32 %v1229, %v1299
        %v1328 = vmul.f32 %v1230, %v1303
        %v1329 = vmul.f32 %v1231, %v1307
        %v1330 = vmul.f32 %v1232, %v1311
        %v1331 = vmul.f32 %v1233, %v1315
        %v1333 = vsel %vm474, %v1324, 0
        %1335 = vmatprep.subr.mxu0 0.0
        %1336 = vmatpush1.msra.mxu0 %v408
        %1337 = vmatprep.subr.mxu0 0.0
        %1338 = vmatpush1.msra.mxu0 0.0
        %1339 = vmatprep.subr.mxu0 0.0
        %1340 = vmatpush1.msra.mxu0 0.0
        %1341 = vmatprep.subr.mxu0 0.0
        %1342 = vmatpush1.msra.mxu0 0.0
        %1343 = vmatprep.subr.mxu0 0.0
        %1344 = vmatpush1.msra.mxu0 0.0
        %1345 = vmatprep.subr.mxu0 0.0
        %1346 = vmatpush1.msra.mxu0 0.0
        %1347 = vmatprep.subr.mxu0 0.0
        %1348 = vmatpush1.msra.mxu0 0.0
        %1349 = vmatprep.subr.mxu0 0.0
        %1350 = vmatpush1.msra.mxu0 0.0
        %1351 = vmatprep.subr.mxu0 0.0
        %1352 = vmatpush1.msra.mxu0 0.0
        %1353 = vmatprep.subr.mxu0 0.0
        %1354 = vmatpush1.msra.mxu0 0.0
        %1355 = vmatprep.subr.mxu0 0.0
        %1356 = vmatpush1.msra.mxu0 0.0
        %1357 = vmatprep.subr.mxu0 0.0
        %1358 = vmatpush1.msra.mxu0 0.0
        %1359 = vmatprep.subr.mxu0 0.0
        %1360 = vmatpush1.msra.mxu0 0.0
        %1361 = vmatprep.subr.mxu0 0.0
        %1362 = vmatpush1.msra.mxu0 0.0
        %1363 = vmatprep.subr.mxu0 0.0
        %1364 = vmatpush1.msra.mxu0 0.0
        %1365 = vmatprep.subr.mxu0 0.0
        %1366 = vmatpush1.msra.mxu0 0.0
        %1367 = vmatprep.subr.mxu0 0.0
        %1368 = vmatpush1.msra.mxu0 0.0
        %1369 = vmatprep.subr.mxu0 0.0
        %1370 = vmatpush1.msra.mxu0 0.0
        %1371 = vmatprep.subr.mxu0 0.0
        %1372 = vmatpush1.msra.mxu0 0.0
        %1373 = vmatprep.subr.mxu0 0.0
        %1374 = vmatpush1.msra.mxu0 0.0
        %1375 = vmatprep.subr.mxu0 0.0
        %1376 = vmatpush1.msra.mxu0 0.0
        %1377 = vmatprep.subr.mxu0 0.0
        %1378 = vmatpush1.msra.mxu0 0.0
        %1379 = vmatprep.subr.mxu0 0.0
        %1380 = vmatpush1.msra.mxu0 0.0
        %1381 = vmatprep.subr.mxu0 0.0
        %1382 = vmatpush1.msra.mxu0 0.0
        %1383 = vmatprep.subr.mxu0 0.0
        %1384 = vmatpush1.msra.mxu0 0.0
        %1385 = vmatprep.subr.mxu0 0.0
        %1386 = vmatpush1.msra.mxu0 0.0
        %1387 = vmatprep.subr.mxu0 0.0
        %1388 = vmatpush1.msra.mxu0 0.0
        %1389 = vmatprep.subr.mxu0 0.0
        %1390 = vmatpush1.msra.mxu0 0.0
        %1391 = vmatprep.subr.mxu0 0.0
        %1392 = vmatpush1.msra.mxu0 0.0
        %1393 = vmatprep.subr.mxu0 0.0
        %1394 = vmatpush1.msra.mxu0 0.0
        %1395 = vmatprep.subr.mxu0 0.0
        %1396 = vmatpush1.msra.mxu0 0.0
        %1397 = vmatprep.subr.mxu0 0.0
        %1398 = vmatpush1.msra.mxu0 0.0
        %1399 = vmatprep.mubr.f32.mxu0 0.0
        %1400 = vmatmul.mubr.f32.gmra.mrb[0].mxu0 %v1333
        %v1401 = vpop.f32.mrb[0].mxu0
        %v1402 = vadd.f32 0.0, %v1401
        %v1403 = vpop.f32.mrb[0].mxu0
        %1404 = vdwg.mxu0
        %v1406 = vsel %vm474, %v1325, 0
        %1408 = vmatprep.subr.mxu0 0.0
        %1409 = vmatpush1.msra.mxu0 %v409
        %1410 = vmatprep.subr.mxu0 0.0
        %1411 = vmatpush1.msra.mxu0 0.0
        %1412 = vmatprep.subr.mxu0 0.0
        %1413 = vmatpush1.msra.mxu0 0.0
        %1414 = vmatprep.subr.mxu0 0.0
        %1415 = vmatpush1.msra.mxu0 0.0
        %1416 = vmatprep.subr.mxu0 0.0
        %1417 = vmatpush1.msra.mxu0 0.0
        %1418 = vmatprep.subr.mxu0 0.0
        %1419 = vmatpush1.msra.mxu0 0.0
        %1420 = vmatprep.subr.mxu0 0.0
        %1421 = vmatpush1.msra.mxu0 0.0
        %1422 = vmatprep.subr.mxu0 0.0
        %1423 = vmatpush1.msra.mxu0 0.0
        %1424 = vmatprep.subr.mxu0 0.0
        %1425 = vmatpush1.msra.mxu0 0.0
        %1426 = vmatprep.subr.mxu0 0.0
        %1427 = vmatpush1.msra.mxu0 0.0
        %1428 = vmatprep.subr.mxu0 0.0
        %1429 = vmatpush1.msra.mxu0 0.0
        %1430 = vmatprep.subr.mxu0 0.0
        %1431 = vmatpush1.msra.mxu0 0.0
        %1432 = vmatprep.subr.mxu0 0.0
        %1433 = vmatpush1.msra.mxu0 0.0
        %1434 = vmatprep.subr.mxu0 0.0
        %1435 = vmatpush1.msra.mxu0 0.0
        %1436 = vmatprep.subr.mxu0 0.0
        %1437 = vmatpush1.msra.mxu0 0.0
        %1438 = vmatprep.subr.mxu0 0.0
        %1439 = vmatpush1.msra.mxu0 0.0
        %1440 = vmatprep.subr.mxu0 0.0
        %1441 = vmatpush1.msra.mxu0 0.0
        %1442 = vmatprep.subr.mxu0 0.0
        %1443 = vmatpush1.msra.mxu0 0.0
        %1444 = vmatprep.subr.mxu0 0.0
        %1445 = vmatpush1.msra.mxu0 0.0
        %1446 = vmatprep.subr.mxu0 0.0
        %1447 = vmatpush1.msra.mxu0 0.0
        %1448 = vmatprep.subr.mxu0 0.0
        %1449 = vmatpush1.msra.mxu0 0.0
        %1450 = vmatprep.subr.mxu0 0.0
        %1451 = vmatpush1.msra.mxu0 0.0
        %1452 = vmatprep.subr.mxu0 0.0
        %1453 = vmatpush1.msra.mxu0 0.0
        %1454 = vmatprep.subr.mxu0 0.0
        %1455 = vmatpush1.msra.mxu0 0.0
        %1456 = vmatprep.subr.mxu0 0.0
        %1457 = vmatpush1.msra.mxu0 0.0
        %1458 = vmatprep.subr.mxu0 0.0
        %1459 = vmatpush1.msra.mxu0 0.0
        %1460 = vmatprep.subr.mxu0 0.0
        %1461 = vmatpush1.msra.mxu0 0.0
        %1462 = vmatprep.subr.mxu0 0.0
        %1463 = vmatpush1.msra.mxu0 0.0
        %1464 = vmatprep.subr.mxu0 0.0
        %1465 = vmatpush1.msra.mxu0 0.0
        %1466 = vmatprep.subr.mxu0 0.0
        %1467 = vmatpush1.msra.mxu0 0.0
        %1468 = vmatprep.subr.mxu0 0.0
        %1469 = vmatpush1.msra.mxu0 0.0
        %1470 = vmatprep.subr.mxu0 0.0
        %1471 = vmatpush1.msra.mxu0 0.0
        %1472 = vmatprep.mubr.f32.mxu0 0.0
        %1473 = vmatmul.mubr.f32.gmra.mrb[0].mxu0 %v1406
        %v1474 = vpop.f32.mrb[0].mxu0
        %v1475 = vadd.f32 0.0, %v1474
        %v1476 = vpop.f32.mrb[0].mxu0
        %1477 = vdwg.mxu0
        %v1479 = vsel %vm474, %v1326, 0
        %1481 = vmatprep.subr.mxu0 0.0
        %1482 = vmatpush1.msra.mxu0 %v410
        %1483 = vmatprep.subr.mxu0 0.0
        %1484 = vmatpush1.msra.mxu0 0.0
        %1485 = vmatprep.subr.mxu0 0.0
        %1486 = vmatpush1.msra.mxu0 0.0
        %1487 = vmatprep.subr.mxu0 0.0
        %1488 = vmatpush1.msra.mxu0 0.0
        %1489 = vmatprep.subr.mxu0 0.0
        %1490 = vmatpush1.msra.mxu0 0.0
        %1491 = vmatprep.subr.mxu0 0.0
        %1492 = vmatpush1.msra.mxu0 0.0
        %1493 = vmatprep.subr.mxu0 0.0
        %1494 = vmatpush1.msra.mxu0 0.0
        %1495 = vmatprep.subr.mxu0 0.0
        %1496 = vmatpush1.msra.mxu0 0.0
        %1497 = vmatprep.subr.mxu0 0.0
        %1498 = vmatpush1.msra.mxu0 0.0
        %1499 = vmatprep.subr.mxu0 0.0
        %1500 = vmatpush1.msra.mxu0 0.0
        %1501 = vmatprep.subr.mxu0 0.0
        %1502 = vmatpush1.msra.mxu0 0.0
        %1503 = vmatprep.subr.mxu0 0.0
        %1504 = vmatpush1.msra.mxu0 0.0
        %1505 = vmatprep.subr.mxu0 0.0
        %1506 = vmatpush1.msra.mxu0 0.0
        %1507 = vmatprep.subr.mxu0 0.0
        %1508 = vmatpush1.msra.mxu0 0.0
        %1509 = vmatprep.subr.mxu0 0.0
        %1510 = vmatpush1.msra.mxu0 0.0
        %1511 = vmatprep.subr.mxu0 0.0
        %1512 = vmatpush1.msra.mxu0 0.0
        %1513 = vmatprep.subr.mxu0 0.0
        %1514 = vmatpush1.msra.mxu0 0.0
        %1515 = vmatprep.subr.mxu0 0.0
        %1516 = vmatpush1.msra.mxu0 0.0
        %1517 = vmatprep.subr.mxu0 0.0
        %1518 = vmatpush1.msra.mxu0 0.0
        %1519 = vmatprep.subr.mxu0 0.0
        %1520 = vmatpush1.msra.mxu0 0.0
        %1521 = vmatprep.subr.mxu0 0.0
        %1522 = vmatpush1.msra.mxu0 0.0
        %1523 = vmatprep.subr.mxu0 0.0
        %1524 = vmatpush1.msra.mxu0 0.0
        %1525 = vmatprep.subr.mxu0 0.0
        %1526 = vmatpush1.msra.mxu0 0.0
        %1527 = vmatprep.subr.mxu0 0.0
        %1528 = vmatpush1.msra.mxu0 0.0
        %1529 = vmatprep.subr.mxu0 0.0
        %1530 = vmatpush1.msra.mxu0 0.0
        %1531 = vmatprep.subr.mxu0 0.0
        %1532 = vmatpush1.msra.mxu0 0.0
        %1533 = vmatprep.subr.mxu0 0.0
        %1534 = vmatpush1.msra.mxu0 0.0
        %1535 = vmatprep.subr.mxu0 0.0
        %1536 = vmatpush1.msra.mxu0 0.0
        %1537 = vmatprep.subr.mxu0 0.0
        %1538 = vmatpush1.msra.mxu0 0.0
        %1539 = vmatprep.subr.mxu0 0.0
        %1540 = vmatpush1.msra.mxu0 0.0
        %1541 = vmatprep.subr.mxu0 0.0
        %1542 = vmatpush1.msra.mxu0 0.0
        %1543 = vmatprep.subr.mxu0 0.0
        %1544 = vmatpush1.msra.mxu0 0.0
        %1545 = vmatprep.mubr.f32.mxu0 0.0
        %1546 = vmatmul.mubr.f32.gmra.mrb[0].mxu0 %v1479
        %v1547 = vpop.f32.mrb[0].mxu0
        %v1548 = vadd.f32 0.0, %v1547
        %v1549 = vpop.f32.mrb[0].mxu0
        %1550 = vdwg.mxu0
        %v1552 = vsel %vm474, %v1327, 0
        %1554 = vmatprep.subr.mxu0 0.0
        %1555 = vmatpush1.msra.mxu0 %v411
        %1556 = vmatprep.subr.mxu0 0.0
        %1557 = vmatpush1.msra.mxu0 0.0
        %1558 = vmatprep.subr.mxu0 0.0
        %1559 = vmatpush1.msra.mxu0 0.0
        %1560 = vmatprep.subr.mxu0 0.0
        %1561 = vmatpush1.msra.mxu0 0.0
        %1562 = vmatprep.subr.mxu0 0.0
        %1563 = vmatpush1.msra.mxu0 0.0
        %1564 = vmatprep.subr.mxu0 0.0
        %1565 = vmatpush1.msra.mxu0 0.0
        %1566 = vmatprep.subr.mxu0 0.0
        %1567 = vmatpush1.msra.mxu0 0.0
        %1568 = vmatprep.subr.mxu0 0.0
        %1569 = vmatpush1.msra.mxu0 0.0
        %1570 = vmatprep.subr.mxu0 0.0
        %1571 = vmatpush1.msra.mxu0 0.0
        %1572 = vmatprep.subr.mxu0 0.0
        %1573 = vmatpush1.msra.mxu0 0.0
        %1574 = vmatprep.subr.mxu0 0.0
        %1575 = vmatpush1.msra.mxu0 0.0
        %1576 = vmatprep.subr.mxu0 0.0
        %1577 = vmatpush1.msra.mxu0 0.0
        %1578 = vmatprep.subr.mxu0 0.0
        %1579 = vmatpush1.msra.mxu0 0.0
        %1580 = vmatprep.subr.mxu0 0.0
        %1581 = vmatpush1.msra.mxu0 0.0
        %1582 = vmatprep.subr.mxu0 0.0
        %1583 = vmatpush1.msra.mxu0 0.0
        %1584 = vmatprep.subr.mxu0 0.0
        %1585 = vmatpush1.msra.mxu0 0.0
        %1586 = vmatprep.subr.mxu0 0.0
        %1587 = vmatpush1.msra.mxu0 0.0
        %1588 = vmatprep.subr.mxu0 0.0
        %1589 = vmatpush1.msra.mxu0 0.0
        %1590 = vmatprep.subr.mxu0 0.0
        %1591 = vmatpush1.msra.mxu0 0.0
        %1592 = vmatprep.subr.mxu0 0.0
        %1593 = vmatpush1.msra.mxu0 0.0
        %1594 = vmatprep.subr.mxu0 0.0
        %1595 = vmatpush1.msra.mxu0 0.0
        %1596 = vmatprep.subr.mxu0 0.0
        %1597 = vmatpush1.msra.mxu0 0.0
        %1598 = vmatprep.subr.mxu0 0.0
        %1599 = vmatpush1.msra.mxu0 0.0
        %1600 = vmatprep.subr.mxu0 0.0
        %1601 = vmatpush1.msra.mxu0 0.0
        %1602 = vmatprep.subr.mxu0 0.0
        %1603 = vmatpush1.msra.mxu0 0.0
        %1604 = vmatprep.subr.mxu0 0.0
        %1605 = vmatpush1.msra.mxu0 0.0
        %1606 = vmatprep.subr.mxu0 0.0
        %1607 = vmatpush1.msra.mxu0 0.0
        %1608 = vmatprep.subr.mxu0 0.0
        %1609 = vmatpush1.msra.mxu0 0.0
        %1610 = vmatprep.subr.mxu0 0.0
        %1611 = vmatpush1.msra.mxu0 0.0
        %1612 = vmatprep.subr.mxu0 0.0
        %1613 = vmatpush1.msra.mxu0 0.0
        %1614 = vmatprep.subr.mxu0 0.0
        %1615 = vmatpush1.msra.mxu0 0.0
        %1616 = vmatprep.subr.mxu0 0.0
        %1617 = vmatpush1.msra.mxu0 0.0
        %1618 = vmatprep.mubr.f32.mxu0 0.0
        %1619 = vmatmul.mubr.f32.gmra.mrb[0].mxu0 %v1552
        %v1620 = vpop.f32.mrb[0].mxu0
        %v1621 = vadd.f32 0.0, %v1620
        %v1622 = vpop.f32.mrb[0].mxu0
        %1623 = vdwg.mxu0
        %v1625 = vsel %vm474, %v1328, 0
        %1627 = vmatprep.subr.mxu0 0.0
        %1628 = vmatpush1.msra.mxu0 %v412
        %1629 = vmatprep.subr.mxu0 0.0
        %1630 = vmatpush1.msra.mxu0 0.0
        %1631 = vmatprep.subr.mxu0 0.0
        %1632 = vmatpush1.msra.mxu0 0.0
        %1633 = vmatprep.subr.mxu0 0.0
        %1634 = vmatpush1.msra.mxu0 0.0
        %1635 = vmatprep.subr.mxu0 0.0
        %1636 = vmatpush1.msra.mxu0 0.0
        %1637 = vmatprep.subr.mxu0 0.0
        %1638 = vmatpush1.msra.mxu0 0.0
        %1639 = vmatprep.subr.mxu0 0.0
        %1640 = vmatpush1.msra.mxu0 0.0
        %1641 = vmatprep.subr.mxu0 0.0
        %1642 = vmatpush1.msra.mxu0 0.0
        %1643 = vmatprep.subr.mxu0 0.0
        %1644 = vmatpush1.msra.mxu0 0.0
        %1645 = vmatprep.subr.mxu0 0.0
        %1646 = vmatpush1.msra.mxu0 0.0
        %1647 = vmatprep.subr.mxu0 0.0
        %1648 = vmatpush1.msra.mxu0 0.0
        %1649 = vmatprep.subr.mxu0 0.0
        %1650 = vmatpush1.msra.mxu0 0.0
        %1651 = vmatprep.subr.mxu0 0.0
        %1652 = vmatpush1.msra.mxu0 0.0
        %1653 = vmatprep.subr.mxu0 0.0
        %1654 = vmatpush1.msra.mxu0 0.0
        %1655 = vmatprep.subr.mxu0 0.0
        %1656 = vmatpush1.msra.mxu0 0.0
        %1657 = vmatprep.subr.mxu0 0.0
        %1658 = vmatpush1.msra.mxu0 0.0
        %1659 = vmatprep.subr.mxu0 0.0
        %1660 = vmatpush1.msra.mxu0 0.0
        %1661 = vmatprep.subr.mxu0 0.0
        %1662 = vmatpush1.msra.mxu0 0.0
        %1663 = vmatprep.subr.mxu0 0.0
        %1664 = vmatpush1.msra.mxu0 0.0
        %1665 = vmatprep.subr.mxu0 0.0
        %1666 = vmatpush1.msra.mxu0 0.0
        %1667 = vmatprep.subr.mxu0 0.0
        %1668 = vmatpush1.msra.mxu0 0.0
        %1669 = vmatprep.subr.mxu0 0.0
        %1670 = vmatpush1.msra.mxu0 0.0
        %1671 = vmatprep.subr.mxu0 0.0
        %1672 = vmatpush1.msra.mxu0 0.0
        %1673 = vmatprep.subr.mxu0 0.0
        %1674 = vmatpush1.msra.mxu0 0.0
        %1675 = vmatprep.subr.mxu0 0.0
        %1676 = vmatpush1.msra.mxu0 0.0
        %1677 = vmatprep.subr.mxu0 0.0
        %1678 = vmatpush1.msra.mxu0 0.0
        %1679 = vmatprep.subr.mxu0 0.0
        %1680 = vmatpush1.msra.mxu0 0.0
        %1681 = vmatprep.subr.mxu0 0.0
        %1682 = vmatpush1.msra.mxu0 0.0
        %1683 = vmatprep.subr.mxu0 0.0
        %1684 = vmatpush1.msra.mxu0 0.0
        %1685 = vmatprep.subr.mxu0 0.0
        %1686 = vmatpush1.msra.mxu0 0.0
        %1687 = vmatprep.subr.mxu0 0.0
        %1688 = vmatpush1.msra.mxu0 0.0
        %1689 = vmatprep.subr.mxu0 0.0
        %1690 = vmatpush1.msra.mxu0 0.0
        %1691 = vmatprep.mubr.f32.mxu0 0.0
        %1692 = vmatmul.mubr.f32.gmra.mrb[0].mxu0 %v1625
        %v1693 = vpop.f32.mrb[0].mxu0
        %v1694 = vadd.f32 0.0, %v1693
        %v1695 = vpop.f32.mrb[0].mxu0
        %1696 = vdwg.mxu0
        %v1698 = vsel %vm474, %v1329, 0
        %1700 = vmatprep.subr.mxu0 0.0
        %1701 = vmatpush1.msra.mxu0 %v413
        %1702 = vmatprep.subr.mxu0 0.0
        %1703 = vmatpush1.msra.mxu0 0.0
        %1704 = vmatprep.subr.mxu0 0.0
        %1705 = vmatpush1.msra.mxu0 0.0
        %1706 = vmatprep.subr.mxu0 0.0
        %1707 = vmatpush1.msra.mxu0 0.0
        %1708 = vmatprep.subr.mxu0 0.0
        %1709 = vmatpush1.msra.mxu0 0.0
        %1710 = vmatprep.subr.mxu0 0.0
        %1711 = vmatpush1.msra.mxu0 0.0
        %1712 = vmatprep.subr.mxu0 0.0
        %1713 = vmatpush1.msra.mxu0 0.0
        %1714 = vmatprep.subr.mxu0 0.0
        %1715 = vmatpush1.msra.mxu0 0.0
        %1716 = vmatprep.subr.mxu0 0.0
        %1717 = vmatpush1.msra.mxu0 0.0
        %1718 = vmatprep.subr.mxu0 0.0
        %1719 = vmatpush1.msra.mxu0 0.0
        %1720 = vmatprep.subr.mxu0 0.0
        %1721 = vmatpush1.msra.mxu0 0.0
        %1722 = vmatprep.subr.mxu0 0.0
        %1723 = vmatpush1.msra.mxu0 0.0
        %1724 = vmatprep.subr.mxu0 0.0
        %1725 = vmatpush1.msra.mxu0 0.0
        %1726 = vmatprep.subr.mxu0 0.0
        %1727 = vmatpush1.msra.mxu0 0.0
        %1728 = vmatprep.subr.mxu0 0.0
        %1729 = vmatpush1.msra.mxu0 0.0
        %1730 = vmatprep.subr.mxu0 0.0
        %1731 = vmatpush1.msra.mxu0 0.0
        %1732 = vmatprep.subr.mxu0 0.0
        %1733 = vmatpush1.msra.mxu0 0.0
        %1734 = vmatprep.subr.mxu0 0.0
        %1735 = vmatpush1.msra.mxu0 0.0
        %1736 = vmatprep.subr.mxu0 0.0
        %1737 = vmatpush1.msra.mxu0 0.0
        %1738 = vmatprep.subr.mxu0 0.0
        %1739 = vmatpush1.msra.mxu0 0.0
        %1740 = vmatprep.subr.mxu0 0.0
        %1741 = vmatpush1.msra.mxu0 0.0
        %1742 = vmatprep.subr.mxu0 0.0
        %1743 = vmatpush1.msra.mxu0 0.0
        %1744 = vmatprep.subr.mxu0 0.0
        %1745 = vmatpush1.msra.mxu0 0.0
        %1746 = vmatprep.subr.mxu0 0.0
        %1747 = vmatpush1.msra.mxu0 0.0
        %1748 = vmatprep.subr.mxu0 0.0
        %1749 = vmatpush1.msra.mxu0 0.0
        %1750 = vmatprep.subr.mxu0 0.0
        %1751 = vmatpush1.msra.mxu0 0.0
        %1752 = vmatprep.subr.mxu0 0.0
        %1753 = vmatpush1.msra.mxu0 0.0
        %1754 = vmatprep.subr.mxu0 0.0
        %1755 = vmatpush1.msra.mxu0 0.0
        %1756 = vmatprep.subr.mxu0 0.0
        %1757 = vmatpush1.msra.mxu0 0.0
        %1758 = vmatprep.subr.mxu0 0.0
        %1759 = vmatpush1.msra.mxu0 0.0
        %1760 = vmatprep.subr.mxu0 0.0
        %1761 = vmatpush1.msra.mxu0 0.0
        %1762 = vmatprep.subr.mxu0 0.0
        %1763 = vmatpush1.msra.mxu0 0.0
        %1764 = vmatprep.mubr.f32.mxu0 0.0
        %1765 = vmatmul.mubr.f32.gmra.mrb[0].mxu0 %v1698
        %v1766 = vpop.f32.mrb[0].mxu0
        %v1767 = vadd.f32 0.0, %v1766
        %v1768 = vpop.f32.mrb[0].mxu0
        %1769 = vdwg.mxu0
        %v1771 = vsel %vm474, %v1330, 0
        %1773 = vmatprep.subr.mxu0 0.0
        %1774 = vmatpush1.msra.mxu0 %v414
        %1775 = vmatprep.subr.mxu0 0.0
        %1776 = vmatpush1.msra.mxu0 0.0
        %1777 = vmatprep.subr.mxu0 0.0
        %1778 = vmatpush1.msra.mxu0 0.0
        %1779 = vmatprep.subr.mxu0 0.0
        %1780 = vmatpush1.msra.mxu0 0.0
        %1781 = vmatprep.subr.mxu0 0.0
        %1782 = vmatpush1.msra.mxu0 0.0
        %1783 = vmatprep.subr.mxu0 0.0
        %1784 = vmatpush1.msra.mxu0 0.0
        %1785 = vmatprep.subr.mxu0 0.0
        %1786 = vmatpush1.msra.mxu0 0.0
        %1787 = vmatprep.subr.mxu0 0.0
        %1788 = vmatpush1.msra.mxu0 0.0
        %1789 = vmatprep.subr.mxu0 0.0
        %1790 = vmatpush1.msra.mxu0 0.0
        %1791 = vmatprep.subr.mxu0 0.0
        %1792 = vmatpush1.msra.mxu0 0.0
        %1793 = vmatprep.subr.mxu0 0.0
        %1794 = vmatpush1.msra.mxu0 0.0
        %1795 = vmatprep.subr.mxu0 0.0
        %1796 = vmatpush1.msra.mxu0 0.0
        %1797 = vmatprep.subr.mxu0 0.0
        %1798 = vmatpush1.msra.mxu0 0.0
        %1799 = vmatprep.subr.mxu0 0.0
        %1800 = vmatpush1.msra.mxu0 0.0
        %1801 = vmatprep.subr.mxu0 0.0
        %1802 = vmatpush1.msra.mxu0 0.0
        %1803 = vmatprep.subr.mxu0 0.0
        %1804 = vmatpush1.msra.mxu0 0.0
        %1805 = vmatprep.subr.mxu0 0.0
        %1806 = vmatpush1.msra.mxu0 0.0
        %1807 = vmatprep.subr.mxu0 0.0
        %1808 = vmatpush1.msra.mxu0 0.0
        %1809 = vmatprep.subr.mxu0 0.0
        %1810 = vmatpush1.msra.mxu0 0.0
        %1811 = vmatprep.subr.mxu0 0.0
        %1812 = vmatpush1.msra.mxu0 0.0
        %1813 = vmatprep.subr.mxu0 0.0
        %1814 = vmatpush1.msra.mxu0 0.0
        %1815 = vmatprep.subr.mxu0 0.0
        %1816 = vmatpush1.msra.mxu0 0.0
        %1817 = vmatprep.subr.mxu0 0.0
        %1818 = vmatpush1.msra.mxu0 0.0
        %1819 = vmatprep.subr.mxu0 0.0
        %1820 = vmatpush1.msra.mxu0 0.0
        %1821 = vmatprep.subr.mxu0 0.0
        %1822 = vmatpush1.msra.mxu0 0.0
        %1823 = vmatprep.subr.mxu0 0.0
        %1824 = vmatpush1.msra.mxu0 0.0
        %1825 = vmatprep.subr.mxu0 0.0
        %1826 = vmatpush1.msra.mxu0 0.0
        %1827 = vmatprep.subr.mxu0 0.0
        %1828 = vmatpush1.msra.mxu0 0.0
        %1829 = vmatprep.subr.mxu0 0.0
        %1830 = vmatpush1.msra.mxu0 0.0
        %1831 = vmatprep.subr.mxu0 0.0
        %1832 = vmatpush1.msra.mxu0 0.0
        %1833 = vmatprep.subr.mxu0 0.0
        %1834 = vmatpush1.msra.mxu0 0.0
        %1835 = vmatprep.subr.mxu0 0.0
        %1836 = vmatpush1.msra.mxu0 0.0
        %1837 = vmatprep.mubr.f32.mxu0 0.0
        %1838 = vmatmul.mubr.f32.gmra.mrb[0].mxu0 %v1771
        %v1839 = vpop.f32.mrb[0].mxu0
        %v1840 = vadd.f32 0.0, %v1839
        %v1841 = vpop.f32.mrb[0].mxu0
        %1842 = vdwg.mxu0
        %v1844 = vsel %vm474, %v1331, 0
        %1846 = vmatprep.subr.mxu0 0.0
        %1847 = vmatpush1.msra.mxu0 %v415
        %1848 = vmatprep.subr.mxu0 0.0
        %1849 = vmatpush1.msra.mxu0 0.0
        %1850 = vmatprep.subr.mxu0 0.0
        %1851 = vmatpush1.msra.mxu0 0.0
        %1852 = vmatprep.subr.mxu0 0.0
        %1853 = vmatpush1.msra.mxu0 0.0
        %1854 = vmatprep.subr.mxu0 0.0
        %1855 = vmatpush1.msra.mxu0 0.0
        %1856 = vmatprep.subr.mxu0 0.0
        %1857 = vmatpush1.msra.mxu0 0.0
        %1858 = vmatprep.subr.mxu0 0.0
        %1859 = vmatpush1.msra.mxu0 0.0
        %1860 = vmatprep.subr.mxu0 0.0
        %1861 = vmatpush1.msra.mxu0 0.0
        %1862 = vmatprep.subr.mxu0 0.0
        %1863 = vmatpush1.msra.mxu0 0.0
        %1864 = vmatprep.subr.mxu0 0.0
        %1865 = vmatpush1.msra.mxu0 0.0
        %1866 = vmatprep.subr.mxu0 0.0
        %1867 = vmatpush1.msra.mxu0 0.0
        %1868 = vmatprep.subr.mxu0 0.0
        %1869 = vmatpush1.msra.mxu0 0.0
        %1870 = vmatprep.subr.mxu0 0.0
        %1871 = vmatpush1.msra.mxu0 0.0
        %1872 = vmatprep.subr.mxu0 0.0
        %1873 = vmatpush1.msra.mxu0 0.0
        %1874 = vmatprep.subr.mxu0 0.0
        %1875 = vmatpush1.msra.mxu0 0.0
        %1876 = vmatprep.subr.mxu0 0.0
        %1877 = vmatpush1.msra.mxu0 0.0
        %1878 = vmatprep.subr.mxu0 0.0
        %1879 = vmatpush1.msra.mxu0 0.0
        %1880 = vmatprep.subr.mxu0 0.0
        %1881 = vmatpush1.msra.mxu0 0.0
        %1882 = vmatprep.subr.mxu0 0.0
        %1883 = vmatpush1.msra.mxu0 0.0
        %1884 = vmatprep.subr.mxu0 0.0
        %1885 = vmatpush1.msra.mxu0 0.0
        %1886 = vmatprep.subr.mxu0 0.0
        %1887 = vmatpush1.msra.mxu0 0.0
        %1888 = vmatprep.subr.mxu0 0.0
        %1889 = vmatpush1.msra.mxu0 0.0
        %1890 = vmatprep.subr.mxu0 0.0
        %1891 = vmatpush1.msra.mxu0 0.0
        %1892 = vmatprep.subr.mxu0 0.0
        %1893 = vmatpush1.msra.mxu0 0.0
        %1894 = vmatprep.subr.mxu0 0.0
        %1895 = vmatpush1.msra.mxu0 0.0
        %1896 = vmatprep.subr.mxu0 0.0
        %1897 = vmatpush1.msra.mxu0 0.0
        %1898 = vmatprep.subr.mxu0 0.0
        %1899 = vmatpush1.msra.mxu0 0.0
        %1900 = vmatprep.subr.mxu0 0.0
        %1901 = vmatpush1.msra.mxu0 0.0
        %1902 = vmatprep.subr.mxu0 0.0
        %1903 = vmatpush1.msra.mxu0 0.0
        %1904 = vmatprep.subr.mxu0 0.0
        %1905 = vmatpush1.msra.mxu0 0.0
        %1906 = vmatprep.subr.mxu0 0.0
        %1907 = vmatpush1.msra.mxu0 0.0
        %1908 = vmatprep.subr.mxu0 0.0
        %1909 = vmatpush1.msra.mxu0 0.0
        %1910 = vmatprep.mubr.f32.mxu0 0.0
        %1911 = vmatmul.mubr.f32.gmra.mrb[0].mxu0 %v1844
        %v1912 = vpop.f32.mrb[0].mxu0
        %v1913 = vadd.f32 0.0, %v1912
        %v1914 = vpop.f32.mrb[0].mxu0
        %1915 = vdwg.mxu0
        %v1916 = vlaneseq
        %v1917 = vshrl.u32 %v1916, 7
        %v1918 = vsub.s32 0, %v1917
        %v1919 = vrot.slane %v487, %v1918
        %1921 = vbcast.lane.b32.xlu0 %v1919, 256
        %v1922 = vpop.permute.xlu0 %1921
        %v1923 = vlaneseq
        %v1924 = vshrl.u32 %v1923, 7
        %v1925 = vsub.s32 1, %v1924
        %v1926 = vrot.slane %v487, %v1925
        %1928 = vbcast.lane.b32.xlu0 %v1926, 256
        %v1929 = vpop.permute.xlu0 %1928
        %v1930 = vlaneseq
        %v1931 = vshrl.u32 %v1930, 7
        %v1932 = vsub.s32 2, %v1931
        %v1933 = vrot.slane %v487, %v1932
        %1935 = vbcast.lane.b32.xlu0 %v1933, 256
        %v1936 = vpop.permute.xlu0 %1935
        %v1937 = vlaneseq
        %v1938 = vshrl.u32 %v1937, 7
        %v1939 = vsub.s32 3, %v1938
        %v1940 = vrot.slane %v487, %v1939
        %1942 = vbcast.lane.b32.xlu0 %v1940, 256
        %v1943 = vpop.permute.xlu0 %1942
        %v1944 = vlaneseq
        %v1945 = vshrl.u32 %v1944, 7
        %v1946 = vsub.s32 4, %v1945
        %v1947 = vrot.slane %v487, %v1946
        %1949 = vbcast.lane.b32.xlu0 %v1947, 256
        %v1950 = vpop.permute.xlu0 %1949
        %v1951 = vlaneseq
        %v1952 = vshrl.u32 %v1951, 7
        %v1953 = vsub.s32 5, %v1952
        %v1954 = vrot.slane %v487, %v1953
        %1956 = vbcast.lane.b32.xlu0 %v1954, 256
        %v1957 = vpop.permute.xlu0 %1956
        %v1958 = vlaneseq
        %v1959 = vshrl.u32 %v1958, 7
        %v1960 = vsub.s32 6, %v1959
        %v1961 = vrot.slane %v487, %v1960
        %1963 = vbcast.lane.b32.xlu0 %v1961, 256
        %v1964 = vpop.permute.xlu0 %1963
        %v1965 = vlaneseq
        %v1966 = vshrl.u32 %v1965, 7
        %v1967 = vsub.s32 7, %v1966
        %v1968 = vrot.slane %v487, %v1967
        %1970 = vbcast.lane.b32.xlu0 %v1968, 256
        %v1971 = vpop.permute.xlu0 %1970
        %v1972 = vmul.f32 %v1402, %v1922
        %v1973 = vmul.f32 %v1475, %v1929
        %v1974 = vmul.f32 %v1548, %v1936
        %v1975 = vmul.f32 %v1621, %v1943
        %v1976 = vmul.f32 %v1694, %v1950
        %v1977 = vmul.f32 %v1767, %v1957
        %v1978 = vmul.f32 %v1840, %v1964
        %v1979 = vmul.f32 %v1913, %v1971
        %v1980 = vrot.slane %v1972, 4
        %v1981 = vadd.f32 %v1972, %v1980
        %v1982 = vrot.slane %v1981, 2
        %v1983 = vadd.f32 %v1981, %v1982
        %v1984 = vrot.slane %v1983, 1
        %v1985 = vadd.f32 %v1983, %v1984
        %v1986 = vrot.slane %v1973, 4
        %v1987 = vadd.f32 %v1973, %v1986
        %v1988 = vrot.slane %v1987, 2
        %v1989 = vadd.f32 %v1987, %v1988
        %v1990 = vrot.slane %v1989, 1
        %v1991 = vadd.f32 %v1989, %v1990
        %v1992 = vrot.slane %v1974, 4
        %v1993 = vadd.f32 %v1974, %v1992
        %v1994 = vrot.slane %v1993, 2
        %v1995 = vadd.f32 %v1993, %v1994
        %v1996 = vrot.slane %v1995, 1
        %v1997 = vadd.f32 %v1995, %v1996
        %v1998 = vrot.slane %v1975, 4
        %v1999 = vadd.f32 %v1975, %v1998
        %v2000 = vrot.slane %v1999, 2
        %v2001 = vadd.f32 %v1999, %v2000
        %v2002 = vrot.slane %v2001, 1
        %v2003 = vadd.f32 %v2001, %v2002
        %v2004 = vrot.slane %v1976, 4
        %v2005 = vadd.f32 %v1976, %v2004
        %v2006 = vrot.slane %v2005, 2
        %v2007 = vadd.f32 %v2005, %v2006
        %v2008 = vrot.slane %v2007, 1
        %v2009 = vadd.f32 %v2007, %v2008
        %v2010 = vrot.slane %v1977, 4
        %v2011 = vadd.f32 %v1977, %v2010
        %v2012 = vrot.slane %v2011, 2
        %v2013 = vadd.f32 %v2011, %v2012
        %v2014 = vrot.slane %v2013, 1
        %v2015 = vadd.f32 %v2013, %v2014
        %v2016 = vrot.slane %v1978, 4
        %v2017 = vadd.f32 %v1978, %v2016
        %v2018 = vrot.slane %v2017, 2
        %v2019 = vadd.f32 %v2017, %v2018
        %v2020 = vrot.slane %v2019, 1
        %v2021 = vadd.f32 %v2019, %v2020
        %v2022 = vrot.slane %v1979, 4
        %v2023 = vadd.f32 %v1979, %v2022
        %v2024 = vrot.slane %v2023, 2
        %v2025 = vadd.f32 %v2023, %v2024
        %v2026 = vrot.slane %v2025, 1
        %v2027 = vadd.f32 %v2025, %v2026
        %v2028 = vmul.f32 %v400, %v1922
        %v2029 = vmul.f32 %v401, %v1929
        %v2030 = vmul.f32 %v402, %v1936
        %v2031 = vmul.f32 %v403, %v1943
        %v2032 = vmul.f32 %v404, %v1950
        %v2033 = vmul.f32 %v405, %v1957
        %v2034 = vmul.f32 %v406, %v1964
        %v2035 = vmul.f32 %v407, %v1971
        %v2036 = vrot.slane %v2028, 4
        %v2037 = vadd.f32 %v2028, %v2036
        %v2038 = vrot.slane %v2037, 2
        %v2039 = vadd.f32 %v2037, %v2038
        %v2040 = vrot.slane %v2039, 1
        %v2041 = vadd.f32 %v2039, %v2040
        %v2042 = vrot.slane %v2029, 4
        %v2043 = vadd.f32 %v2029, %v2042
        %v2044 = vrot.slane %v2043, 2
        %v2045 = vadd.f32 %v2043, %v2044
        %v2046 = vrot.slane %v2045, 1
        %v2047 = vadd.f32 %v2045, %v2046
        %v2048 = vrot.slane %v2030, 4
        %v2049 = vadd.f32 %v2030, %v2048
        %v2050 = vrot.slane %v2049, 2
        %v2051 = vadd.f32 %v2049, %v2050
        %v2052 = vrot.slane %v2051, 1
        %v2053 = vadd.f32 %v2051, %v2052
        %v2054 = vrot.slane %v2031, 4
        %v2055 = vadd.f32 %v2031, %v2054
        %v2056 = vrot.slane %v2055, 2
        %v2057 = vadd.f32 %v2055, %v2056
        %v2058 = vrot.slane %v2057, 1
        %v2059 = vadd.f32 %v2057, %v2058
        %v2060 = vrot.slane %v2032, 4
        %v2061 = vadd.f32 %v2032, %v2060
        %v2062 = vrot.slane %v2061, 2
        %v2063 = vadd.f32 %v2061, %v2062
        %v2064 = vrot.slane %v2063, 1
        %v2065 = vadd.f32 %v2063, %v2064
        %v2066 = vrot.slane %v2033, 4
        %v2067 = vadd.f32 %v2033, %v2066
        %v2068 = vrot.slane %v2067, 2
        %v2069 = vadd.f32 %v2067, %v2068
        %v2070 = vrot.slane %v2069, 1
        %v2071 = vadd.f32 %v2069, %v2070
        %v2072 = vrot.slane %v2034, 4
        %v2073 = vadd.f32 %v2034, %v2072
        %v2074 = vrot.slane %v2073, 2
        %v2075 = vadd.f32 %v2073, %v2074
        %v2076 = vrot.slane %v2075, 1
        %v2077 = vadd.f32 %v2075, %v2076
        %v2078 = vrot.slane %v2035, 4
        %v2079 = vadd.f32 %v2035, %v2078
        %v2080 = vrot.slane %v2079, 2
        %v2081 = vadd.f32 %v2079, %v2080
        %v2082 = vrot.slane %v2081, 1
        %v2083 = vadd.f32 %v2081, %v2082
        %v2092 = vsel %vm1139, %v1991, %v1985
        %v2093 = vsel %vm1140, %v1997, %v2092
        %v2094 = vsel %vm1142, %v2003, %v2093
        %v2095 = vsel %vm1144, %v2009, %v2094
        %v2096 = vsel %vm1146, %v2015, %v2095
        %v2097 = vsel %vm1148, %v2021, %v2096
        %v2098 = vsel %vm1150, %v2027, %v2097
        %2100 = vmatprep.subr.mxu0 0.0
        %2101 = vmatpush1.msra.mxu0 %v434
        %2102 = vmatprep.subr.mxu0 0.0
        %2103 = vmatpush1.msra.mxu0 %v435
        %2104 = vmatprep.subr.mxu0 0.0
        %2105 = vmatpush1.msra.mxu0 %v436
        %2106 = vmatprep.subr.mxu0 0.0
        %2107 = vmatpush1.msra.mxu0 %v437
        %2108 = vmatprep.subr.mxu0 0.0
        %2109 = vmatpush1.msra.mxu0 %v438
        %2110 = vmatprep.subr.mxu0 0.0
        %2111 = vmatpush1.msra.mxu0 %v439
        %2112 = vmatprep.subr.mxu0 0.0
        %2113 = vmatpush1.msra.mxu0 %v440
        %2114 = vmatprep.subr.mxu0 0.0
        %2115 = vmatpush1.msra.mxu0 %v441
        %2116 = vmatprep.subr.mxu0 0.0
        %2117 = vmatpush1.msra.mxu0 %v442
        %2118 = vmatprep.subr.mxu0 0.0
        %2119 = vmatpush1.msra.mxu0 %v443
        %2120 = vmatprep.subr.mxu0 0.0
        %2121 = vmatpush1.msra.mxu0 %v444
        %2122 = vmatprep.subr.mxu0 0.0
        %2123 = vmatpush1.msra.mxu0 %v445
        %2124 = vmatprep.subr.mxu0 0.0
        %2125 = vmatpush1.msra.mxu0 %v446
        %2126 = vmatprep.subr.mxu0 0.0
        %2127 = vmatpush1.msra.mxu0 %v447
        %2128 = vmatprep.subr.mxu0 0.0
        %2129 = vmatpush1.msra.mxu0 %v448
        %2130 = vmatprep.subr.mxu0 0.0
        %2131 = vmatpush1.msra.mxu0 %v449
        %2132 = vmatprep.subr.mxu0 0.0
        %2133 = vmatpush1.msra.mxu0 0.0
        %2134 = vmatprep.subr.mxu0 0.0
        %2135 = vmatpush1.msra.mxu0 0.0
        %2136 = vmatprep.subr.mxu0 0.0
        %2137 = vmatpush1.msra.mxu0 0.0
        %2138 = vmatprep.subr.mxu0 0.0
        %2139 = vmatpush1.msra.mxu0 0.0
        %2140 = vmatprep.subr.mxu0 0.0
        %2141 = vmatpush1.msra.mxu0 0.0
        %2142 = vmatprep.subr.mxu0 0.0
        %2143 = vmatpush1.msra.mxu0 0.0
        %2144 = vmatprep.subr.mxu0 0.0
        %2145 = vmatpush1.msra.mxu0 0.0
        %2146 = vmatprep.subr.mxu0 0.0
        %2147 = vmatpush1.msra.mxu0 0.0
        %2148 = vmatprep.subr.mxu0 0.0
        %2149 = vmatpush1.msra.mxu0 0.0
        %2150 = vmatprep.subr.mxu0 0.0
        %2151 = vmatpush1.msra.mxu0 0.0
        %2152 = vmatprep.subr.mxu0 0.0
        %2153 = vmatpush1.msra.mxu0 0.0
        %2154 = vmatprep.subr.mxu0 0.0
        %2155 = vmatpush1.msra.mxu0 0.0
        %2156 = vmatprep.subr.mxu0 0.0
        %2157 = vmatpush1.msra.mxu0 0.0
        %2158 = vmatprep.subr.mxu0 0.0
        %2159 = vmatpush1.msra.mxu0 0.0
        %2160 = vmatprep.subr.mxu0 0.0
        %2161 = vmatpush1.msra.mxu0 0.0
        %2162 = vmatprep.subr.mxu0 0.0
        %2163 = vmatpush1.msra.mxu0 0.0
        %2164 = vmatprep.mubr.f32.mxu0 0.0
        %2165 = vmatmul.mubr.f32.gmra.mrb[0].mxu0 %v2098
        %v2166 = vpop.f32.mrb[0].mxu0
        %v2167 = vadd.f32 0.0, %v2166
        %v2168 = vpop.f32.mrb[0].mxu0
        %2169 = vdwg.mxu0
        %v2178 = vsel %vm1139, %v2047, %v2041
        %v2179 = vsel %vm1140, %v2053, %v2178
        %v2180 = vsel %vm1142, %v2059, %v2179
        %v2181 = vsel %vm1144, %v2065, %v2180
        %v2182 = vsel %vm1146, %v2071, %v2181
        %v2183 = vsel %vm1148, %v2077, %v2182
        %v2184 = vsel %vm1150, %v2083, %v2183
        %2186 = vmatprep.subr.mxu0 0.0
        %2187 = vmatpush1.msra.mxu0 %v418
        %2188 = vmatprep.subr.mxu0 0.0
        %2189 = vmatpush1.msra.mxu0 %v419
        %2190 = vmatprep.subr.mxu0 0.0
        %2191 = vmatpush1.msra.mxu0 %v420
        %2192 = vmatprep.subr.mxu0 0.0
        %2193 = vmatpush1.msra.mxu0 %v421
        %2194 = vmatprep.subr.mxu0 0.0
        %2195 = vmatpush1.msra.mxu0 %v422
        %2196 = vmatprep.subr.mxu0 0.0
        %2197 = vmatpush1.msra.mxu0 %v423
        %2198 = vmatprep.subr.mxu0 0.0
        %2199 = vmatpush1.msra.mxu0 %v424
        %2200 = vmatprep.subr.mxu0 0.0
        %2201 = vmatpush1.msra.mxu0 %v425
        %2202 = vmatprep.subr.mxu0 0.0
        %2203 = vmatpush1.msra.mxu0 %v426
        %2204 = vmatprep.subr.mxu0 0.0
        %2205 = vmatpush1.msra.mxu0 %v427
        %2206 = vmatprep.subr.mxu0 0.0
        %2207 = vmatpush1.msra.mxu0 %v428
        %2208 = vmatprep.subr.mxu0 0.0
        %2209 = vmatpush1.msra.mxu0 %v429
        %2210 = vmatprep.subr.mxu0 0.0
        %2211 = vmatpush1.msra.mxu0 %v430
        %2212 = vmatprep.subr.mxu0 0.0
        %2213 = vmatpush1.msra.mxu0 %v431
        %2214 = vmatprep.subr.mxu0 0.0
        %2215 = vmatpush1.msra.mxu0 %v432
        %2216 = vmatprep.subr.mxu0 0.0
        %2217 = vmatpush1.msra.mxu0 %v433
        %2218 = vmatprep.subr.mxu0 0.0
        %2219 = vmatpush1.msra.mxu0 0.0
        %2220 = vmatprep.subr.mxu0 0.0
        %2221 = vmatpush1.msra.mxu0 0.0
        %2222 = vmatprep.subr.mxu0 0.0
        %2223 = vmatpush1.msra.mxu0 0.0
        %2224 = vmatprep.subr.mxu0 0.0
        %2225 = vmatpush1.msra.mxu0 0.0
        %2226 = vmatprep.subr.mxu0 0.0
        %2227 = vmatpush1.msra.mxu0 0.0
        %2228 = vmatprep.subr.mxu0 0.0
        %2229 = vmatpush1.msra.mxu0 0.0
        %2230 = vmatprep.subr.mxu0 0.0
        %2231 = vmatpush1.msra.mxu0 0.0
        %2232 = vmatprep.subr.mxu0 0.0
        %2233 = vmatpush1.msra.mxu0 0.0
        %2234 = vmatprep.subr.mxu0 0.0
        %2235 = vmatpush1.msra.mxu0 0.0
        %2236 = vmatprep.subr.mxu0 0.0
        %2237 = vmatpush1.msra.mxu0 0.0
        %2238 = vmatprep.subr.mxu0 0.0
        %2239 = vmatpush1.msra.mxu0 0.0
        %2240 = vmatprep.subr.mxu0 0.0
        %2241 = vmatpush1.msra.mxu0 0.0
        %2242 = vmatprep.subr.mxu0 0.0
        %2243 = vmatpush1.msra.mxu0 0.0
        %2244 = vmatprep.subr.mxu0 0.0
        %2245 = vmatpush1.msra.mxu0 0.0
        %2246 = vmatprep.subr.mxu0 0.0
        %2247 = vmatpush1.msra.mxu0 0.0
        %2248 = vmatprep.subr.mxu0 0.0
        %2249 = vmatpush1.msra.mxu0 0.0
        %2250 = vmatprep.mubr.f32.mxu0 0.0
        %2251 = vmatmul.mubr.f32.gmra.mrb[0].mxu0 %v2184
        %v2252 = vpop.f32.mrb[0].mxu0
        %v2253 = vadd.f32 %v2167, %v2252
        %v2254 = vpop.f32.mrb[0].mxu0
        %2255 = vdwg.mxu0
        %v2257 = vlaneseq
        %v2258 = vshrl.u32 %v2257, 7
        %v2259 = vsub.s32 0, %v2258
        %v2260 = vrot.slane %v450, %v2259
        %v2262 = vadd.f32 %v2253, %v2260
        %v2263 = vmax.f32 %v2262, 0.0
        %v2265 = vlaneseq
        %v2266 = vshrl.u32 %v2265, 7
        %v2267 = vsub.s32 0, %v2266
        %v2268 = vrot.slane %v467, %v2267
        %2270 = vmatprep.subr.mxu0 0.0
        %2271 = vmatpush1.msra.mxu0 %v451
        %2272 = vmatprep.subr.mxu0 0.0
        %2273 = vmatpush1.msra.mxu0 %v452
        %2274 = vmatprep.subr.mxu0 0.0
        %2275 = vmatpush1.msra.mxu0 %v453
        %2276 = vmatprep.subr.mxu0 0.0
        %2277 = vmatpush1.msra.mxu0 %v454
        %2278 = vmatprep.subr.mxu0 0.0
        %2279 = vmatpush1.msra.mxu0 %v455
        %2280 = vmatprep.subr.mxu0 0.0
        %2281 = vmatpush1.msra.mxu0 %v456
        %2282 = vmatprep.subr.mxu0 0.0
        %2283 = vmatpush1.msra.mxu0 %v457
        %2284 = vmatprep.subr.mxu0 0.0
        %2285 = vmatpush1.msra.mxu0 %v458
        %2286 = vmatprep.subr.mxu0 0.0
        %2287 = vmatpush1.msra.mxu0 %v459
        %2288 = vmatprep.subr.mxu0 0.0
        %2289 = vmatpush1.msra.mxu0 %v460
        %2290 = vmatprep.subr.mxu0 0.0
        %2291 = vmatpush1.msra.mxu0 %v461
        %2292 = vmatprep.subr.mxu0 0.0
        %2293 = vmatpush1.msra.mxu0 %v462
        %2294 = vmatprep.subr.mxu0 0.0
        %2295 = vmatpush1.msra.mxu0 %v463
        %2296 = vmatprep.subr.mxu0 0.0
        %2297 = vmatpush1.msra.mxu0 %v464
        %2298 = vmatprep.subr.mxu0 0.0
        %2299 = vmatpush1.msra.mxu0 %v465
        %2300 = vmatprep.subr.mxu0 0.0
        %2301 = vmatpush1.msra.mxu0 %v466
        %2302 = vmatprep.subr.mxu0 0.0
        %2303 = vmatpush1.msra.mxu0 0.0
        %2304 = vmatprep.subr.mxu0 0.0
        %2305 = vmatpush1.msra.mxu0 0.0
        %2306 = vmatprep.subr.mxu0 0.0
        %2307 = vmatpush1.msra.mxu0 0.0
        %2308 = vmatprep.subr.mxu0 0.0
        %2309 = vmatpush1.msra.mxu0 0.0
        %2310 = vmatprep.subr.mxu0 0.0
        %2311 = vmatpush1.msra.mxu0 0.0
        %2312 = vmatprep.subr.mxu0 0.0
        %2313 = vmatpush1.msra.mxu0 0.0
        %2314 = vmatprep.subr.mxu0 0.0
        %2315 = vmatpush1.msra.mxu0 0.0
        %2316 = vmatprep.subr.mxu0 0.0
        %2317 = vmatpush1.msra.mxu0 0.0
        %2318 = vmatprep.subr.mxu0 0.0
        %2319 = vmatpush1.msra.mxu0 0.0
        %2320 = vmatprep.subr.mxu0 0.0
        %2321 = vmatpush1.msra.mxu0 0.0
        %2322 = vmatprep.subr.mxu0 0.0
        %2323 = vmatpush1.msra.mxu0 0.0
        %2324 = vmatprep.subr.mxu0 0.0
        %2325 = vmatpush1.msra.mxu0 0.0
        %2326 = vmatprep.subr.mxu0 0.0
        %2327 = vmatpush1.msra.mxu0 0.0
        %2328 = vmatprep.subr.mxu0 0.0
        %2329 = vmatpush1.msra.mxu0 0.0
        %2330 = vmatprep.subr.mxu0 0.0
        %2331 = vmatpush1.msra.mxu0 0.0
        %2332 = vmatprep.subr.mxu0 0.0
        %2333 = vmatpush1.msra.mxu0 0.0
        %2334 = vmatprep.mubr.f32.mxu0 0.0
        %2335 = vmatmul.mubr.f32.gmra.mrb[0].mxu0 %v2263
        %v2336 = vpop.f32.mrb[0].mxu0
        %v2337 = vadd.f32 %v2268, %v2336
        %v2338 = vpop.f32.mrb[0].mxu0
        %2339 = vdwg.mxu0
        %vm2340 = vcmask 23552
        %2341 = vst.msk [vmem:[%s318] sm:$0xff] %vm2340, %v2337
        %p2342 = scmp.lt.s32.totalorder %s32, 1
        %s2343 = scalar_select %p2342, %s32, 1
        %s2344 = smul.addr %s2343, 8
        %s2345 = scalar_lea.vmem %s10, %s2344
        // Predicated region
        $region89: #{tpu_custom_call.1} parent=47 // pred_check
          %p2346 = pneg %p207
        $region90: #{tpu_custom_call.1} parent=47 // pred_check_branch
          %2348 = sbr.rel (%p2346) target = $region92
        $region91: #{tpu_custom_call.1} parent=47 // pred_region
          _
        $region92: #{tpu_custom_call.1} parent=47 // pred_fallthru
          _
      $region48: #{tpu_custom_call.1} parent=5 // pred_fallthru
        _
      %p2349 = scmp.le.s32.totalorder 2, %s27
      // Predicated region
      $region93: #{tpu_custom_call.1} parent=5 // pred_check
        %p2350 = pneg %p2349
      $region94: #{tpu_custom_call.1} parent=5 // pred_check_branch
        %2352 = sbr.rel (%p2350) target = $region96
      $region95: #{tpu_custom_call.1} parent=5 // pred_region
        %s2353 = ssub.s32 %s27, 2
        // Predicated region
        $region97: #{tpu_custom_call.1} parent=95 // pred_check
          %p2354 = pneg %p213
        $region98: #{tpu_custom_call.1} parent=95 // pred_check_branch
          %2356 = sbr.rel (%p2354) target = $region100
        $region99: #{tpu_custom_call.1} parent=95 // pred_region
          %p2357 = scmp.lt.s32.totalorder %s33, 1
          %s2358 = scalar_select %p2357, %s33, 1
          %s2359 = smul.addr %s2358, 8
          %s2360 = scalar_lea.vmem %s10, %s2359
        $region100: #{tpu_custom_call.1} parent=95 // pred_fallthru
          _
      $region96: #{tpu_custom_call.1} parent=5 // pred_fallthru
        _
    $region6: #{tpu_custom_call.1} parent=1 // loop_footer
      %s31 = sadd.s32 1, %s27
    $region7: #{tpu_custom_call.1} parent=1 // loop_footer_branch
      %26 = sbr.rel target = $region3
    $region8: #{tpu_custom_call.1} parent=1 // loop_exit
      _
    %2361 = vsyncpa [#allocation9], 1
    %s2362 = scalar_lea.sflag [#allocation9], 1
    %2363 = vsyncpa %s2362, 1
  %2364 = vsyncmov [#allocation4]
  %s2365 = vpop.sfrf %2364
  %p2366 = scmp.eq.s32.totalorder %s2365, 0
  %p2367 = pneg %p2366
  %2369 = shalt.err (%p2367)

</llo_original>
